<compile_context>
chip_gen: v5e
topology: v5e:2x2
jax: 0.10.0
libtpu: 0.0.40
codegen_flags: <defaults>
</compile_context>

<pallas_src>
import functools

import jax
import jax.numpy as jnp
from jax.experimental import pallas as pl
from jax.experimental.pallas import tpu as pltpu

# ---------------- model hyper-params (small, consistent with the module) ----------------
MEL_DIM = 4
TEXT_DIM = 8
OUT_DIM = 32          # must be divisible by GROUPS
GROUPS = 16
KSIZE = 31            # ConvPositionEmbedding default kernel_size
PAD = KSIZE // 2
B = 2
N = 8                 # sequence length


def _mish(v):
    # mish(x) = x * tanh(softplus(x)) == x * (1 - 2 / (e*(e+2) + 2)),  e = exp(x).
    # One transcendental (exp); clamp + x>20 passthrough matches F.softplus's threshold.
    e = jnp.exp(jnp.minimum(v, 20.0))
    t = e * (e + 2.0) + 2.0
    # pl.reciprocal(..., approx=True) is available when bf16-level accuracy suffices.
    m = v * (1.0 - 2.0 * pl.reciprocal(t, approx=False))
    return jnp.where(v > 20.0, v, m)


# ---------------------------------- Pallas kernel ----------------------------------
def _input_embed_kernel(x_ref, c_ref, t_ref, wx_ref, wc_ref, wt_ref, bp_ref,
                        wd1_ref, wo1_ref, b1_ref, wd2_ref, wo2_ref, b2_ref,
                        swap_ref, o_ref, *, b, n, d, k, pad):
    # x/c/t:     (B*N, MEL) / (B*N, MEL) / (B*N, TEXT)
    # wx/wc/wt:  (MEL, D) / (MEL, D) / (TEXT, D)   pre-split proj weight
    # bp/b1/b2:  (1, D)
    # wd*/wo*:   (K, D)   per-tap weights hitting the own / partner input channel
    # swap:      (D, D)   permutation swapping each channel with its group partner
    # o:         (B*N, D)

    # ---- proj: three partial dots over both batches (no concatenated activation) ----
    h = (jnp.dot(x_ref[...], wx_ref[...], preferred_element_type=jnp.float32)
         + jnp.dot(c_ref[...], wc_ref[...], preferred_element_type=jnp.float32)
         + jnp.dot(t_ref[...], wt_ref[...], preferred_element_type=jnp.float32)
         + bp_ref[...])                                              # (B*N, D)

    swap = swap_ref[...]
    zpad = jnp.zeros((b, pad, d), jnp.float32)                       # hoisted, reused 4x

    def conv_mish(v, wd_ref, wo_ref, b_ref):
        # Grouped "same" conv1d (group size 2) as VPU multiply-accumulate over K taps.
        # Only cross-lane work: one tiny matmul building the partner-channel copy.
        vs = jnp.dot(v, swap, preferred_element_type=jnp.float32)    # (B*N, D)
        xp = jnp.concatenate([zpad, v.reshape(b, n, d), zpad], axis=1)   # (B, N+K-1, D)
        xs = jnp.concatenate([zpad, vs.reshape(b, n, d), zpad], axis=1)
        wd = wd_ref[...]
        wo = wo_ref[...]
        acc = xp[:, 0:n, :] * wd[0:1] + xs[:, 0:n, :] * wo[0:1] + b_ref[...]
        for kk in range(1, k):
            acc = (acc + xp[:, kk:kk + n, :] * wd[kk:kk + 1]
                       + xs[:, kk:kk + n, :] * wo[kk:kk + 1])
        return _mish(acc).reshape(b * n, d)

    a1 = conv_mish(h, wd1_ref, wo1_ref, b1_ref)
    a2 = conv_mish(a1, wd2_ref, wo2_ref, b2_ref)

    # residual add
    o_ref[...] = (a2 + h).astype(o_ref.dtype)


# ------------------------- one-time parameter preparation -------------------------
def prepare_params(params):
    """Run ONCE (cache the result); do not redo this work on every forward call."""
    d = OUT_DIM
    group = d // GROUPS
    assert group == 2, "kernel specialized for group size 2 (out_dim=32, groups=16)"
    co = jnp.arange(d)

    def conv_taps(w):  # torch Conv1d weight (D, D/G, K) -> (K, D) own / partner rows
        wd = jnp.transpose(w[co, co % 2, :])         # weight hitting channel co itself
        wo = jnp.transpose(w[co, 1 - co % 2, :])     # weight hitting partner co ^ 1
        return wd, wo

    wd1, wo1 = conv_taps(params["conv1_w"])
    wd2, wo2 = conv_taps(params["conv2_w"])
    swap = jnp.zeros((d, d), jnp.float32).at[co, co ^ 1].set(1.0)
    wp = params["proj_w"]
    return {
        "wx": wp[:MEL_DIM, :],
        "wc": wp[MEL_DIM:2 * MEL_DIM, :],
        "wt": wp[2 * MEL_DIM:, :],
        "bp": params["proj_b"].reshape(1, -1),
        "wd1": wd1, "wo1": wo1, "b1": params["conv1_b"].reshape(1, -1),
        "wd2": wd2, "wo2": wo2, "b2": params["conv2_b"].reshape(1, -1),
        "swap": swap,
    }


# ---------------------------------- wrapper ----------------------------------
def input_embedding_pallas(x, cond, text_embed, prepped, drop_audio_cond=False):
    if drop_audio_cond:
        cond = jnp.zeros_like(cond)
    b, n, _ = x.shape

    operands = (
        x.reshape(b * n, -1),
        cond.reshape(b * n, -1),
        text_embed.reshape(b * n, -1),
        prepped["wx"], prepped["wc"], prepped["wt"], prepped["bp"],
        prepped["wd1"], prepped["wo1"], prepped["b1"],
        prepped["wd2"], prepped["wo2"], prepped["b2"],
        prepped["swap"],
    )

    def full_spec(a):
        nd = a.ndim
        return pl.BlockSpec(a.shape, lambda i, _nd=nd: (0,) * _nd)

    kernel = functools.partial(_input_embed_kernel,
                               b=b, n=n, d=OUT_DIM, k=KSIZE, pad=PAD)

    out = pl.pallas_call(
        kernel,
        out_shape=jax.ShapeDtypeStruct((b * n, OUT_DIM), jnp.float32),
        grid_spec=pltpu.PrefetchScalarGridSpec(
            num_scalar_prefetch=0,
            grid=(1,),                      # whole problem fits one VMEM-resident step
            in_specs=[full_spec(a) for a in operands],
            out_specs=pl.BlockSpec((b * n, OUT_DIM), lambda i: (0, 0)),
        ),
        compiler_params=pltpu.CompilerParams(dimension_semantics=("arbitrary",)),
    )(*operands)
    return out.reshape(b, n, OUT_DIM)


# ---------------------------------- pure-JAX reference ----------------------------------
def _mish_ref(v):
    return v * jnp.tanh(jax.nn.softplus(v))


def input_embedding_ref(x, cond, text_embed, params, drop_audio_cond=False):
    if drop_audio_cond:
        cond = jnp.zeros_like(cond)
    xc = jnp.concatenate([x, cond, text_embed], axis=-1)
    h = xc @ params["proj_w"] + params["proj_b"]

    def conv(inp, w, b):
        y = jax.lax.conv_general_dilated(
            inp.transpose(0, 2, 1), w, window_strides=(1,),
            padding=[(PAD, PAD)], dimension_numbers=("NCH", "OIH", "NCH"),
            feature_group_count=GROUPS)
        return y.transpose(0, 2, 1) + b

    a1 = _mish_ref(conv(h, params["conv1_w"], params["conv1_b"]))
    a2 = _mish_ref(conv(a1, params["conv2_w"], params["conv2_b"]))
    return a2 + h


# ---------------------------------- main ----------------------------------
if __name__ == "__main__":
    key = jax.random.PRNGKey(0)
    ks = jax.random.split(key, 10)

    # deterministic synthetic parameters (shapes match nn.Linear / nn.Conv1d in __init__)
    DIN = MEL_DIM * 2 + TEXT_DIM
    params = {
        "proj_w": jax.random.normal(ks[0], (DIN, OUT_DIM), jnp.float32) * 0.1,
        "proj_b": jax.random.normal(ks[1], (OUT_DIM,), jnp.float32) * 0.1,
        "conv1_w": jax.random.normal(ks[2], (OUT_DIM, OUT_DIM // GROUPS, KSIZE), jnp.float32) * 0.1,
        "conv1_b": jax.random.normal(ks[3], (OUT_DIM,), jnp.float32) * 0.1,
        "conv2_w": jax.random.normal(ks[4], (OUT_DIM, OUT_DIM // GROUPS, KSIZE), jnp.float32) * 0.1,
        "conv2_b": jax.random.normal(ks[5], (OUT_DIM,), jnp.float32) * 0.1,
    }
    prepped = prepare_params(params)           # one-time setup, reused for every forward

    x = jax.random.normal(ks[6], (B, N, MEL_DIM), jnp.float32)
    cond = jax.random.normal(ks[7], (B, N, MEL_DIM), jnp.float32)
    text_embed = jax.random.normal(ks[8], (B, N, TEXT_DIM), jnp.float32)

    out = input_embedding_pallas(x, cond, text_embed, prepped, drop_audio_cond=False)
    out = jax.block_until_ready(out)

    ref = input_embedding_ref(x, cond, text_embed, params, drop_audio_cond=False)
    assert out.shape == (B, N, OUT_DIM)
    assert jnp.allclose(out, ref, atol=1e-4, rtol=1e-4), float(jnp.max(jnp.abs(out - ref)))

    print("KERNEL_OK")
</pallas_src>

<mosaic_0001>
module attributes {stable_mosaic.version = 11 : i64} {
  func.func @_input_embed_kernel(%arg0: i32, %arg1: memref<16x4xf32, #tpu.memory_space<vmem>>, %arg2: memref<16x4xf32, #tpu.memory_space<vmem>>, %arg3: memref<16x8xf32, #tpu.memory_space<vmem>>, %arg4: memref<4x32xf32, #tpu.memory_space<vmem>>, %arg5: memref<4x32xf32, #tpu.memory_space<vmem>>, %arg6: memref<8x32xf32, #tpu.memory_space<vmem>>, %arg7: memref<1x32xf32, #tpu.memory_space<vmem>>, %arg8: memref<31x32xf32, #tpu.memory_space<vmem>>, %arg9: memref<31x32xf32, #tpu.memory_space<vmem>>, %arg10: memref<1x32xf32, #tpu.memory_space<vmem>>, %arg11: memref<31x32xf32, #tpu.memory_space<vmem>>, %arg12: memref<31x32xf32, #tpu.memory_space<vmem>>, %arg13: memref<1x32xf32, #tpu.memory_space<vmem>>, %arg14: memref<32x32xf32, #tpu.memory_space<vmem>>, %arg15: memref<16x32xf32, #tpu.memory_space<vmem>>) attributes {dimension_semantics = [#tpu.dimension_semantics<arbitrary>], iteration_bounds = array<i64: 1>, scalar_prefetch = 0 : i64, scratch_operands = 0 : i64, tpu.core_type = #tpu.core_type<tc>, window_params = [{pipeline_mode = #tpu.pipeline_mode<synchronous>, transform_indices = @transform_0, window_bounds = array<i64: 16, 4>}, {pipeline_mode = #tpu.pipeline_mode<synchronous>, transform_indices = @transform_1, window_bounds = array<i64: 16, 4>}, {pipeline_mode = #tpu.pipeline_mode<synchronous>, transform_indices = @transform_2, window_bounds = array<i64: 16, 8>}, {pipeline_mode = #tpu.pipeline_mode<synchronous>, transform_indices = @transform_3, window_bounds = array<i64: 4, 32>}, {pipeline_mode = #tpu.pipeline_mode<synchronous>, transform_indices = @transform_4, window_bounds = array<i64: 4, 32>}, {pipeline_mode = #tpu.pipeline_mode<synchronous>, transform_indices = @transform_5, window_bounds = array<i64: 8, 32>}, {pipeline_mode = #tpu.pipeline_mode<synchronous>, transform_indices = @transform_6, window_bounds = array<i64: 1, 32>}, {pipeline_mode = #tpu.pipeline_mode<synchronous>, transform_indices = @transform_7, window_bounds = array<i64: 31, 32>}, {pipeline_mode = #tpu.pipeline_mode<synchronous>, transform_indices = @transform_8, window_bounds = array<i64: 31, 32>}, {pipeline_mode = #tpu.pipeline_mode<synchronous>, transform_indices = @transform_9, window_bounds = array<i64: 1, 32>}, {pipeline_mode = #tpu.pipeline_mode<synchronous>, transform_indices = @transform_10, window_bounds = array<i64: 31, 32>}, {pipeline_mode = #tpu.pipeline_mode<synchronous>, transform_indices = @transform_11, window_bounds = array<i64: 31, 32>}, {pipeline_mode = #tpu.pipeline_mode<synchronous>, transform_indices = @transform_12, window_bounds = array<i64: 1, 32>}, {pipeline_mode = #tpu.pipeline_mode<synchronous>, transform_indices = @transform_13, window_bounds = array<i64: 32, 32>}, {pipeline_mode = #tpu.pipeline_mode<synchronous>, transform_indices = @transform_14, window_bounds = array<i64: 16, 32>}]} {
    %c0 = arith.constant 0 : index
    %c0_0 = arith.constant 0 : index
    %0 = vector.load %arg1[%c0, %c0_0] : memref<16x4xf32, #tpu.memory_space<vmem>>, vector<16x4xf32>
    %c0_1 = arith.constant 0 : index
    %c0_2 = arith.constant 0 : index
    %1 = vector.load %arg4[%c0_1, %c0_2] : memref<4x32xf32, #tpu.memory_space<vmem>>, vector<4x32xf32>
    %cst = arith.constant dense<0.000000e+00> : vector<16x32xf32>
    %2 = tpu.matmul %0, %1, %cst {dimension_numbers = #tpu.dot_dimension_numbers<[1], [0], [0], [1], [0, 0, 1, 1], [], []>} : vector<16x4xf32>, vector<4x32xf32>, vector<16x32xf32> -> vector<16x32xf32>
    %c0_3 = arith.constant 0 : index
    %c0_4 = arith.constant 0 : index
    %3 = vector.load %arg2[%c0_3, %c0_4] : memref<16x4xf32, #tpu.memory_space<vmem>>, vector<16x4xf32>
    %c0_5 = arith.constant 0 : index
    %c0_6 = arith.constant 0 : index
    %4 = vector.load %arg5[%c0_5, %c0_6] : memref<4x32xf32, #tpu.memory_space<vmem>>, vector<4x32xf32>
    %cst_7 = arith.constant dense<0.000000e+00> : vector<16x32xf32>
    %5 = tpu.matmul %3, %4, %cst_7 {dimension_numbers = #tpu.dot_dimension_numbers<[1], [0], [0], [1], [0, 0, 1, 1], [], []>} : vector<16x4xf32>, vector<4x32xf32>, vector<16x32xf32> -> vector<16x32xf32>
    %6 = arith.addf %2, %5 : vector<16x32xf32>
    %c0_8 = arith.constant 0 : index
    %c0_9 = arith.constant 0 : index
    %7 = vector.load %arg3[%c0_8, %c0_9] : memref<16x8xf32, #tpu.memory_space<vmem>>, vector<16x8xf32>
    %c0_10 = arith.constant 0 : index
    %c0_11 = arith.constant 0 : index
    %8 = vector.load %arg6[%c0_10, %c0_11] : memref<8x32xf32, #tpu.memory_space<vmem>>, vector<8x32xf32>
    %cst_12 = arith.constant dense<0.000000e+00> : vector<16x32xf32>
    %9 = tpu.matmul %7, %8, %cst_12 {dimension_numbers = #tpu.dot_dimension_numbers<[1], [0], [0], [1], [0, 0, 1, 1], [], []>} : vector<16x8xf32>, vector<8x32xf32>, vector<16x32xf32> -> vector<16x32xf32>
    %10 = arith.addf %6, %9 : vector<16x32xf32>
    %c0_13 = arith.constant 0 : index
    %c0_14 = arith.constant 0 : index
    %11 = vector.load %arg7[%c0_13, %c0_14] : memref<1x32xf32, #tpu.memory_space<vmem>>, vector<1x32xf32>
    %12 = vector.broadcast %11 : vector<1x32xf32> to vector<16x32xf32>
    %13 = arith.addf %10, %12 : vector<16x32xf32>
    %c0_15 = arith.constant 0 : index
    %c0_16 = arith.constant 0 : index
    %14 = vector.load %arg14[%c0_15, %c0_16] : memref<32x32xf32, #tpu.memory_space<vmem>>, vector<32x32xf32>
    %cst_17 = arith.constant 0.000000e+00 : f32
    %15 = vector.broadcast %cst_17 : f32 to vector<2x15x32xf32>
    %cst_18 = arith.constant dense<0.000000e+00> : vector<16x32xf32>
    %16 = tpu.matmul %13, %14, %cst_18 {dimension_numbers = #tpu.dot_dimension_numbers<[1], [0], [0], [1], [0, 0, 1, 1], [], []>} : vector<16x32xf32>, vector<32x32xf32>, vector<16x32xf32> -> vector<16x32xf32>
    %17 = vector.shape_cast %13 : vector<16x32xf32> to vector<2x8x32xf32>
    %18 = tpu.concatenate %15, %17, %15 in 1 : vector<2x15x32xf32>, vector<2x8x32xf32>, vector<2x15x32xf32> -> vector<2x38x32xf32>
    %19 = vector.shape_cast %16 : vector<16x32xf32> to vector<2x8x32xf32>
    %20 = tpu.concatenate %15, %19, %15 in 1 : vector<2x15x32xf32>, vector<2x8x32xf32>, vector<2x15x32xf32> -> vector<2x38x32xf32>
    %c0_19 = arith.constant 0 : index
    %c0_20 = arith.constant 0 : index
    %21 = vector.load %arg8[%c0_19, %c0_20] : memref<31x32xf32, #tpu.memory_space<vmem>>, vector<31x32xf32>
    %c0_21 = arith.constant 0 : index
    %c0_22 = arith.constant 0 : index
    %22 = vector.load %arg9[%c0_21, %c0_22] : memref<31x32xf32, #tpu.memory_space<vmem>>, vector<31x32xf32>
    %23 = vector.extract_strided_slice %18 {offsets = [0, 0, 0], sizes = [2, 8, 32], strides = [1, 1, 1]} : vector<2x38x32xf32> to vector<2x8x32xf32>
    %24 = vector.extract_strided_slice %21 {offsets = [0, 0], sizes = [1, 32], strides = [1, 1]} : vector<31x32xf32> to vector<1x32xf32>
    %25 = vector.shape_cast %24 : vector<1x32xf32> to vector<1x1x32xf32>
    %26 = vector.broadcast %25 : vector<1x1x32xf32> to vector<2x8x32xf32>
    %27 = arith.mulf %23, %26 : vector<2x8x32xf32>
    %28 = vector.extract_strided_slice %20 {offsets = [0, 0, 0], sizes = [2, 8, 32], strides = [1, 1, 1]} : vector<2x38x32xf32> to vector<2x8x32xf32>
    %29 = vector.extract_strided_slice %22 {offsets = [0, 0], sizes = [1, 32], strides = [1, 1]} : vector<31x32xf32> to vector<1x32xf32>
    %30 = vector.shape_cast %29 : vector<1x32xf32> to vector<1x1x32xf32>
    %31 = vector.broadcast %30 : vector<1x1x32xf32> to vector<2x8x32xf32>
    %32 = arith.mulf %28, %31 : vector<2x8x32xf32>
    %33 = arith.addf %27, %32 : vector<2x8x32xf32>
    %c0_23 = arith.constant 0 : index
    %c0_24 = arith.constant 0 : index
    %34 = vector.load %arg10[%c0_23, %c0_24] : memref<1x32xf32, #tpu.memory_space<vmem>>, vector<1x32xf32>
    %35 = vector.shape_cast %34 : vector<1x32xf32> to vector<1x1x32xf32>
    %36 = vector.broadcast %35 : vector<1x1x32xf32> to vector<2x8x32xf32>
    %37 = arith.addf %33, %36 : vector<2x8x32xf32>
    %38 = vector.extract_strided_slice %18 {offsets = [0, 1, 0], sizes = [2, 8, 32], strides = [1, 1, 1]} : vector<2x38x32xf32> to vector<2x8x32xf32>
    %39 = vector.extract_strided_slice %21 {offsets = [1, 0], sizes = [1, 32], strides = [1, 1]} : vector<31x32xf32> to vector<1x32xf32>
    %40 = vector.shape_cast %39 : vector<1x32xf32> to vector<1x1x32xf32>
    %41 = vector.broadcast %40 : vector<1x1x32xf32> to vector<2x8x32xf32>
    %42 = arith.mulf %38, %41 : vector<2x8x32xf32>
    %43 = arith.addf %37, %42 : vector<2x8x32xf32>
    %44 = vector.extract_strided_slice %20 {offsets = [0, 1, 0], sizes = [2, 8, 32], strides = [1, 1, 1]} : vector<2x38x32xf32> to vector<2x8x32xf32>
    %45 = vector.extract_strided_slice %22 {offsets = [1, 0], sizes = [1, 32], strides = [1, 1]} : vector<31x32xf32> to vector<1x32xf32>
    %46 = vector.shape_cast %45 : vector<1x32xf32> to vector<1x1x32xf32>
    %47 = vector.broadcast %46 : vector<1x1x32xf32> to vector<2x8x32xf32>
    %48 = arith.mulf %44, %47 : vector<2x8x32xf32>
    %49 = arith.addf %43, %48 : vector<2x8x32xf32>
    %50 = vector.extract_strided_slice %18 {offsets = [0, 2, 0], sizes = [2, 8, 32], strides = [1, 1, 1]} : vector<2x38x32xf32> to vector<2x8x32xf32>
    %51 = vector.extract_strided_slice %21 {offsets = [2, 0], sizes = [1, 32], strides = [1, 1]} : vector<31x32xf32> to vector<1x32xf32>
    %52 = vector.shape_cast %51 : vector<1x32xf32> to vector<1x1x32xf32>
    %53 = vector.broadcast %52 : vector<1x1x32xf32> to vector<2x8x32xf32>
    %54 = arith.mulf %50, %53 : vector<2x8x32xf32>
    %55 = arith.addf %49, %54 : vector<2x8x32xf32>
    %56 = vector.extract_strided_slice %20 {offsets = [0, 2, 0], sizes = [2, 8, 32], strides = [1, 1, 1]} : vector<2x38x32xf32> to vector<2x8x32xf32>
    %57 = vector.extract_strided_slice %22 {offsets = [2, 0], sizes = [1, 32], strides = [1, 1]} : vector<31x32xf32> to vector<1x32xf32>
    %58 = vector.shape_cast %57 : vector<1x32xf32> to vector<1x1x32xf32>
    %59 = vector.broadcast %58 : vector<1x1x32xf32> to vector<2x8x32xf32>
    %60 = arith.mulf %56, %59 : vector<2x8x32xf32>
    %61 = arith.addf %55, %60 : vector<2x8x32xf32>
    %62 = vector.extract_strided_slice %18 {offsets = [0, 3, 0], sizes = [2, 8, 32], strides = [1, 1, 1]} : vector<2x38x32xf32> to vector<2x8x32xf32>
    %63 = vector.extract_strided_slice %21 {offsets = [3, 0], sizes = [1, 32], strides = [1, 1]} : vector<31x32xf32> to vector<1x32xf32>
    %64 = vector.shape_cast %63 : vector<1x32xf32> to vector<1x1x32xf32>
    %65 = vector.broadcast %64 : vector<1x1x32xf32> to vector<2x8x32xf32>
    %66 = arith.mulf %62, %65 : vector<2x8x32xf32>
    %67 = arith.addf %61, %66 : vector<2x8x32xf32>
    %68 = vector.extract_strided_slice %20 {offsets = [0, 3, 0], sizes = [2, 8, 32], strides = [1, 1, 1]} : vector<2x38x32xf32> to vector<2x8x32xf32>
    %69 = vector.extract_strided_slice %22 {offsets = [3, 0], sizes = [1, 32], strides = [1, 1]} : vector<31x32xf32> to vector<1x32xf32>
    %70 = vector.shape_cast %69 : vector<1x32xf32> to vector<1x1x32xf32>
    %71 = vector.broadcast %70 : vector<1x1x32xf32> to vector<2x8x32xf32>
    %72 = arith.mulf %68, %71 : vector<2x8x32xf32>
    %73 = arith.addf %67, %72 : vector<2x8x32xf32>
    %74 = vector.extract_strided_slice %18 {offsets = [0, 4, 0], sizes = [2, 8, 32], strides = [1, 1, 1]} : vector<2x38x32xf32> to vector<2x8x32xf32>
    %75 = vector.extract_strided_slice %21 {offsets = [4, 0], sizes = [1, 32], strides = [1, 1]} : vector<31x32xf32> to vector<1x32xf32>
    %76 = vector.shape_cast %75 : vector<1x32xf32> to vector<1x1x32xf32>
    %77 = vector.broadcast %76 : vector<1x1x32xf32> to vector<2x8x32xf32>
    %78 = arith.mulf %74, %77 : vector<2x8x32xf32>
    %79 = arith.addf %73, %78 : vector<2x8x32xf32>
    %80 = vector.extract_strided_slice %20 {offsets = [0, 4, 0], sizes = [2, 8, 32], strides = [1, 1, 1]} : vector<2x38x32xf32> to vector<2x8x32xf32>
    %81 = vector.extract_strided_slice %22 {offsets = [4, 0], sizes = [1, 32], strides = [1, 1]} : vector<31x32xf32> to vector<1x32xf32>
    %82 = vector.shape_cast %81 : vector<1x32xf32> to vector<1x1x32xf32>
    %83 = vector.broadcast %82 : vector<1x1x32xf32> to vector<2x8x32xf32>
    %84 = arith.mulf %80, %83 : vector<2x8x32xf32>
    %85 = arith.addf %79, %84 : vector<2x8x32xf32>
    %86 = vector.extract_strided_slice %18 {offsets = [0, 5, 0], sizes = [2, 8, 32], strides = [1, 1, 1]} : vector<2x38x32xf32> to vector<2x8x32xf32>
    %87 = vector.extract_strided_slice %21 {offsets = [5, 0], sizes = [1, 32], strides = [1, 1]} : vector<31x32xf32> to vector<1x32xf32>
    %88 = vector.shape_cast %87 : vector<1x32xf32> to vector<1x1x32xf32>
    %89 = vector.broadcast %88 : vector<1x1x32xf32> to vector<2x8x32xf32>
    %90 = arith.mulf %86, %89 : vector<2x8x32xf32>
    %91 = arith.addf %85, %90 : vector<2x8x32xf32>
    %92 = vector.extract_strided_slice %20 {offsets = [0, 5, 0], sizes = [2, 8, 32], strides = [1, 1, 1]} : vector<2x38x32xf32> to vector<2x8x32xf32>
    %93 = vector.extract_strided_slice %22 {offsets = [5, 0], sizes = [1, 32], strides = [1, 1]} : vector<31x32xf32> to vector<1x32xf32>
    %94 = vector.shape_cast %93 : vector<1x32xf32> to vector<1x1x32xf32>
    %95 = vector.broadcast %94 : vector<1x1x32xf32> to vector<2x8x32xf32>
    %96 = arith.mulf %92, %95 : vector<2x8x32xf32>
    %97 = arith.addf %91, %96 : vector<2x8x32xf32>
    %98 = vector.extract_strided_slice %18 {offsets = [0, 6, 0], sizes = [2, 8, 32], strides = [1, 1, 1]} : vector<2x38x32xf32> to vector<2x8x32xf32>
    %99 = vector.extract_strided_slice %21 {offsets = [6, 0], sizes = [1, 32], strides = [1, 1]} : vector<31x32xf32> to vector<1x32xf32>
    %100 = vector.shape_cast %99 : vector<1x32xf32> to vector<1x1x32xf32>
    %101 = vector.broadcast %100 : vector<1x1x32xf32> to vector<2x8x32xf32>
    %102 = arith.mulf %98, %101 : vector<2x8x32xf32>
    %103 = arith.addf %97, %102 : vector<2x8x32xf32>
    %104 = vector.extract_strided_slice %20 {offsets = [0, 6, 0], sizes = [2, 8, 32], strides = [1, 1, 1]} : vector<2x38x32xf32> to vector<2x8x32xf32>
    %105 = vector.extract_strided_slice %22 {offsets = [6, 0], sizes = [1, 32], strides = [1, 1]} : vector<31x32xf32> to vector<1x32xf32>
    %106 = vector.shape_cast %105 : vector<1x32xf32> to vector<1x1x32xf32>
    %107 = vector.broadcast %106 : vector<1x1x32xf32> to vector<2x8x32xf32>
    %108 = arith.mulf %104, %107 : vector<2x8x32xf32>
    %109 = arith.addf %103, %108 : vector<2x8x32xf32>
    %110 = vector.extract_strided_slice %18 {offsets = [0, 7, 0], sizes = [2, 8, 32], strides = [1, 1, 1]} : vector<2x38x32xf32> to vector<2x8x32xf32>
    %111 = vector.extract_strided_slice %21 {offsets = [7, 0], sizes = [1, 32], strides = [1, 1]} : vector<31x32xf32> to vector<1x32xf32>
    %112 = vector.shape_cast %111 : vector<1x32xf32> to vector<1x1x32xf32>
    %113 = vector.broadcast %112 : vector<1x1x32xf32> to vector<2x8x32xf32>
    %114 = arith.mulf %110, %113 : vector<2x8x32xf32>
    %115 = arith.addf %109, %114 : vector<2x8x32xf32>
    %116 = vector.extract_strided_slice %20 {offsets = [0, 7, 0], sizes = [2, 8, 32], strides = [1, 1, 1]} : vector<2x38x32xf32> to vector<2x8x32xf32>
    %117 = vector.extract_strided_slice %22 {offsets = [7, 0], sizes = [1, 32], strides = [1, 1]} : vector<31x32xf32> to vector<1x32xf32>
    %118 = vector.shape_cast %117 : vector<1x32xf32> to vector<1x1x32xf32>
    %119 = vector.broadcast %118 : vector<1x1x32xf32> to vector<2x8x32xf32>
    %120 = arith.mulf %116, %119 : vector<2x8x32xf32>
    %121 = arith.addf %115, %120 : vector<2x8x32xf32>
    %122 = vector.extract_strided_slice %18 {offsets = [0, 8, 0], sizes = [2, 8, 32], strides = [1, 1, 1]} : vector<2x38x32xf32> to vector<2x8x32xf32>
    %123 = vector.extract_strided_slice %21 {offsets = [8, 0], sizes = [1, 32], strides = [1, 1]} : vector<31x32xf32> to vector<1x32xf32>
    %124 = vector.shape_cast %123 : vector<1x32xf32> to vector<1x1x32xf32>
    %125 = vector.broadcast %124 : vector<1x1x32xf32> to vector<2x8x32xf32>
    %126 = arith.mulf %122, %125 : vector<2x8x32xf32>
    %127 = arith.addf %121, %126 : vector<2x8x32xf32>
    %128 = vector.extract_strided_slice %20 {offsets = [0, 8, 0], sizes = [2, 8, 32], strides = [1, 1, 1]} : vector<2x38x32xf32> to vector<2x8x32xf32>
    %129 = vector.extract_strided_slice %22 {offsets = [8, 0], sizes = [1, 32], strides = [1, 1]} : vector<31x32xf32> to vector<1x32xf32>
    %130 = vector.shape_cast %129 : vector<1x32xf32> to vector<1x1x32xf32>
    %131 = vector.broadcast %130 : vector<1x1x32xf32> to vector<2x8x32xf32>
    %132 = arith.mulf %128, %131 : vector<2x8x32xf32>
    %133 = arith.addf %127, %132 : vector<2x8x32xf32>
    %134 = vector.extract_strided_slice %18 {offsets = [0, 9, 0], sizes = [2, 8, 32], strides = [1, 1, 1]} : vector<2x38x32xf32> to vector<2x8x32xf32>
    %135 = vector.extract_strided_slice %21 {offsets = [9, 0], sizes = [1, 32], strides = [1, 1]} : vector<31x32xf32> to vector<1x32xf32>
    %136 = vector.shape_cast %135 : vector<1x32xf32> to vector<1x1x32xf32>
    %137 = vector.broadcast %136 : vector<1x1x32xf32> to vector<2x8x32xf32>
    %138 = arith.mulf %134, %137 : vector<2x8x32xf32>
    %139 = arith.addf %133, %138 : vector<2x8x32xf32>
    %140 = vector.extract_strided_slice %20 {offsets = [0, 9, 0], sizes = [2, 8, 32], strides = [1, 1, 1]} : vector<2x38x32xf32> to vector<2x8x32xf32>
    %141 = vector.extract_strided_slice %22 {offsets = [9, 0], sizes = [1, 32], strides = [1, 1]} : vector<31x32xf32> to vector<1x32xf32>
    %142 = vector.shape_cast %141 : vector<1x32xf32> to vector<1x1x32xf32>
    %143 = vector.broadcast %142 : vector<1x1x32xf32> to vector<2x8x32xf32>
    %144 = arith.mulf %140, %143 : vector<2x8x32xf32>
    %145 = arith.addf %139, %144 : vector<2x8x32xf32>
    %146 = vector.extract_strided_slice %18 {offsets = [0, 10, 0], sizes = [2, 8, 32], strides = [1, 1, 1]} : vector<2x38x32xf32> to vector<2x8x32xf32>
    %147 = vector.extract_strided_slice %21 {offsets = [10, 0], sizes = [1, 32], strides = [1, 1]} : vector<31x32xf32> to vector<1x32xf32>
    %148 = vector.shape_cast %147 : vector<1x32xf32> to vector<1x1x32xf32>
    %149 = vector.broadcast %148 : vector<1x1x32xf32> to vector<2x8x32xf32>
    %150 = arith.mulf %146, %149 : vector<2x8x32xf32>
    %151 = arith.addf %145, %150 : vector<2x8x32xf32>
    %152 = vector.extract_strided_slice %20 {offsets = [0, 10, 0], sizes = [2, 8, 32], strides = [1, 1, 1]} : vector<2x38x32xf32> to vector<2x8x32xf32>
    %153 = vector.extract_strided_slice %22 {offsets = [10, 0], sizes = [1, 32], strides = [1, 1]} : vector<31x32xf32> to vector<1x32xf32>
    %154 = vector.shape_cast %153 : vector<1x32xf32> to vector<1x1x32xf32>
    %155 = vector.broadcast %154 : vector<1x1x32xf32> to vector<2x8x32xf32>
    %156 = arith.mulf %152, %155 : vector<2x8x32xf32>
    %157 = arith.addf %151, %156 : vector<2x8x32xf32>
    %158 = vector.extract_strided_slice %18 {offsets = [0, 11, 0], sizes = [2, 8, 32], strides = [1, 1, 1]} : vector<2x38x32xf32> to vector<2x8x32xf32>
    %159 = vector.extract_strided_slice %21 {offsets = [11, 0], sizes = [1, 32], strides = [1, 1]} : vector<31x32xf32> to vector<1x32xf32>
    %160 = vector.shape_cast %159 : vector<1x32xf32> to vector<1x1x32xf32>
    %161 = vector.broadcast %160 : vector<1x1x32xf32> to vector<2x8x32xf32>
    %162 = arith.mulf %158, %161 : vector<2x8x32xf32>
    %163 = arith.addf %157, %162 : vector<2x8x32xf32>
    %164 = vector.extract_strided_slice %20 {offsets = [0, 11, 0], sizes = [2, 8, 32], strides = [1, 1, 1]} : vector<2x38x32xf32> to vector<2x8x32xf32>
    %165 = vector.extract_strided_slice %22 {offsets = [11, 0], sizes = [1, 32], strides = [1, 1]} : vector<31x32xf32> to vector<1x32xf32>
    %166 = vector.shape_cast %165 : vector<1x32xf32> to vector<1x1x32xf32>
    %167 = vector.broadcast %166 : vector<1x1x32xf32> to vector<2x8x32xf32>
    %168 = arith.mulf %164, %167 : vector<2x8x32xf32>
    %169 = arith.addf %163, %168 : vector<2x8x32xf32>
    %170 = vector.extract_strided_slice %18 {offsets = [0, 12, 0], sizes = [2, 8, 32], strides = [1, 1, 1]} : vector<2x38x32xf32> to vector<2x8x32xf32>
    %171 = vector.extract_strided_slice %21 {offsets = [12, 0], sizes = [1, 32], strides = [1, 1]} : vector<31x32xf32> to vector<1x32xf32>
    %172 = vector.shape_cast %171 : vector<1x32xf32> to vector<1x1x32xf32>
    %173 = vector.broadcast %172 : vector<1x1x32xf32> to vector<2x8x32xf32>
    %174 = arith.mulf %170, %173 : vector<2x8x32xf32>
    %175 = arith.addf %169, %174 : vector<2x8x32xf32>
    %176 = vector.extract_strided_slice %20 {offsets = [0, 12, 0], sizes = [2, 8, 32], strides = [1, 1, 1]} : vector<2x38x32xf32> to vector<2x8x32xf32>
    %177 = vector.extract_strided_slice %22 {offsets = [12, 0], sizes = [1, 32], strides = [1, 1]} : vector<31x32xf32> to vector<1x32xf32>
    %178 = vector.shape_cast %177 : vector<1x32xf32> to vector<1x1x32xf32>
    %179 = vector.broadcast %178 : vector<1x1x32xf32> to vector<2x8x32xf32>
    %180 = arith.mulf %176, %179 : vector<2x8x32xf32>
    %181 = arith.addf %175, %180 : vector<2x8x32xf32>
    %182 = vector.extract_strided_slice %18 {offsets = [0, 13, 0], sizes = [2, 8, 32], strides = [1, 1, 1]} : vector<2x38x32xf32> to vector<2x8x32xf32>
    %183 = vector.extract_strided_slice %21 {offsets = [13, 0], sizes = [1, 32], strides = [1, 1]} : vector<31x32xf32> to vector<1x32xf32>
    %184 = vector.shape_cast %183 : vector<1x32xf32> to vector<1x1x32xf32>
    %185 = vector.broadcast %184 : vector<1x1x32xf32> to vector<2x8x32xf32>
    %186 = arith.mulf %182, %185 : vector<2x8x32xf32>
    %187 = arith.addf %181, %186 : vector<2x8x32xf32>
    %188 = vector.extract_strided_slice %20 {offsets = [0, 13, 0], sizes = [2, 8, 32], strides = [1, 1, 1]} : vector<2x38x32xf32> to vector<2x8x32xf32>
    %189 = vector.extract_strided_slice %22 {offsets = [13, 0], sizes = [1, 32], strides = [1, 1]} : vector<31x32xf32> to vector<1x32xf32>
    %190 = vector.shape_cast %189 : vector<1x32xf32> to vector<1x1x32xf32>
    %191 = vector.broadcast %190 : vector<1x1x32xf32> to vector<2x8x32xf32>
    %192 = arith.mulf %188, %191 : vector<2x8x32xf32>
    %193 = arith.addf %187, %192 : vector<2x8x32xf32>
    %194 = vector.extract_strided_slice %18 {offsets = [0, 14, 0], sizes = [2, 8, 32], strides = [1, 1, 1]} : vector<2x38x32xf32> to vector<2x8x32xf32>
    %195 = vector.extract_strided_slice %21 {offsets = [14, 0], sizes = [1, 32], strides = [1, 1]} : vector<31x32xf32> to vector<1x32xf32>
    %196 = vector.shape_cast %195 : vector<1x32xf32> to vector<1x1x32xf32>
    %197 = vector.broadcast %196 : vector<1x1x32xf32> to vector<2x8x32xf32>
    %198 = arith.mulf %194, %197 : vector<2x8x32xf32>
    %199 = arith.addf %193, %198 : vector<2x8x32xf32>
    %200 = vector.extract_strided_slice %20 {offsets = [0, 14, 0], sizes = [2, 8, 32], strides = [1, 1, 1]} : vector<2x38x32xf32> to vector<2x8x32xf32>
    %201 = vector.extract_strided_slice %22 {offsets = [14, 0], sizes = [1, 32], strides = [1, 1]} : vector<31x32xf32> to vector<1x32xf32>
    %202 = vector.shape_cast %201 : vector<1x32xf32> to vector<1x1x32xf32>
    %203 = vector.broadcast %202 : vector<1x1x32xf32> to vector<2x8x32xf32>
    %204 = arith.mulf %200, %203 : vector<2x8x32xf32>
    %205 = arith.addf %199, %204 : vector<2x8x32xf32>
    %206 = vector.extract_strided_slice %18 {offsets = [0, 15, 0], sizes = [2, 8, 32], strides = [1, 1, 1]} : vector<2x38x32xf32> to vector<2x8x32xf32>
    %207 = vector.extract_strided_slice %21 {offsets = [15, 0], sizes = [1, 32], strides = [1, 1]} : vector<31x32xf32> to vector<1x32xf32>
    %208 = vector.shape_cast %207 : vector<1x32xf32> to vector<1x1x32xf32>
    %209 = vector.broadcast %208 : vector<1x1x32xf32> to vector<2x8x32xf32>
    %210 = arith.mulf %206, %209 : vector<2x8x32xf32>
    %211 = arith.addf %205, %210 : vector<2x8x32xf32>
    %212 = vector.extract_strided_slice %20 {offsets = [0, 15, 0], sizes = [2, 8, 32], strides = [1, 1, 1]} : vector<2x38x32xf32> to vector<2x8x32xf32>
    %213 = vector.extract_strided_slice %22 {offsets = [15, 0], sizes = [1, 32], strides = [1, 1]} : vector<31x32xf32> to vector<1x32xf32>
    %214 = vector.shape_cast %213 : vector<1x32xf32> to vector<1x1x32xf32>
    %215 = vector.broadcast %214 : vector<1x1x32xf32> to vector<2x8x32xf32>
    %216 = arith.mulf %212, %215 : vector<2x8x32xf32>
    %217 = arith.addf %211, %216 : vector<2x8x32xf32>
    %218 = vector.extract_strided_slice %18 {offsets = [0, 16, 0], sizes = [2, 8, 32], strides = [1, 1, 1]} : vector<2x38x32xf32> to vector<2x8x32xf32>
    %219 = vector.extract_strided_slice %21 {offsets = [16, 0], sizes = [1, 32], strides = [1, 1]} : vector<31x32xf32> to vector<1x32xf32>
    %220 = vector.shape_cast %219 : vector<1x32xf32> to vector<1x1x32xf32>
    %221 = vector.broadcast %220 : vector<1x1x32xf32> to vector<2x8x32xf32>
    %222 = arith.mulf %218, %221 : vector<2x8x32xf32>
    %223 = arith.addf %217, %222 : vector<2x8x32xf32>
    %224 = vector.extract_strided_slice %20 {offsets = [0, 16, 0], sizes = [2, 8, 32], strides = [1, 1, 1]} : vector<2x38x32xf32> to vector<2x8x32xf32>
    %225 = vector.extract_strided_slice %22 {offsets = [16, 0], sizes = [1, 32], strides = [1, 1]} : vector<31x32xf32> to vector<1x32xf32>
    %226 = vector.shape_cast %225 : vector<1x32xf32> to vector<1x1x32xf32>
    %227 = vector.broadcast %226 : vector<1x1x32xf32> to vector<2x8x32xf32>
    %228 = arith.mulf %224, %227 : vector<2x8x32xf32>
    %229 = arith.addf %223, %228 : vector<2x8x32xf32>
    %230 = vector.extract_strided_slice %18 {offsets = [0, 17, 0], sizes = [2, 8, 32], strides = [1, 1, 1]} : vector<2x38x32xf32> to vector<2x8x32xf32>
    %231 = vector.extract_strided_slice %21 {offsets = [17, 0], sizes = [1, 32], strides = [1, 1]} : vector<31x32xf32> to vector<1x32xf32>
    %232 = vector.shape_cast %231 : vector<1x32xf32> to vector<1x1x32xf32>
    %233 = vector.broadcast %232 : vector<1x1x32xf32> to vector<2x8x32xf32>
    %234 = arith.mulf %230, %233 : vector<2x8x32xf32>
    %235 = arith.addf %229, %234 : vector<2x8x32xf32>
    %236 = vector.extract_strided_slice %20 {offsets = [0, 17, 0], sizes = [2, 8, 32], strides = [1, 1, 1]} : vector<2x38x32xf32> to vector<2x8x32xf32>
    %237 = vector.extract_strided_slice %22 {offsets = [17, 0], sizes = [1, 32], strides = [1, 1]} : vector<31x32xf32> to vector<1x32xf32>
    %238 = vector.shape_cast %237 : vector<1x32xf32> to vector<1x1x32xf32>
    %239 = vector.broadcast %238 : vector<1x1x32xf32> to vector<2x8x32xf32>
    %240 = arith.mulf %236, %239 : vector<2x8x32xf32>
    %241 = arith.addf %235, %240 : vector<2x8x32xf32>
    %242 = vector.extract_strided_slice %18 {offsets = [0, 18, 0], sizes = [2, 8, 32], strides = [1, 1, 1]} : vector<2x38x32xf32> to vector<2x8x32xf32>
    %243 = vector.extract_strided_slice %21 {offsets = [18, 0], sizes = [1, 32], strides = [1, 1]} : vector<31x32xf32> to vector<1x32xf32>
    %244 = vector.shape_cast %243 : vector<1x32xf32> to vector<1x1x32xf32>
    %245 = vector.broadcast %244 : vector<1x1x32xf32> to vector<2x8x32xf32>
    %246 = arith.mulf %242, %245 : vector<2x8x32xf32>
    %247 = arith.addf %241, %246 : vector<2x8x32xf32>
    %248 = vector.extract_strided_slice %20 {offsets = [0, 18, 0], sizes = [2, 8, 32], strides = [1, 1, 1]} : vector<2x38x32xf32> to vector<2x8x32xf32>
    %249 = vector.extract_strided_slice %22 {offsets = [18, 0], sizes = [1, 32], strides = [1, 1]} : vector<31x32xf32> to vector<1x32xf32>
    %250 = vector.shape_cast %249 : vector<1x32xf32> to vector<1x1x32xf32>
    %251 = vector.broadcast %250 : vector<1x1x32xf32> to vector<2x8x32xf32>
    %252 = arith.mulf %248, %251 : vector<2x8x32xf32>
    %253 = arith.addf %247, %252 : vector<2x8x32xf32>
    %254 = vector.extract_strided_slice %18 {offsets = [0, 19, 0], sizes = [2, 8, 32], strides = [1, 1, 1]} : vector<2x38x32xf32> to vector<2x8x32xf32>
    %255 = vector.extract_strided_slice %21 {offsets = [19, 0], sizes = [1, 32], strides = [1, 1]} : vector<31x32xf32> to vector<1x32xf32>
    %256 = vector.shape_cast %255 : vector<1x32xf32> to vector<1x1x32xf32>
    %257 = vector.broadcast %256 : vector<1x1x32xf32> to vector<2x8x32xf32>
    %258 = arith.mulf %254, %257 : vector<2x8x32xf32>
    %259 = arith.addf %253, %258 : vector<2x8x32xf32>
    %260 = vector.extract_strided_slice %20 {offsets = [0, 19, 0], sizes = [2, 8, 32], strides = [1, 1, 1]} : vector<2x38x32xf32> to vector<2x8x32xf32>
    %261 = vector.extract_strided_slice %22 {offsets = [19, 0], sizes = [1, 32], strides = [1, 1]} : vector<31x32xf32> to vector<1x32xf32>
    %262 = vector.shape_cast %261 : vector<1x32xf32> to vector<1x1x32xf32>
    %263 = vector.broadcast %262 : vector<1x1x32xf32> to vector<2x8x32xf32>
    %264 = arith.mulf %260, %263 : vector<2x8x32xf32>
    %265 = arith.addf %259, %264 : vector<2x8x32xf32>
    %266 = vector.extract_strided_slice %18 {offsets = [0, 20, 0], sizes = [2, 8, 32], strides = [1, 1, 1]} : vector<2x38x32xf32> to vector<2x8x32xf32>
    %267 = vector.extract_strided_slice %21 {offsets = [20, 0], sizes = [1, 32], strides = [1, 1]} : vector<31x32xf32> to vector<1x32xf32>
    %268 = vector.shape_cast %267 : vector<1x32xf32> to vector<1x1x32xf32>
    %269 = vector.broadcast %268 : vector<1x1x32xf32> to vector<2x8x32xf32>
    %270 = arith.mulf %266, %269 : vector<2x8x32xf32>
    %271 = arith.addf %265, %270 : vector<2x8x32xf32>
    %272 = vector.extract_strided_slice %20 {offsets = [0, 20, 0], sizes = [2, 8, 32], strides = [1, 1, 1]} : vector<2x38x32xf32> to vector<2x8x32xf32>
    %273 = vector.extract_strided_slice %22 {offsets = [20, 0], sizes = [1, 32], strides = [1, 1]} : vector<31x32xf32> to vector<1x32xf32>
    %274 = vector.shape_cast %273 : vector<1x32xf32> to vector<1x1x32xf32>
    %275 = vector.broadcast %274 : vector<1x1x32xf32> to vector<2x8x32xf32>
    %276 = arith.mulf %272, %275 : vector<2x8x32xf32>
    %277 = arith.addf %271, %276 : vector<2x8x32xf32>
    %278 = vector.extract_strided_slice %18 {offsets = [0, 21, 0], sizes = [2, 8, 32], strides = [1, 1, 1]} : vector<2x38x32xf32> to vector<2x8x32xf32>
    %279 = vector.extract_strided_slice %21 {offsets = [21, 0], sizes = [1, 32], strides = [1, 1]} : vector<31x32xf32> to vector<1x32xf32>
    %280 = vector.shape_cast %279 : vector<1x32xf32> to vector<1x1x32xf32>
    %281 = vector.broadcast %280 : vector<1x1x32xf32> to vector<2x8x32xf32>
    %282 = arith.mulf %278, %281 : vector<2x8x32xf32>
    %283 = arith.addf %277, %282 : vector<2x8x32xf32>
    %284 = vector.extract_strided_slice %20 {offsets = [0, 21, 0], sizes = [2, 8, 32], strides = [1, 1, 1]} : vector<2x38x32xf32> to vector<2x8x32xf32>
    %285 = vector.extract_strided_slice %22 {offsets = [21, 0], sizes = [1, 32], strides = [1, 1]} : vector<31x32xf32> to vector<1x32xf32>
    %286 = vector.shape_cast %285 : vector<1x32xf32> to vector<1x1x32xf32>
    %287 = vector.broadcast %286 : vector<1x1x32xf32> to vector<2x8x32xf32>
    %288 = arith.mulf %284, %287 : vector<2x8x32xf32>
    %289 = arith.addf %283, %288 : vector<2x8x32xf32>
    %290 = vector.extract_strided_slice %18 {offsets = [0, 22, 0], sizes = [2, 8, 32], strides = [1, 1, 1]} : vector<2x38x32xf32> to vector<2x8x32xf32>
    %291 = vector.extract_strided_slice %21 {offsets = [22, 0], sizes = [1, 32], strides = [1, 1]} : vector<31x32xf32> to vector<1x32xf32>
    %292 = vector.shape_cast %291 : vector<1x32xf32> to vector<1x1x32xf32>
    %293 = vector.broadcast %292 : vector<1x1x32xf32> to vector<2x8x32xf32>
    %294 = arith.mulf %290, %293 : vector<2x8x32xf32>
    %295 = arith.addf %289, %294 : vector<2x8x32xf32>
    %296 = vector.extract_strided_slice %20 {offsets = [0, 22, 0], sizes = [2, 8, 32], strides = [1, 1, 1]} : vector<2x38x32xf32> to vector<2x8x32xf32>
    %297 = vector.extract_strided_slice %22 {offsets = [22, 0], sizes = [1, 32], strides = [1, 1]} : vector<31x32xf32> to vector<1x32xf32>
    %298 = vector.shape_cast %297 : vector<1x32xf32> to vector<1x1x32xf32>
    %299 = vector.broadcast %298 : vector<1x1x32xf32> to vector<2x8x32xf32>
    %300 = arith.mulf %296, %299 : vector<2x8x32xf32>
    %301 = arith.addf %295, %300 : vector<2x8x32xf32>
    %302 = vector.extract_strided_slice %18 {offsets = [0, 23, 0], sizes = [2, 8, 32], strides = [1, 1, 1]} : vector<2x38x32xf32> to vector<2x8x32xf32>
    %303 = vector.extract_strided_slice %21 {offsets = [23, 0], sizes = [1, 32], strides = [1, 1]} : vector<31x32xf32> to vector<1x32xf32>
    %304 = vector.shape_cast %303 : vector<1x32xf32> to vector<1x1x32xf32>
    %305 = vector.broadcast %304 : vector<1x1x32xf32> to vector<2x8x32xf32>
    %306 = arith.mulf %302, %305 : vector<2x8x32xf32>
    %307 = arith.addf %301, %306 : vector<2x8x32xf32>
    %308 = vector.extract_strided_slice %20 {offsets = [0, 23, 0], sizes = [2, 8, 32], strides = [1, 1, 1]} : vector<2x38x32xf32> to vector<2x8x32xf32>
    %309 = vector.extract_strided_slice %22 {offsets = [23, 0], sizes = [1, 32], strides = [1, 1]} : vector<31x32xf32> to vector<1x32xf32>
    %310 = vector.shape_cast %309 : vector<1x32xf32> to vector<1x1x32xf32>
    %311 = vector.broadcast %310 : vector<1x1x32xf32> to vector<2x8x32xf32>
    %312 = arith.mulf %308, %311 : vector<2x8x32xf32>
    %313 = arith.addf %307, %312 : vector<2x8x32xf32>
    %314 = vector.extract_strided_slice %18 {offsets = [0, 24, 0], sizes = [2, 8, 32], strides = [1, 1, 1]} : vector<2x38x32xf32> to vector<2x8x32xf32>
    %315 = vector.extract_strided_slice %21 {offsets = [24, 0], sizes = [1, 32], strides = [1, 1]} : vector<31x32xf32> to vector<1x32xf32>
    %316 = vector.shape_cast %315 : vector<1x32xf32> to vector<1x1x32xf32>
    %317 = vector.broadcast %316 : vector<1x1x32xf32> to vector<2x8x32xf32>
    %318 = arith.mulf %314, %317 : vector<2x8x32xf32>
    %319 = arith.addf %313, %318 : vector<2x8x32xf32>
    %320 = vector.extract_strided_slice %20 {offsets = [0, 24, 0], sizes = [2, 8, 32], strides = [1, 1, 1]} : vector<2x38x32xf32> to vector<2x8x32xf32>
    %321 = vector.extract_strided_slice %22 {offsets = [24, 0], sizes = [1, 32], strides = [1, 1]} : vector<31x32xf32> to vector<1x32xf32>
    %322 = vector.shape_cast %321 : vector<1x32xf32> to vector<1x1x32xf32>
    %323 = vector.broadcast %322 : vector<1x1x32xf32> to vector<2x8x32xf32>
    %324 = arith.mulf %320, %323 : vector<2x8x32xf32>
    %325 = arith.addf %319, %324 : vector<2x8x32xf32>
    %326 = vector.extract_strided_slice %18 {offsets = [0, 25, 0], sizes = [2, 8, 32], strides = [1, 1, 1]} : vector<2x38x32xf32> to vector<2x8x32xf32>
    %327 = vector.extract_strided_slice %21 {offsets = [25, 0], sizes = [1, 32], strides = [1, 1]} : vector<31x32xf32> to vector<1x32xf32>
    %328 = vector.shape_cast %327 : vector<1x32xf32> to vector<1x1x32xf32>
    %329 = vector.broadcast %328 : vector<1x1x32xf32> to vector<2x8x32xf32>
    %330 = arith.mulf %326, %329 : vector<2x8x32xf32>
    %331 = arith.addf %325, %330 : vector<2x8x32xf32>
    %332 = vector.extract_strided_slice %20 {offsets = [0, 25, 0], sizes = [2, 8, 32], strides = [1, 1, 1]} : vector<2x38x32xf32> to vector<2x8x32xf32>
    %333 = vector.extract_strided_slice %22 {offsets = [25, 0], sizes = [1, 32], strides = [1, 1]} : vector<31x32xf32> to vector<1x32xf32>
    %334 = vector.shape_cast %333 : vector<1x32xf32> to vector<1x1x32xf32>
    %335 = vector.broadcast %334 : vector<1x1x32xf32> to vector<2x8x32xf32>
    %336 = arith.mulf %332, %335 : vector<2x8x32xf32>
    %337 = arith.addf %331, %336 : vector<2x8x32xf32>
    %338 = vector.extract_strided_slice %18 {offsets = [0, 26, 0], sizes = [2, 8, 32], strides = [1, 1, 1]} : vector<2x38x32xf32> to vector<2x8x32xf32>
    %339 = vector.extract_strided_slice %21 {offsets = [26, 0], sizes = [1, 32], strides = [1, 1]} : vector<31x32xf32> to vector<1x32xf32>
    %340 = vector.shape_cast %339 : vector<1x32xf32> to vector<1x1x32xf32>
    %341 = vector.broadcast %340 : vector<1x1x32xf32> to vector<2x8x32xf32>
    %342 = arith.mulf %338, %341 : vector<2x8x32xf32>
    %343 = arith.addf %337, %342 : vector<2x8x32xf32>
    %344 = vector.extract_strided_slice %20 {offsets = [0, 26, 0], sizes = [2, 8, 32], strides = [1, 1, 1]} : vector<2x38x32xf32> to vector<2x8x32xf32>
    %345 = vector.extract_strided_slice %22 {offsets = [26, 0], sizes = [1, 32], strides = [1, 1]} : vector<31x32xf32> to vector<1x32xf32>
    %346 = vector.shape_cast %345 : vector<1x32xf32> to vector<1x1x32xf32>
    %347 = vector.broadcast %346 : vector<1x1x32xf32> to vector<2x8x32xf32>
    %348 = arith.mulf %344, %347 : vector<2x8x32xf32>
    %349 = arith.addf %343, %348 : vector<2x8x32xf32>
    %350 = vector.extract_strided_slice %18 {offsets = [0, 27, 0], sizes = [2, 8, 32], strides = [1, 1, 1]} : vector<2x38x32xf32> to vector<2x8x32xf32>
    %351 = vector.extract_strided_slice %21 {offsets = [27, 0], sizes = [1, 32], strides = [1, 1]} : vector<31x32xf32> to vector<1x32xf32>
    %352 = vector.shape_cast %351 : vector<1x32xf32> to vector<1x1x32xf32>
    %353 = vector.broadcast %352 : vector<1x1x32xf32> to vector<2x8x32xf32>
    %354 = arith.mulf %350, %353 : vector<2x8x32xf32>
    %355 = arith.addf %349, %354 : vector<2x8x32xf32>
    %356 = vector.extract_strided_slice %20 {offsets = [0, 27, 0], sizes = [2, 8, 32], strides = [1, 1, 1]} : vector<2x38x32xf32> to vector<2x8x32xf32>
    %357 = vector.extract_strided_slice %22 {offsets = [27, 0], sizes = [1, 32], strides = [1, 1]} : vector<31x32xf32> to vector<1x32xf32>
    %358 = vector.shape_cast %357 : vector<1x32xf32> to vector<1x1x32xf32>
    %359 = vector.broadcast %358 : vector<1x1x32xf32> to vector<2x8x32xf32>
    %360 = arith.mulf %356, %359 : vector<2x8x32xf32>
    %361 = arith.addf %355, %360 : vector<2x8x32xf32>
    %362 = vector.extract_strided_slice %18 {offsets = [0, 28, 0], sizes = [2, 8, 32], strides = [1, 1, 1]} : vector<2x38x32xf32> to vector<2x8x32xf32>
    %363 = vector.extract_strided_slice %21 {offsets = [28, 0], sizes = [1, 32], strides = [1, 1]} : vector<31x32xf32> to vector<1x32xf32>
    %364 = vector.shape_cast %363 : vector<1x32xf32> to vector<1x1x32xf32>
    %365 = vector.broadcast %364 : vector<1x1x32xf32> to vector<2x8x32xf32>
    %366 = arith.mulf %362, %365 : vector<2x8x32xf32>
    %367 = arith.addf %361, %366 : vector<2x8x32xf32>
    %368 = vector.extract_strided_slice %20 {offsets = [0, 28, 0], sizes = [2, 8, 32], strides = [1, 1, 1]} : vector<2x38x32xf32> to vector<2x8x32xf32>
    %369 = vector.extract_strided_slice %22 {offsets = [28, 0], sizes = [1, 32], strides = [1, 1]} : vector<31x32xf32> to vector<1x32xf32>
    %370 = vector.shape_cast %369 : vector<1x32xf32> to vector<1x1x32xf32>
    %371 = vector.broadcast %370 : vector<1x1x32xf32> to vector<2x8x32xf32>
    %372 = arith.mulf %368, %371 : vector<2x8x32xf32>
    %373 = arith.addf %367, %372 : vector<2x8x32xf32>
    %374 = vector.extract_strided_slice %18 {offsets = [0, 29, 0], sizes = [2, 8, 32], strides = [1, 1, 1]} : vector<2x38x32xf32> to vector<2x8x32xf32>
    %375 = vector.extract_strided_slice %21 {offsets = [29, 0], sizes = [1, 32], strides = [1, 1]} : vector<31x32xf32> to vector<1x32xf32>
    %376 = vector.shape_cast %375 : vector<1x32xf32> to vector<1x1x32xf32>
    %377 = vector.broadcast %376 : vector<1x1x32xf32> to vector<2x8x32xf32>
    %378 = arith.mulf %374, %377 : vector<2x8x32xf32>
    %379 = arith.addf %373, %378 : vector<2x8x32xf32>
    %380 = vector.extract_strided_slice %20 {offsets = [0, 29, 0], sizes = [2, 8, 32], strides = [1, 1, 1]} : vector<2x38x32xf32> to vector<2x8x32xf32>
    %381 = vector.extract_strided_slice %22 {offsets = [29, 0], sizes = [1, 32], strides = [1, 1]} : vector<31x32xf32> to vector<1x32xf32>
    %382 = vector.shape_cast %381 : vector<1x32xf32> to vector<1x1x32xf32>
    %383 = vector.broadcast %382 : vector<1x1x32xf32> to vector<2x8x32xf32>
    %384 = arith.mulf %380, %383 : vector<2x8x32xf32>
    %385 = arith.addf %379, %384 : vector<2x8x32xf32>
    %386 = vector.extract_strided_slice %18 {offsets = [0, 30, 0], sizes = [2, 8, 32], strides = [1, 1, 1]} : vector<2x38x32xf32> to vector<2x8x32xf32>
    %387 = vector.extract_strided_slice %21 {offsets = [30, 0], sizes = [1, 32], strides = [1, 1]} : vector<31x32xf32> to vector<1x32xf32>
    %388 = vector.shape_cast %387 : vector<1x32xf32> to vector<1x1x32xf32>
    %389 = vector.broadcast %388 : vector<1x1x32xf32> to vector<2x8x32xf32>
    %390 = arith.mulf %386, %389 : vector<2x8x32xf32>
    %391 = arith.addf %385, %390 : vector<2x8x32xf32>
    %392 = vector.extract_strided_slice %20 {offsets = [0, 30, 0], sizes = [2, 8, 32], strides = [1, 1, 1]} : vector<2x38x32xf32> to vector<2x8x32xf32>
    %393 = vector.extract_strided_slice %22 {offsets = [30, 0], sizes = [1, 32], strides = [1, 1]} : vector<31x32xf32> to vector<1x32xf32>
    %394 = vector.shape_cast %393 : vector<1x32xf32> to vector<1x1x32xf32>
    %395 = vector.broadcast %394 : vector<1x1x32xf32> to vector<2x8x32xf32>
    %396 = arith.mulf %392, %395 : vector<2x8x32xf32>
    %397 = arith.addf %391, %396 : vector<2x8x32xf32>
    %cst_25 = arith.constant 2.000000e+01 : f32
    %398 = vector.broadcast %cst_25 : f32 to vector<2x8x32xf32>
    %399 = arith.minimumf %397, %398 : vector<2x8x32xf32>
    %400 = math.exp %399 : vector<2x8x32xf32>
    %cst_26 = arith.constant 2.000000e+00 : f32
    %401 = vector.broadcast %cst_26 : f32 to vector<2x8x32xf32>
    %402 = arith.addf %400, %401 : vector<2x8x32xf32>
    %403 = arith.mulf %400, %402 : vector<2x8x32xf32>
    %cst_27 = arith.constant 2.000000e+00 : f32
    %404 = vector.broadcast %cst_27 : f32 to vector<2x8x32xf32>
    %405 = arith.addf %403, %404 : vector<2x8x32xf32>
    %406 = tpu.reciprocal %405 : vector<2x8x32xf32> -> vector<2x8x32xf32>
    %cst_28 = arith.constant 2.000000e+00 : f32
    %407 = vector.broadcast %cst_28 : f32 to vector<2x8x32xf32>
    %408 = arith.mulf %407, %406 : vector<2x8x32xf32>
    %cst_29 = arith.constant 1.000000e+00 : f32
    %409 = vector.broadcast %cst_29 : f32 to vector<2x8x32xf32>
    %410 = arith.subf %409, %408 : vector<2x8x32xf32>
    %411 = arith.mulf %397, %410 : vector<2x8x32xf32>
    %cst_30 = arith.constant 2.000000e+01 : f32
    %412 = vector.broadcast %cst_30 : f32 to vector<2x8x32xf32>
    %413 = arith.cmpf ogt, %397, %412 : vector<2x8x32xf32>
    %414 = arith.select %413, %397, %411 : vector<2x8x32xi1>, vector<2x8x32xf32>
    %415 = vector.shape_cast %414 : vector<2x8x32xf32> to vector<16x32xf32>
    %cst_31 = arith.constant dense<0.000000e+00> : vector<16x32xf32>
    %416 = tpu.matmul %415, %14, %cst_31 {dimension_numbers = #tpu.dot_dimension_numbers<[1], [0], [0], [1], [0, 0, 1, 1], [], []>} : vector<16x32xf32>, vector<32x32xf32>, vector<16x32xf32> -> vector<16x32xf32>
    %417 = vector.shape_cast %415 : vector<16x32xf32> to vector<2x8x32xf32>
    %418 = tpu.concatenate %15, %417, %15 in 1 : vector<2x15x32xf32>, vector<2x8x32xf32>, vector<2x15x32xf32> -> vector<2x38x32xf32>
    %419 = vector.shape_cast %416 : vector<16x32xf32> to vector<2x8x32xf32>
    %420 = tpu.concatenate %15, %419, %15 in 1 : vector<2x15x32xf32>, vector<2x8x32xf32>, vector<2x15x32xf32> -> vector<2x38x32xf32>
    %c0_32 = arith.constant 0 : index
    %c0_33 = arith.constant 0 : index
    %421 = vector.load %arg11[%c0_32, %c0_33] : memref<31x32xf32, #tpu.memory_space<vmem>>, vector<31x32xf32>
    %c0_34 = arith.constant 0 : index
    %c0_35 = arith.constant 0 : index
    %422 = vector.load %arg12[%c0_34, %c0_35] : memref<31x32xf32, #tpu.memory_space<vmem>>, vector<31x32xf32>
    %423 = vector.extract_strided_slice %418 {offsets = [0, 0, 0], sizes = [2, 8, 32], strides = [1, 1, 1]} : vector<2x38x32xf32> to vector<2x8x32xf32>
    %424 = vector.extract_strided_slice %421 {offsets = [0, 0], sizes = [1, 32], strides = [1, 1]} : vector<31x32xf32> to vector<1x32xf32>
    %425 = vector.shape_cast %424 : vector<1x32xf32> to vector<1x1x32xf32>
    %426 = vector.broadcast %425 : vector<1x1x32xf32> to vector<2x8x32xf32>
    %427 = arith.mulf %423, %426 : vector<2x8x32xf32>
    %428 = vector.extract_strided_slice %420 {offsets = [0, 0, 0], sizes = [2, 8, 32], strides = [1, 1, 1]} : vector<2x38x32xf32> to vector<2x8x32xf32>
    %429 = vector.extract_strided_slice %422 {offsets = [0, 0], sizes = [1, 32], strides = [1, 1]} : vector<31x32xf32> to vector<1x32xf32>
    %430 = vector.shape_cast %429 : vector<1x32xf32> to vector<1x1x32xf32>
    %431 = vector.broadcast %430 : vector<1x1x32xf32> to vector<2x8x32xf32>
    %432 = arith.mulf %428, %431 : vector<2x8x32xf32>
    %433 = arith.addf %427, %432 : vector<2x8x32xf32>
    %c0_36 = arith.constant 0 : index
    %c0_37 = arith.constant 0 : index
    %434 = vector.load %arg13[%c0_36, %c0_37] : memref<1x32xf32, #tpu.memory_space<vmem>>, vector<1x32xf32>
    %435 = vector.shape_cast %434 : vector<1x32xf32> to vector<1x1x32xf32>
    %436 = vector.broadcast %435 : vector<1x1x32xf32> to vector<2x8x32xf32>
    %437 = arith.addf %433, %436 : vector<2x8x32xf32>
    %438 = vector.extract_strided_slice %418 {offsets = [0, 1, 0], sizes = [2, 8, 32], strides = [1, 1, 1]} : vector<2x38x32xf32> to vector<2x8x32xf32>
    %439 = vector.extract_strided_slice %421 {offsets = [1, 0], sizes = [1, 32], strides = [1, 1]} : vector<31x32xf32> to vector<1x32xf32>
    %440 = vector.shape_cast %439 : vector<1x32xf32> to vector<1x1x32xf32>
    %441 = vector.broadcast %440 : vector<1x1x32xf32> to vector<2x8x32xf32>
    %442 = arith.mulf %438, %441 : vector<2x8x32xf32>
    %443 = arith.addf %437, %442 : vector<2x8x32xf32>
    %444 = vector.extract_strided_slice %420 {offsets = [0, 1, 0], sizes = [2, 8, 32], strides = [1, 1, 1]} : vector<2x38x32xf32> to vector<2x8x32xf32>
    %445 = vector.extract_strided_slice %422 {offsets = [1, 0], sizes = [1, 32], strides = [1, 1]} : vector<31x32xf32> to vector<1x32xf32>
    %446 = vector.shape_cast %445 : vector<1x32xf32> to vector<1x1x32xf32>
    %447 = vector.broadcast %446 : vector<1x1x32xf32> to vector<2x8x32xf32>
    %448 = arith.mulf %444, %447 : vector<2x8x32xf32>
    %449 = arith.addf %443, %448 : vector<2x8x32xf32>
    %450 = vector.extract_strided_slice %418 {offsets = [0, 2, 0], sizes = [2, 8, 32], strides = [1, 1, 1]} : vector<2x38x32xf32> to vector<2x8x32xf32>
    %451 = vector.extract_strided_slice %421 {offsets = [2, 0], sizes = [1, 32], strides = [1, 1]} : vector<31x32xf32> to vector<1x32xf32>
    %452 = vector.shape_cast %451 : vector<1x32xf32> to vector<1x1x32xf32>
    %453 = vector.broadcast %452 : vector<1x1x32xf32> to vector<2x8x32xf32>
    %454 = arith.mulf %450, %453 : vector<2x8x32xf32>
    %455 = arith.addf %449, %454 : vector<2x8x32xf32>
    %456 = vector.extract_strided_slice %420 {offsets = [0, 2, 0], sizes = [2, 8, 32], strides = [1, 1, 1]} : vector<2x38x32xf32> to vector<2x8x32xf32>
    %457 = vector.extract_strided_slice %422 {offsets = [2, 0], sizes = [1, 32], strides = [1, 1]} : vector<31x32xf32> to vector<1x32xf32>
    %458 = vector.shape_cast %457 : vector<1x32xf32> to vector<1x1x32xf32>
    %459 = vector.broadcast %458 : vector<1x1x32xf32> to vector<2x8x32xf32>
    %460 = arith.mulf %456, %459 : vector<2x8x32xf32>
    %461 = arith.addf %455, %460 : vector<2x8x32xf32>
    %462 = vector.extract_strided_slice %418 {offsets = [0, 3, 0], sizes = [2, 8, 32], strides = [1, 1, 1]} : vector<2x38x32xf32> to vector<2x8x32xf32>
    %463 = vector.extract_strided_slice %421 {offsets = [3, 0], sizes = [1, 32], strides = [1, 1]} : vector<31x32xf32> to vector<1x32xf32>
    %464 = vector.shape_cast %463 : vector<1x32xf32> to vector<1x1x32xf32>
    %465 = vector.broadcast %464 : vector<1x1x32xf32> to vector<2x8x32xf32>
    %466 = arith.mulf %462, %465 : vector<2x8x32xf32>
    %467 = arith.addf %461, %466 : vector<2x8x32xf32>
    %468 = vector.extract_strided_slice %420 {offsets = [0, 3, 0], sizes = [2, 8, 32], strides = [1, 1, 1]} : vector<2x38x32xf32> to vector<2x8x32xf32>
    %469 = vector.extract_strided_slice %422 {offsets = [3, 0], sizes = [1, 32], strides = [1, 1]} : vector<31x32xf32> to vector<1x32xf32>
    %470 = vector.shape_cast %469 : vector<1x32xf32> to vector<1x1x32xf32>
    %471 = vector.broadcast %470 : vector<1x1x32xf32> to vector<2x8x32xf32>
    %472 = arith.mulf %468, %471 : vector<2x8x32xf32>
    %473 = arith.addf %467, %472 : vector<2x8x32xf32>
    %474 = vector.extract_strided_slice %418 {offsets = [0, 4, 0], sizes = [2, 8, 32], strides = [1, 1, 1]} : vector<2x38x32xf32> to vector<2x8x32xf32>
    %475 = vector.extract_strided_slice %421 {offsets = [4, 0], sizes = [1, 32], strides = [1, 1]} : vector<31x32xf32> to vector<1x32xf32>
    %476 = vector.shape_cast %475 : vector<1x32xf32> to vector<1x1x32xf32>
    %477 = vector.broadcast %476 : vector<1x1x32xf32> to vector<2x8x32xf32>
    %478 = arith.mulf %474, %477 : vector<2x8x32xf32>
    %479 = arith.addf %473, %478 : vector<2x8x32xf32>
    %480 = vector.extract_strided_slice %420 {offsets = [0, 4, 0], sizes = [2, 8, 32], strides = [1, 1, 1]} : vector<2x38x32xf32> to vector<2x8x32xf32>
    %481 = vector.extract_strided_slice %422 {offsets = [4, 0], sizes = [1, 32], strides = [1, 1]} : vector<31x32xf32> to vector<1x32xf32>
    %482 = vector.shape_cast %481 : vector<1x32xf32> to vector<1x1x32xf32>
    %483 = vector.broadcast %482 : vector<1x1x32xf32> to vector<2x8x32xf32>
    %484 = arith.mulf %480, %483 : vector<2x8x32xf32>
    %485 = arith.addf %479, %484 : vector<2x8x32xf32>
    %486 = vector.extract_strided_slice %418 {offsets = [0, 5, 0], sizes = [2, 8, 32], strides = [1, 1, 1]} : vector<2x38x32xf32> to vector<2x8x32xf32>
    %487 = vector.extract_strided_slice %421 {offsets = [5, 0], sizes = [1, 32], strides = [1, 1]} : vector<31x32xf32> to vector<1x32xf32>
    %488 = vector.shape_cast %487 : vector<1x32xf32> to vector<1x1x32xf32>
    %489 = vector.broadcast %488 : vector<1x1x32xf32> to vector<2x8x32xf32>
    %490 = arith.mulf %486, %489 : vector<2x8x32xf32>
    %491 = arith.addf %485, %490 : vector<2x8x32xf32>
    %492 = vector.extract_strided_slice %420 {offsets = [0, 5, 0], sizes = [2, 8, 32], strides = [1, 1, 1]} : vector<2x38x32xf32> to vector<2x8x32xf32>
    %493 = vector.extract_strided_slice %422 {offsets = [5, 0], sizes = [1, 32], strides = [1, 1]} : vector<31x32xf32> to vector<1x32xf32>
    %494 = vector.shape_cast %493 : vector<1x32xf32> to vector<1x1x32xf32>
    %495 = vector.broadcast %494 : vector<1x1x32xf32> to vector<2x8x32xf32>
    %496 = arith.mulf %492, %495 : vector<2x8x32xf32>
    %497 = arith.addf %491, %496 : vector<2x8x32xf32>
    %498 = vector.extract_strided_slice %418 {offsets = [0, 6, 0], sizes = [2, 8, 32], strides = [1, 1, 1]} : vector<2x38x32xf32> to vector<2x8x32xf32>
    %499 = vector.extract_strided_slice %421 {offsets = [6, 0], sizes = [1, 32], strides = [1, 1]} : vector<31x32xf32> to vector<1x32xf32>
    %500 = vector.shape_cast %499 : vector<1x32xf32> to vector<1x1x32xf32>
    %501 = vector.broadcast %500 : vector<1x1x32xf32> to vector<2x8x32xf32>
    %502 = arith.mulf %498, %501 : vector<2x8x32xf32>
    %503 = arith.addf %497, %502 : vector<2x8x32xf32>
    %504 = vector.extract_strided_slice %420 {offsets = [0, 6, 0], sizes = [2, 8, 32], strides = [1, 1, 1]} : vector<2x38x32xf32> to vector<2x8x32xf32>
    %505 = vector.extract_strided_slice %422 {offsets = [6, 0], sizes = [1, 32], strides = [1, 1]} : vector<31x32xf32> to vector<1x32xf32>
    %506 = vector.shape_cast %505 : vector<1x32xf32> to vector<1x1x32xf32>
    %507 = vector.broadcast %506 : vector<1x1x32xf32> to vector<2x8x32xf32>
    %508 = arith.mulf %504, %507 : vector<2x8x32xf32>
    %509 = arith.addf %503, %508 : vector<2x8x32xf32>
    %510 = vector.extract_strided_slice %418 {offsets = [0, 7, 0], sizes = [2, 8, 32], strides = [1, 1, 1]} : vector<2x38x32xf32> to vector<2x8x32xf32>
    %511 = vector.extract_strided_slice %421 {offsets = [7, 0], sizes = [1, 32], strides = [1, 1]} : vector<31x32xf32> to vector<1x32xf32>
    %512 = vector.shape_cast %511 : vector<1x32xf32> to vector<1x1x32xf32>
    %513 = vector.broadcast %512 : vector<1x1x32xf32> to vector<2x8x32xf32>
    %514 = arith.mulf %510, %513 : vector<2x8x32xf32>
    %515 = arith.addf %509, %514 : vector<2x8x32xf32>
    %516 = vector.extract_strided_slice %420 {offsets = [0, 7, 0], sizes = [2, 8, 32], strides = [1, 1, 1]} : vector<2x38x32xf32> to vector<2x8x32xf32>
    %517 = vector.extract_strided_slice %422 {offsets = [7, 0], sizes = [1, 32], strides = [1, 1]} : vector<31x32xf32> to vector<1x32xf32>
    %518 = vector.shape_cast %517 : vector<1x32xf32> to vector<1x1x32xf32>
    %519 = vector.broadcast %518 : vector<1x1x32xf32> to vector<2x8x32xf32>
    %520 = arith.mulf %516, %519 : vector<2x8x32xf32>
    %521 = arith.addf %515, %520 : vector<2x8x32xf32>
    %522 = vector.extract_strided_slice %418 {offsets = [0, 8, 0], sizes = [2, 8, 32], strides = [1, 1, 1]} : vector<2x38x32xf32> to vector<2x8x32xf32>
    %523 = vector.extract_strided_slice %421 {offsets = [8, 0], sizes = [1, 32], strides = [1, 1]} : vector<31x32xf32> to vector<1x32xf32>
    %524 = vector.shape_cast %523 : vector<1x32xf32> to vector<1x1x32xf32>
    %525 = vector.broadcast %524 : vector<1x1x32xf32> to vector<2x8x32xf32>
    %526 = arith.mulf %522, %525 : vector<2x8x32xf32>
    %527 = arith.addf %521, %526 : vector<2x8x32xf32>
    %528 = vector.extract_strided_slice %420 {offsets = [0, 8, 0], sizes = [2, 8, 32], strides = [1, 1, 1]} : vector<2x38x32xf32> to vector<2x8x32xf32>
    %529 = vector.extract_strided_slice %422 {offsets = [8, 0], sizes = [1, 32], strides = [1, 1]} : vector<31x32xf32> to vector<1x32xf32>
    %530 = vector.shape_cast %529 : vector<1x32xf32> to vector<1x1x32xf32>
    %531 = vector.broadcast %530 : vector<1x1x32xf32> to vector<2x8x32xf32>
    %532 = arith.mulf %528, %531 : vector<2x8x32xf32>
    %533 = arith.addf %527, %532 : vector<2x8x32xf32>
    %534 = vector.extract_strided_slice %418 {offsets = [0, 9, 0], sizes = [2, 8, 32], strides = [1, 1, 1]} : vector<2x38x32xf32> to vector<2x8x32xf32>
    %535 = vector.extract_strided_slice %421 {offsets = [9, 0], sizes = [1, 32], strides = [1, 1]} : vector<31x32xf32> to vector<1x32xf32>
    %536 = vector.shape_cast %535 : vector<1x32xf32> to vector<1x1x32xf32>
    %537 = vector.broadcast %536 : vector<1x1x32xf32> to vector<2x8x32xf32>
    %538 = arith.mulf %534, %537 : vector<2x8x32xf32>
    %539 = arith.addf %533, %538 : vector<2x8x32xf32>
    %540 = vector.extract_strided_slice %420 {offsets = [0, 9, 0], sizes = [2, 8, 32], strides = [1, 1, 1]} : vector<2x38x32xf32> to vector<2x8x32xf32>
    %541 = vector.extract_strided_slice %422 {offsets = [9, 0], sizes = [1, 32], strides = [1, 1]} : vector<31x32xf32> to vector<1x32xf32>
    %542 = vector.shape_cast %541 : vector<1x32xf32> to vector<1x1x32xf32>
    %543 = vector.broadcast %542 : vector<1x1x32xf32> to vector<2x8x32xf32>
    %544 = arith.mulf %540, %543 : vector<2x8x32xf32>
    %545 = arith.addf %539, %544 : vector<2x8x32xf32>
    %546 = vector.extract_strided_slice %418 {offsets = [0, 10, 0], sizes = [2, 8, 32], strides = [1, 1, 1]} : vector<2x38x32xf32> to vector<2x8x32xf32>
    %547 = vector.extract_strided_slice %421 {offsets = [10, 0], sizes = [1, 32], strides = [1, 1]} : vector<31x32xf32> to vector<1x32xf32>
    %548 = vector.shape_cast %547 : vector<1x32xf32> to vector<1x1x32xf32>
    %549 = vector.broadcast %548 : vector<1x1x32xf32> to vector<2x8x32xf32>
    %550 = arith.mulf %546, %549 : vector<2x8x32xf32>
    %551 = arith.addf %545, %550 : vector<2x8x32xf32>
    %552 = vector.extract_strided_slice %420 {offsets = [0, 10, 0], sizes = [2, 8, 32], strides = [1, 1, 1]} : vector<2x38x32xf32> to vector<2x8x32xf32>
    %553 = vector.extract_strided_slice %422 {offsets = [10, 0], sizes = [1, 32], strides = [1, 1]} : vector<31x32xf32> to vector<1x32xf32>
    %554 = vector.shape_cast %553 : vector<1x32xf32> to vector<1x1x32xf32>
    %555 = vector.broadcast %554 : vector<1x1x32xf32> to vector<2x8x32xf32>
    %556 = arith.mulf %552, %555 : vector<2x8x32xf32>
    %557 = arith.addf %551, %556 : vector<2x8x32xf32>
    %558 = vector.extract_strided_slice %418 {offsets = [0, 11, 0], sizes = [2, 8, 32], strides = [1, 1, 1]} : vector<2x38x32xf32> to vector<2x8x32xf32>
    %559 = vector.extract_strided_slice %421 {offsets = [11, 0], sizes = [1, 32], strides = [1, 1]} : vector<31x32xf32> to vector<1x32xf32>
    %560 = vector.shape_cast %559 : vector<1x32xf32> to vector<1x1x32xf32>
    %561 = vector.broadcast %560 : vector<1x1x32xf32> to vector<2x8x32xf32>
    %562 = arith.mulf %558, %561 : vector<2x8x32xf32>
    %563 = arith.addf %557, %562 : vector<2x8x32xf32>
    %564 = vector.extract_strided_slice %420 {offsets = [0, 11, 0], sizes = [2, 8, 32], strides = [1, 1, 1]} : vector<2x38x32xf32> to vector<2x8x32xf32>
    %565 = vector.extract_strided_slice %422 {offsets = [11, 0], sizes = [1, 32], strides = [1, 1]} : vector<31x32xf32> to vector<1x32xf32>
    %566 = vector.shape_cast %565 : vector<1x32xf32> to vector<1x1x32xf32>
    %567 = vector.broadcast %566 : vector<1x1x32xf32> to vector<2x8x32xf32>
    %568 = arith.mulf %564, %567 : vector<2x8x32xf32>
    %569 = arith.addf %563, %568 : vector<2x8x32xf32>
    %570 = vector.extract_strided_slice %418 {offsets = [0, 12, 0], sizes = [2, 8, 32], strides = [1, 1, 1]} : vector<2x38x32xf32> to vector<2x8x32xf32>
    %571 = vector.extract_strided_slice %421 {offsets = [12, 0], sizes = [1, 32], strides = [1, 1]} : vector<31x32xf32> to vector<1x32xf32>
    %572 = vector.shape_cast %571 : vector<1x32xf32> to vector<1x1x32xf32>
    %573 = vector.broadcast %572 : vector<1x1x32xf32> to vector<2x8x32xf32>
    %574 = arith.mulf %570, %573 : vector<2x8x32xf32>
    %575 = arith.addf %569, %574 : vector<2x8x32xf32>
    %576 = vector.extract_strided_slice %420 {offsets = [0, 12, 0], sizes = [2, 8, 32], strides = [1, 1, 1]} : vector<2x38x32xf32> to vector<2x8x32xf32>
    %577 = vector.extract_strided_slice %422 {offsets = [12, 0], sizes = [1, 32], strides = [1, 1]} : vector<31x32xf32> to vector<1x32xf32>
    %578 = vector.shape_cast %577 : vector<1x32xf32> to vector<1x1x32xf32>
    %579 = vector.broadcast %578 : vector<1x1x32xf32> to vector<2x8x32xf32>
    %580 = arith.mulf %576, %579 : vector<2x8x32xf32>
    %581 = arith.addf %575, %580 : vector<2x8x32xf32>
    %582 = vector.extract_strided_slice %418 {offsets = [0, 13, 0], sizes = [2, 8, 32], strides = [1, 1, 1]} : vector<2x38x32xf32> to vector<2x8x32xf32>
    %583 = vector.extract_strided_slice %421 {offsets = [13, 0], sizes = [1, 32], strides = [1, 1]} : vector<31x32xf32> to vector<1x32xf32>
    %584 = vector.shape_cast %583 : vector<1x32xf32> to vector<1x1x32xf32>
    %585 = vector.broadcast %584 : vector<1x1x32xf32> to vector<2x8x32xf32>
    %586 = arith.mulf %582, %585 : vector<2x8x32xf32>
    %587 = arith.addf %581, %586 : vector<2x8x32xf32>
    %588 = vector.extract_strided_slice %420 {offsets = [0, 13, 0], sizes = [2, 8, 32], strides = [1, 1, 1]} : vector<2x38x32xf32> to vector<2x8x32xf32>
    %589 = vector.extract_strided_slice %422 {offsets = [13, 0], sizes = [1, 32], strides = [1, 1]} : vector<31x32xf32> to vector<1x32xf32>
    %590 = vector.shape_cast %589 : vector<1x32xf32> to vector<1x1x32xf32>
    %591 = vector.broadcast %590 : vector<1x1x32xf32> to vector<2x8x32xf32>
    %592 = arith.mulf %588, %591 : vector<2x8x32xf32>
    %593 = arith.addf %587, %592 : vector<2x8x32xf32>
    %594 = vector.extract_strided_slice %418 {offsets = [0, 14, 0], sizes = [2, 8, 32], strides = [1, 1, 1]} : vector<2x38x32xf32> to vector<2x8x32xf32>
    %595 = vector.extract_strided_slice %421 {offsets = [14, 0], sizes = [1, 32], strides = [1, 1]} : vector<31x32xf32> to vector<1x32xf32>
    %596 = vector.shape_cast %595 : vector<1x32xf32> to vector<1x1x32xf32>
    %597 = vector.broadcast %596 : vector<1x1x32xf32> to vector<2x8x32xf32>
    %598 = arith.mulf %594, %597 : vector<2x8x32xf32>
    %599 = arith.addf %593, %598 : vector<2x8x32xf32>
    %600 = vector.extract_strided_slice %420 {offsets = [0, 14, 0], sizes = [2, 8, 32], strides = [1, 1, 1]} : vector<2x38x32xf32> to vector<2x8x32xf32>
    %601 = vector.extract_strided_slice %422 {offsets = [14, 0], sizes = [1, 32], strides = [1, 1]} : vector<31x32xf32> to vector<1x32xf32>
    %602 = vector.shape_cast %601 : vector<1x32xf32> to vector<1x1x32xf32>
    %603 = vector.broadcast %602 : vector<1x1x32xf32> to vector<2x8x32xf32>
    %604 = arith.mulf %600, %603 : vector<2x8x32xf32>
    %605 = arith.addf %599, %604 : vector<2x8x32xf32>
    %606 = vector.extract_strided_slice %418 {offsets = [0, 15, 0], sizes = [2, 8, 32], strides = [1, 1, 1]} : vector<2x38x32xf32> to vector<2x8x32xf32>
    %607 = vector.extract_strided_slice %421 {offsets = [15, 0], sizes = [1, 32], strides = [1, 1]} : vector<31x32xf32> to vector<1x32xf32>
    %608 = vector.shape_cast %607 : vector<1x32xf32> to vector<1x1x32xf32>
    %609 = vector.broadcast %608 : vector<1x1x32xf32> to vector<2x8x32xf32>
    %610 = arith.mulf %606, %609 : vector<2x8x32xf32>
    %611 = arith.addf %605, %610 : vector<2x8x32xf32>
    %612 = vector.extract_strided_slice %420 {offsets = [0, 15, 0], sizes = [2, 8, 32], strides = [1, 1, 1]} : vector<2x38x32xf32> to vector<2x8x32xf32>
    %613 = vector.extract_strided_slice %422 {offsets = [15, 0], sizes = [1, 32], strides = [1, 1]} : vector<31x32xf32> to vector<1x32xf32>
    %614 = vector.shape_cast %613 : vector<1x32xf32> to vector<1x1x32xf32>
    %615 = vector.broadcast %614 : vector<1x1x32xf32> to vector<2x8x32xf32>
    %616 = arith.mulf %612, %615 : vector<2x8x32xf32>
    %617 = arith.addf %611, %616 : vector<2x8x32xf32>
    %618 = vector.extract_strided_slice %418 {offsets = [0, 16, 0], sizes = [2, 8, 32], strides = [1, 1, 1]} : vector<2x38x32xf32> to vector<2x8x32xf32>
    %619 = vector.extract_strided_slice %421 {offsets = [16, 0], sizes = [1, 32], strides = [1, 1]} : vector<31x32xf32> to vector<1x32xf32>
    %620 = vector.shape_cast %619 : vector<1x32xf32> to vector<1x1x32xf32>
    %621 = vector.broadcast %620 : vector<1x1x32xf32> to vector<2x8x32xf32>
    %622 = arith.mulf %618, %621 : vector<2x8x32xf32>
    %623 = arith.addf %617, %622 : vector<2x8x32xf32>
    %624 = vector.extract_strided_slice %420 {offsets = [0, 16, 0], sizes = [2, 8, 32], strides = [1, 1, 1]} : vector<2x38x32xf32> to vector<2x8x32xf32>
    %625 = vector.extract_strided_slice %422 {offsets = [16, 0], sizes = [1, 32], strides = [1, 1]} : vector<31x32xf32> to vector<1x32xf32>
    %626 = vector.shape_cast %625 : vector<1x32xf32> to vector<1x1x32xf32>
    %627 = vector.broadcast %626 : vector<1x1x32xf32> to vector<2x8x32xf32>
    %628 = arith.mulf %624, %627 : vector<2x8x32xf32>
    %629 = arith.addf %623, %628 : vector<2x8x32xf32>
    %630 = vector.extract_strided_slice %418 {offsets = [0, 17, 0], sizes = [2, 8, 32], strides = [1, 1, 1]} : vector<2x38x32xf32> to vector<2x8x32xf32>
    %631 = vector.extract_strided_slice %421 {offsets = [17, 0], sizes = [1, 32], strides = [1, 1]} : vector<31x32xf32> to vector<1x32xf32>
    %632 = vector.shape_cast %631 : vector<1x32xf32> to vector<1x1x32xf32>
    %633 = vector.broadcast %632 : vector<1x1x32xf32> to vector<2x8x32xf32>
    %634 = arith.mulf %630, %633 : vector<2x8x32xf32>
    %635 = arith.addf %629, %634 : vector<2x8x32xf32>
    %636 = vector.extract_strided_slice %420 {offsets = [0, 17, 0], sizes = [2, 8, 32], strides = [1, 1, 1]} : vector<2x38x32xf32> to vector<2x8x32xf32>
    %637 = vector.extract_strided_slice %422 {offsets = [17, 0], sizes = [1, 32], strides = [1, 1]} : vector<31x32xf32> to vector<1x32xf32>
    %638 = vector.shape_cast %637 : vector<1x32xf32> to vector<1x1x32xf32>
    %639 = vector.broadcast %638 : vector<1x1x32xf32> to vector<2x8x32xf32>
    %640 = arith.mulf %636, %639 : vector<2x8x32xf32>
    %641 = arith.addf %635, %640 : vector<2x8x32xf32>
    %642 = vector.extract_strided_slice %418 {offsets = [0, 18, 0], sizes = [2, 8, 32], strides = [1, 1, 1]} : vector<2x38x32xf32> to vector<2x8x32xf32>
    %643 = vector.extract_strided_slice %421 {offsets = [18, 0], sizes = [1, 32], strides = [1, 1]} : vector<31x32xf32> to vector<1x32xf32>
    %644 = vector.shape_cast %643 : vector<1x32xf32> to vector<1x1x32xf32>
    %645 = vector.broadcast %644 : vector<1x1x32xf32> to vector<2x8x32xf32>
    %646 = arith.mulf %642, %645 : vector<2x8x32xf32>
    %647 = arith.addf %641, %646 : vector<2x8x32xf32>
    %648 = vector.extract_strided_slice %420 {offsets = [0, 18, 0], sizes = [2, 8, 32], strides = [1, 1, 1]} : vector<2x38x32xf32> to vector<2x8x32xf32>
    %649 = vector.extract_strided_slice %422 {offsets = [18, 0], sizes = [1, 32], strides = [1, 1]} : vector<31x32xf32> to vector<1x32xf32>
    %650 = vector.shape_cast %649 : vector<1x32xf32> to vector<1x1x32xf32>
    %651 = vector.broadcast %650 : vector<1x1x32xf32> to vector<2x8x32xf32>
    %652 = arith.mulf %648, %651 : vector<2x8x32xf32>
    %653 = arith.addf %647, %652 : vector<2x8x32xf32>
    %654 = vector.extract_strided_slice %418 {offsets = [0, 19, 0], sizes = [2, 8, 32], strides = [1, 1, 1]} : vector<2x38x32xf32> to vector<2x8x32xf32>
    %655 = vector.extract_strided_slice %421 {offsets = [19, 0], sizes = [1, 32], strides = [1, 1]} : vector<31x32xf32> to vector<1x32xf32>
    %656 = vector.shape_cast %655 : vector<1x32xf32> to vector<1x1x32xf32>
    %657 = vector.broadcast %656 : vector<1x1x32xf32> to vector<2x8x32xf32>
    %658 = arith.mulf %654, %657 : vector<2x8x32xf32>
    %659 = arith.addf %653, %658 : vector<2x8x32xf32>
    %660 = vector.extract_strided_slice %420 {offsets = [0, 19, 0], sizes = [2, 8, 32], strides = [1, 1, 1]} : vector<2x38x32xf32> to vector<2x8x32xf32>
    %661 = vector.extract_strided_slice %422 {offsets = [19, 0], sizes = [1, 32], strides = [1, 1]} : vector<31x32xf32> to vector<1x32xf32>
    %662 = vector.shape_cast %661 : vector<1x32xf32> to vector<1x1x32xf32>
    %663 = vector.broadcast %662 : vector<1x1x32xf32> to vector<2x8x32xf32>
    %664 = arith.mulf %660, %663 : vector<2x8x32xf32>
    %665 = arith.addf %659, %664 : vector<2x8x32xf32>
    %666 = vector.extract_strided_slice %418 {offsets = [0, 20, 0], sizes = [2, 8, 32], strides = [1, 1, 1]} : vector<2x38x32xf32> to vector<2x8x32xf32>
    %667 = vector.extract_strided_slice %421 {offsets = [20, 0], sizes = [1, 32], strides = [1, 1]} : vector<31x32xf32> to vector<1x32xf32>
    %668 = vector.shape_cast %667 : vector<1x32xf32> to vector<1x1x32xf32>
    %669 = vector.broadcast %668 : vector<1x1x32xf32> to vector<2x8x32xf32>
    %670 = arith.mulf %666, %669 : vector<2x8x32xf32>
    %671 = arith.addf %665, %670 : vector<2x8x32xf32>
    %672 = vector.extract_strided_slice %420 {offsets = [0, 20, 0], sizes = [2, 8, 32], strides = [1, 1, 1]} : vector<2x38x32xf32> to vector<2x8x32xf32>
    %673 = vector.extract_strided_slice %422 {offsets = [20, 0], sizes = [1, 32], strides = [1, 1]} : vector<31x32xf32> to vector<1x32xf32>
    %674 = vector.shape_cast %673 : vector<1x32xf32> to vector<1x1x32xf32>
    %675 = vector.broadcast %674 : vector<1x1x32xf32> to vector<2x8x32xf32>
    %676 = arith.mulf %672, %675 : vector<2x8x32xf32>
    %677 = arith.addf %671, %676 : vector<2x8x32xf32>
    %678 = vector.extract_strided_slice %418 {offsets = [0, 21, 0], sizes = [2, 8, 32], strides = [1, 1, 1]} : vector<2x38x32xf32> to vector<2x8x32xf32>
    %679 = vector.extract_strided_slice %421 {offsets = [21, 0], sizes = [1, 32], strides = [1, 1]} : vector<31x32xf32> to vector<1x32xf32>
    %680 = vector.shape_cast %679 : vector<1x32xf32> to vector<1x1x32xf32>
    %681 = vector.broadcast %680 : vector<1x1x32xf32> to vector<2x8x32xf32>
    %682 = arith.mulf %678, %681 : vector<2x8x32xf32>
    %683 = arith.addf %677, %682 : vector<2x8x32xf32>
    %684 = vector.extract_strided_slice %420 {offsets = [0, 21, 0], sizes = [2, 8, 32], strides = [1, 1, 1]} : vector<2x38x32xf32> to vector<2x8x32xf32>
    %685 = vector.extract_strided_slice %422 {offsets = [21, 0], sizes = [1, 32], strides = [1, 1]} : vector<31x32xf32> to vector<1x32xf32>
    %686 = vector.shape_cast %685 : vector<1x32xf32> to vector<1x1x32xf32>
    %687 = vector.broadcast %686 : vector<1x1x32xf32> to vector<2x8x32xf32>
    %688 = arith.mulf %684, %687 : vector<2x8x32xf32>
    %689 = arith.addf %683, %688 : vector<2x8x32xf32>
    %690 = vector.extract_strided_slice %418 {offsets = [0, 22, 0], sizes = [2, 8, 32], strides = [1, 1, 1]} : vector<2x38x32xf32> to vector<2x8x32xf32>
    %691 = vector.extract_strided_slice %421 {offsets = [22, 0], sizes = [1, 32], strides = [1, 1]} : vector<31x32xf32> to vector<1x32xf32>
    %692 = vector.shape_cast %691 : vector<1x32xf32> to vector<1x1x32xf32>
    %693 = vector.broadcast %692 : vector<1x1x32xf32> to vector<2x8x32xf32>
    %694 = arith.mulf %690, %693 : vector<2x8x32xf32>
    %695 = arith.addf %689, %694 : vector<2x8x32xf32>
    %696 = vector.extract_strided_slice %420 {offsets = [0, 22, 0], sizes = [2, 8, 32], strides = [1, 1, 1]} : vector<2x38x32xf32> to vector<2x8x32xf32>
    %697 = vector.extract_strided_slice %422 {offsets = [22, 0], sizes = [1, 32], strides = [1, 1]} : vector<31x32xf32> to vector<1x32xf32>
    %698 = vector.shape_cast %697 : vector<1x32xf32> to vector<1x1x32xf32>
    %699 = vector.broadcast %698 : vector<1x1x32xf32> to vector<2x8x32xf32>
    %700 = arith.mulf %696, %699 : vector<2x8x32xf32>
    %701 = arith.addf %695, %700 : vector<2x8x32xf32>
    %702 = vector.extract_strided_slice %418 {offsets = [0, 23, 0], sizes = [2, 8, 32], strides = [1, 1, 1]} : vector<2x38x32xf32> to vector<2x8x32xf32>
    %703 = vector.extract_strided_slice %421 {offsets = [23, 0], sizes = [1, 32], strides = [1, 1]} : vector<31x32xf32> to vector<1x32xf32>
    %704 = vector.shape_cast %703 : vector<1x32xf32> to vector<1x1x32xf32>
    %705 = vector.broadcast %704 : vector<1x1x32xf32> to vector<2x8x32xf32>
    %706 = arith.mulf %702, %705 : vector<2x8x32xf32>
    %707 = arith.addf %701, %706 : vector<2x8x32xf32>
    %708 = vector.extract_strided_slice %420 {offsets = [0, 23, 0], sizes = [2, 8, 32], strides = [1, 1, 1]} : vector<2x38x32xf32> to vector<2x8x32xf32>
    %709 = vector.extract_strided_slice %422 {offsets = [23, 0], sizes = [1, 32], strides = [1, 1]} : vector<31x32xf32> to vector<1x32xf32>
    %710 = vector.shape_cast %709 : vector<1x32xf32> to vector<1x1x32xf32>
    %711 = vector.broadcast %710 : vector<1x1x32xf32> to vector<2x8x32xf32>
    %712 = arith.mulf %708, %711 : vector<2x8x32xf32>
    %713 = arith.addf %707, %712 : vector<2x8x32xf32>
    %714 = vector.extract_strided_slice %418 {offsets = [0, 24, 0], sizes = [2, 8, 32], strides = [1, 1, 1]} : vector<2x38x32xf32> to vector<2x8x32xf32>
    %715 = vector.extract_strided_slice %421 {offsets = [24, 0], sizes = [1, 32], strides = [1, 1]} : vector<31x32xf32> to vector<1x32xf32>
    %716 = vector.shape_cast %715 : vector<1x32xf32> to vector<1x1x32xf32>
    %717 = vector.broadcast %716 : vector<1x1x32xf32> to vector<2x8x32xf32>
    %718 = arith.mulf %714, %717 : vector<2x8x32xf32>
    %719 = arith.addf %713, %718 : vector<2x8x32xf32>
    %720 = vector.extract_strided_slice %420 {offsets = [0, 24, 0], sizes = [2, 8, 32], strides = [1, 1, 1]} : vector<2x38x32xf32> to vector<2x8x32xf32>
    %721 = vector.extract_strided_slice %422 {offsets = [24, 0], sizes = [1, 32], strides = [1, 1]} : vector<31x32xf32> to vector<1x32xf32>
    %722 = vector.shape_cast %721 : vector<1x32xf32> to vector<1x1x32xf32>
    %723 = vector.broadcast %722 : vector<1x1x32xf32> to vector<2x8x32xf32>
    %724 = arith.mulf %720, %723 : vector<2x8x32xf32>
    %725 = arith.addf %719, %724 : vector<2x8x32xf32>
    %726 = vector.extract_strided_slice %418 {offsets = [0, 25, 0], sizes = [2, 8, 32], strides = [1, 1, 1]} : vector<2x38x32xf32> to vector<2x8x32xf32>
    %727 = vector.extract_strided_slice %421 {offsets = [25, 0], sizes = [1, 32], strides = [1, 1]} : vector<31x32xf32> to vector<1x32xf32>
    %728 = vector.shape_cast %727 : vector<1x32xf32> to vector<1x1x32xf32>
    %729 = vector.broadcast %728 : vector<1x1x32xf32> to vector<2x8x32xf32>
    %730 = arith.mulf %726, %729 : vector<2x8x32xf32>
    %731 = arith.addf %725, %730 : vector<2x8x32xf32>
    %732 = vector.extract_strided_slice %420 {offsets = [0, 25, 0], sizes = [2, 8, 32], strides = [1, 1, 1]} : vector<2x38x32xf32> to vector<2x8x32xf32>
    %733 = vector.extract_strided_slice %422 {offsets = [25, 0], sizes = [1, 32], strides = [1, 1]} : vector<31x32xf32> to vector<1x32xf32>
    %734 = vector.shape_cast %733 : vector<1x32xf32> to vector<1x1x32xf32>
    %735 = vector.broadcast %734 : vector<1x1x32xf32> to vector<2x8x32xf32>
    %736 = arith.mulf %732, %735 : vector<2x8x32xf32>
    %737 = arith.addf %731, %736 : vector<2x8x32xf32>
    %738 = vector.extract_strided_slice %418 {offsets = [0, 26, 0], sizes = [2, 8, 32], strides = [1, 1, 1]} : vector<2x38x32xf32> to vector<2x8x32xf32>
    %739 = vector.extract_strided_slice %421 {offsets = [26, 0], sizes = [1, 32], strides = [1, 1]} : vector<31x32xf32> to vector<1x32xf32>
    %740 = vector.shape_cast %739 : vector<1x32xf32> to vector<1x1x32xf32>
    %741 = vector.broadcast %740 : vector<1x1x32xf32> to vector<2x8x32xf32>
    %742 = arith.mulf %738, %741 : vector<2x8x32xf32>
    %743 = arith.addf %737, %742 : vector<2x8x32xf32>
    %744 = vector.extract_strided_slice %420 {offsets = [0, 26, 0], sizes = [2, 8, 32], strides = [1, 1, 1]} : vector<2x38x32xf32> to vector<2x8x32xf32>
    %745 = vector.extract_strided_slice %422 {offsets = [26, 0], sizes = [1, 32], strides = [1, 1]} : vector<31x32xf32> to vector<1x32xf32>
    %746 = vector.shape_cast %745 : vector<1x32xf32> to vector<1x1x32xf32>
    %747 = vector.broadcast %746 : vector<1x1x32xf32> to vector<2x8x32xf32>
    %748 = arith.mulf %744, %747 : vector<2x8x32xf32>
    %749 = arith.addf %743, %748 : vector<2x8x32xf32>
    %750 = vector.extract_strided_slice %418 {offsets = [0, 27, 0], sizes = [2, 8, 32], strides = [1, 1, 1]} : vector<2x38x32xf32> to vector<2x8x32xf32>
    %751 = vector.extract_strided_slice %421 {offsets = [27, 0], sizes = [1, 32], strides = [1, 1]} : vector<31x32xf32> to vector<1x32xf32>
    %752 = vector.shape_cast %751 : vector<1x32xf32> to vector<1x1x32xf32>
    %753 = vector.broadcast %752 : vector<1x1x32xf32> to vector<2x8x32xf32>
    %754 = arith.mulf %750, %753 : vector<2x8x32xf32>
    %755 = arith.addf %749, %754 : vector<2x8x32xf32>
    %756 = vector.extract_strided_slice %420 {offsets = [0, 27, 0], sizes = [2, 8, 32], strides = [1, 1, 1]} : vector<2x38x32xf32> to vector<2x8x32xf32>
    %757 = vector.extract_strided_slice %422 {offsets = [27, 0], sizes = [1, 32], strides = [1, 1]} : vector<31x32xf32> to vector<1x32xf32>
    %758 = vector.shape_cast %757 : vector<1x32xf32> to vector<1x1x32xf32>
    %759 = vector.broadcast %758 : vector<1x1x32xf32> to vector<2x8x32xf32>
    %760 = arith.mulf %756, %759 : vector<2x8x32xf32>
    %761 = arith.addf %755, %760 : vector<2x8x32xf32>
    %762 = vector.extract_strided_slice %418 {offsets = [0, 28, 0], sizes = [2, 8, 32], strides = [1, 1, 1]} : vector<2x38x32xf32> to vector<2x8x32xf32>
    %763 = vector.extract_strided_slice %421 {offsets = [28, 0], sizes = [1, 32], strides = [1, 1]} : vector<31x32xf32> to vector<1x32xf32>
    %764 = vector.shape_cast %763 : vector<1x32xf32> to vector<1x1x32xf32>
    %765 = vector.broadcast %764 : vector<1x1x32xf32> to vector<2x8x32xf32>
    %766 = arith.mulf %762, %765 : vector<2x8x32xf32>
    %767 = arith.addf %761, %766 : vector<2x8x32xf32>
    %768 = vector.extract_strided_slice %420 {offsets = [0, 28, 0], sizes = [2, 8, 32], strides = [1, 1, 1]} : vector<2x38x32xf32> to vector<2x8x32xf32>
    %769 = vector.extract_strided_slice %422 {offsets = [28, 0], sizes = [1, 32], strides = [1, 1]} : vector<31x32xf32> to vector<1x32xf32>
    %770 = vector.shape_cast %769 : vector<1x32xf32> to vector<1x1x32xf32>
    %771 = vector.broadcast %770 : vector<1x1x32xf32> to vector<2x8x32xf32>
    %772 = arith.mulf %768, %771 : vector<2x8x32xf32>
    %773 = arith.addf %767, %772 : vector<2x8x32xf32>
    %774 = vector.extract_strided_slice %418 {offsets = [0, 29, 0], sizes = [2, 8, 32], strides = [1, 1, 1]} : vector<2x38x32xf32> to vector<2x8x32xf32>
    %775 = vector.extract_strided_slice %421 {offsets = [29, 0], sizes = [1, 32], strides = [1, 1]} : vector<31x32xf32> to vector<1x32xf32>
    %776 = vector.shape_cast %775 : vector<1x32xf32> to vector<1x1x32xf32>
    %777 = vector.broadcast %776 : vector<1x1x32xf32> to vector<2x8x32xf32>
    %778 = arith.mulf %774, %777 : vector<2x8x32xf32>
    %779 = arith.addf %773, %778 : vector<2x8x32xf32>
    %780 = vector.extract_strided_slice %420 {offsets = [0, 29, 0], sizes = [2, 8, 32], strides = [1, 1, 1]} : vector<2x38x32xf32> to vector<2x8x32xf32>
    %781 = vector.extract_strided_slice %422 {offsets = [29, 0], sizes = [1, 32], strides = [1, 1]} : vector<31x32xf32> to vector<1x32xf32>
    %782 = vector.shape_cast %781 : vector<1x32xf32> to vector<1x1x32xf32>
    %783 = vector.broadcast %782 : vector<1x1x32xf32> to vector<2x8x32xf32>
    %784 = arith.mulf %780, %783 : vector<2x8x32xf32>
    %785 = arith.addf %779, %784 : vector<2x8x32xf32>
    %786 = vector.extract_strided_slice %418 {offsets = [0, 30, 0], sizes = [2, 8, 32], strides = [1, 1, 1]} : vector<2x38x32xf32> to vector<2x8x32xf32>
    %787 = vector.extract_strided_slice %421 {offsets = [30, 0], sizes = [1, 32], strides = [1, 1]} : vector<31x32xf32> to vector<1x32xf32>
    %788 = vector.shape_cast %787 : vector<1x32xf32> to vector<1x1x32xf32>
    %789 = vector.broadcast %788 : vector<1x1x32xf32> to vector<2x8x32xf32>
    %790 = arith.mulf %786, %789 : vector<2x8x32xf32>
    %791 = arith.addf %785, %790 : vector<2x8x32xf32>
    %792 = vector.extract_strided_slice %420 {offsets = [0, 30, 0], sizes = [2, 8, 32], strides = [1, 1, 1]} : vector<2x38x32xf32> to vector<2x8x32xf32>
    %793 = vector.extract_strided_slice %422 {offsets = [30, 0], sizes = [1, 32], strides = [1, 1]} : vector<31x32xf32> to vector<1x32xf32>
    %794 = vector.shape_cast %793 : vector<1x32xf32> to vector<1x1x32xf32>
    %795 = vector.broadcast %794 : vector<1x1x32xf32> to vector<2x8x32xf32>
    %796 = arith.mulf %792, %795 : vector<2x8x32xf32>
    %797 = arith.addf %791, %796 : vector<2x8x32xf32>
    %cst_38 = arith.constant 2.000000e+01 : f32
    %798 = vector.broadcast %cst_38 : f32 to vector<2x8x32xf32>
    %799 = arith.minimumf %797, %798 : vector<2x8x32xf32>
    %800 = math.exp %799 : vector<2x8x32xf32>
    %cst_39 = arith.constant 2.000000e+00 : f32
    %801 = vector.broadcast %cst_39 : f32 to vector<2x8x32xf32>
    %802 = arith.addf %800, %801 : vector<2x8x32xf32>
    %803 = arith.mulf %800, %802 : vector<2x8x32xf32>
    %cst_40 = arith.constant 2.000000e+00 : f32
    %804 = vector.broadcast %cst_40 : f32 to vector<2x8x32xf32>
    %805 = arith.addf %803, %804 : vector<2x8x32xf32>
    %806 = tpu.reciprocal %805 : vector<2x8x32xf32> -> vector<2x8x32xf32>
    %cst_41 = arith.constant 2.000000e+00 : f32
    %807 = vector.broadcast %cst_41 : f32 to vector<2x8x32xf32>
    %808 = arith.mulf %807, %806 : vector<2x8x32xf32>
    %cst_42 = arith.constant 1.000000e+00 : f32
    %809 = vector.broadcast %cst_42 : f32 to vector<2x8x32xf32>
    %810 = arith.subf %809, %808 : vector<2x8x32xf32>
    %811 = arith.mulf %797, %810 : vector<2x8x32xf32>
    %cst_43 = arith.constant 2.000000e+01 : f32
    %812 = vector.broadcast %cst_43 : f32 to vector<2x8x32xf32>
    %813 = arith.cmpf ogt, %797, %812 : vector<2x8x32xf32>
    %814 = arith.select %813, %797, %811 : vector<2x8x32xi1>, vector<2x8x32xf32>
    %815 = vector.shape_cast %814 : vector<2x8x32xf32> to vector<16x32xf32>
    %816 = arith.addf %815, %13 : vector<16x32xf32>
    %c0_44 = arith.constant 0 : index
    %c0_45 = arith.constant 0 : index
    %817 = vector.load %arg15[%c0_44, %c0_45] : memref<16x32xf32, #tpu.memory_space<vmem>>, vector<16x32xf32>
    tpu.vector_store %arg15[%c0_44, %c0_45], %816 {strides = array<i32>} : memref<16x32xf32, #tpu.memory_space<vmem>>, vector<16x32xf32>,
    return
  }
  func.func @transform_0(%arg0: i32) -> (i32, i32) {
    %c0_i32 = arith.constant 0 : i32
    %c0_i32_0 = arith.constant 0 : i32
    %c0_i32_1 = arith.constant 0 : i32
    return %c0_i32, %c0_i32_0 : i32, i32
  }
  func.func @transform_1(%arg0: i32) -> (i32, i32) {
    %c0_i32 = arith.constant 0 : i32
    %c0_i32_0 = arith.constant 0 : i32
    %c0_i32_1 = arith.constant 0 : i32
    return %c0_i32, %c0_i32_0 : i32, i32
  }
  func.func @transform_2(%arg0: i32) -> (i32, i32) {
    %c0_i32 = arith.constant 0 : i32
    %c0_i32_0 = arith.constant 0 : i32
    %c0_i32_1 = arith.constant 0 : i32
    return %c0_i32, %c0_i32_0 : i32, i32
  }
  func.func @transform_3(%arg0: i32) -> (i32, i32) {
    %c0_i32 = arith.constant 0 : i32
    %c0_i32_0 = arith.constant 0 : i32
    %c0_i32_1 = arith.constant 0 : i32
    return %c0_i32, %c0_i32_0 : i32, i32
  }
  func.func @transform_4(%arg0: i32) -> (i32, i32) {
    %c0_i32 = arith.constant 0 : i32
    %c0_i32_0 = arith.constant 0 : i32
    %c0_i32_1 = arith.constant 0 : i32
    return %c0_i32, %c0_i32_0 : i32, i32
  }
  func.func @transform_5(%arg0: i32) -> (i32, i32) {
    %c0_i32 = arith.constant 0 : i32
    %c0_i32_0 = arith.constant 0 : i32
    %c0_i32_1 = arith.constant 0 : i32
    return %c0_i32, %c0_i32_0 : i32, i32
  }
  func.func @transform_6(%arg0: i32) -> (i32, i32) {
    %c0_i32 = arith.constant 0 : i32
    %c0_i32_0 = arith.constant 0 : i32
    %c0_i32_1 = arith.constant 0 : i32
    return %c0_i32, %c0_i32_0 : i32, i32
  }
  func.func @transform_7(%arg0: i32) -> (i32, i32) {
    %c0_i32 = arith.constant 0 : i32
    %c0_i32_0 = arith.constant 0 : i32
    %c0_i32_1 = arith.constant 0 : i32
    return %c0_i32, %c0_i32_0 : i32, i32
  }
  func.func @transform_8(%arg0: i32) -> (i32, i32) {
    %c0_i32 = arith.constant 0 : i32
    %c0_i32_0 = arith.constant 0 : i32
    %c0_i32_1 = arith.constant 0 : i32
    return %c0_i32, %c0_i32_0 : i32, i32
  }
  func.func @transform_9(%arg0: i32) -> (i32, i32) {
    %c0_i32 = arith.constant 0 : i32
    %c0_i32_0 = arith.constant 0 : i32
    %c0_i32_1 = arith.constant 0 : i32
    return %c0_i32, %c0_i32_0 : i32, i32
  }
  func.func @transform_10(%arg0: i32) -> (i32, i32) {
    %c0_i32 = arith.constant 0 : i32
    %c0_i32_0 = arith.constant 0 : i32
    %c0_i32_1 = arith.constant 0 : i32
    return %c0_i32, %c0_i32_0 : i32, i32
  }
  func.func @transform_11(%arg0: i32) -> (i32, i32) {
    %c0_i32 = arith.constant 0 : i32
    %c0_i32_0 = arith.constant 0 : i32
    %c0_i32_1 = arith.constant 0 : i32
    return %c0_i32, %c0_i32_0 : i32, i32
  }
  func.func @transform_12(%arg0: i32) -> (i32, i32) {
    %c0_i32 = arith.constant 0 : i32
    %c0_i32_0 = arith.constant 0 : i32
    %c0_i32_1 = arith.constant 0 : i32
    return %c0_i32, %c0_i32_0 : i32, i32
  }
  func.func @transform_13(%arg0: i32) -> (i32, i32) {
    %c0_i32 = arith.constant 0 : i32
    %c0_i32_0 = arith.constant 0 : i32
    %c0_i32_1 = arith.constant 0 : i32
    return %c0_i32, %c0_i32_0 : i32, i32
  }
  func.func @transform_14(%arg0: i32) -> (i32, i32) {
    %c0_i32 = arith.constant 0 : i32
    %c0_i32_0 = arith.constant 0 : i32
    %c0_i32_1 = arith.constant 0 : i32
    return %c0_i32, %c0_i32_0 : i32, i32
  }
}

</mosaic_0001>

<llo_original>
// kernel: tpu_custom_call.1
$region0: #{tpu_custom_call.1}
  #allocation0 [shape = 'u32[]', space=smem, size = 0x4, offset = 0x4, fixed_abs, tag = 'smem constant byte address 0x4 - core index']
  #allocation1 [shape = 'u32[72,128]{1,0:T(1,128)}', space=vmem, size = 0x9000, scoped, tag = 'internal scratch']
  %s0 = inlined_call_operand.vmem [shape: f32[16,4], index: 0, kind: input, shape index: {}]
  %s1 = inlined_call_operand.vmem [shape: f32[16,4], index: 1, kind: input, shape index: {}]
  %s2 = inlined_call_operand.vmem [shape: f32[16,8], index: 2, kind: input, shape index: {}]
  %s3 = inlined_call_operand.vmem [shape: f32[4,32], index: 3, kind: input, shape index: {}]
  %s4 = inlined_call_operand.vmem [shape: f32[4,32], index: 4, kind: input, shape index: {}]
  %s5 = inlined_call_operand.vmem [shape: f32[8,32], index: 5, kind: input, shape index: {}]
  %s6 = inlined_call_operand.vmem [shape: f32[1,32], index: 6, kind: input, shape index: {}]
  %s7 = inlined_call_operand.vmem [shape: f32[31,32], index: 7, kind: input, shape index: {}]
  %s8 = inlined_call_operand.hbm [shape: f32[31,32], index: 8, kind: input, shape index: {}]
  %s9 = inlined_call_operand.vmem [shape: f32[1,32], index: 9, kind: input, shape index: {}]
  %s10 = inlined_call_operand.hbm [shape: f32[31,32], index: 10, kind: input, shape index: {}]
  %s11 = inlined_call_operand.hbm [shape: f32[31,32], index: 11, kind: input, shape index: {}]
  %s12 = inlined_call_operand.vmem [shape: f32[1,32], index: 12, kind: input, shape index: {}]
  %s13 = inlined_call_operand.hbm [shape: f32[32,32], index: 13, kind: input, shape index: {}]
  %s14 = inlined_call_operand.hbm [shape: f32[16,32], index: 14, kind: output, shape index: {}]
  %s15 = sld [smem:[#allocation0]]
  $region82: #{tpu_custom_call.1} parent=0
    _
  %s17 = ssub.s32 1, %s15
  %s18 = scalar_select 0, %s17, %s15
  $region1: #{tpu_custom_call.1} parent=0
    #allocation2 [shape = 'u8[16384]{0}', space=vmem, size = 0x4000, scoped, tag = 'input window, operand 8, single buffered']
    #allocation3 [shape = 's32[1]{0}', space=sflag, size = 0x4, scoped, tag = 'scoped memory for tpu_custom_call.1']
    #allocation4 [shape = 's32[1]{0}', space=sflag, size = 0x4, scoped, tag = 'scoped memory for tpu_custom_call.1']
    #allocation5 [shape = 'u8[16384]{0}', space=vmem, size = 0x4000, scoped, tag = 'input window, operand 10, single buffered']
    #allocation6 [shape = 's32[1]{0}', space=sflag, size = 0x4, scoped, tag = 'scoped memory for tpu_custom_call.1']
    #allocation7 [shape = 'u8[16384]{0}', space=vmem, size = 0x4000, scoped, tag = 'input window, operand 11, single buffered']
    #allocation8 [shape = 'u8[16384]{0}', space=vmem, size = 0x4000, scoped, tag = 'input window, operand 13, single buffered']
    #allocation9 [shape = 's32[1]{0}', space=sflag, size = 0x4, scoped, tag = 'scoped memory for tpu_custom_call.1']
    #allocation10 [shape = 'u8[8192]{0}', space=vmem, size = 0x2000, scoped, tag = 'output window, operand 0, single buffered']
    %19 = vsyncpa [#allocation3], 0
    %20 = vsyncpa [#allocation6], 0
    %21 = vsyncpa [#allocation9], 0
    %22 = vsyncpa [#allocation4], 0
    // Predicated region
    $region2: #{tpu_custom_call.1} parent=1 // pred_check
      _
    $region3: #{tpu_custom_call.1} parent=1 // pred_check_branch
      %24 = sbr.rel (0) target = $region5
    $region4: #{tpu_custom_call.1} parent=1 // pred_region
      _
    $region5: #{tpu_custom_call.1} parent=1 // pred_fallthru
      _
    // Predicated region
    $region6: #{tpu_custom_call.1} parent=1 // pred_check
      _
    $region7: #{tpu_custom_call.1} parent=1 // pred_check_branch
      %26 = sbr.rel (0) target = $region9
    $region8: #{tpu_custom_call.1} parent=1 // pred_region
      _
    $region9: #{tpu_custom_call.1} parent=1 // pred_fallthru
      _
    // Predicated region
    $region10: #{tpu_custom_call.1} parent=1 // pred_check
      _
    $region11: #{tpu_custom_call.1} parent=1 // pred_check_branch
      %28 = sbr.rel (0) target = $region13
    $region12: #{tpu_custom_call.1} parent=1 // pred_region
      _
    $region13: #{tpu_custom_call.1} parent=1 // pred_fallthru
      _
    // Predicated region
    $region14: #{tpu_custom_call.1} parent=1 // pred_check
      _
    $region15: #{tpu_custom_call.1} parent=1 // pred_check_branch
      %30 = sbr.rel (0) target = $region17
    $region16: #{tpu_custom_call.1} parent=1 // pred_region
      _
    $region17: #{tpu_custom_call.1} parent=1 // pred_fallthru
      _
    // Predicated region
    $region18: #{tpu_custom_call.1} parent=1 // pred_check
      _
    $region19: #{tpu_custom_call.1} parent=1 // pred_check_branch
      %32 = sbr.rel (0) target = $region21
    $region20: #{tpu_custom_call.1} parent=1 // pred_region
      _
    $region21: #{tpu_custom_call.1} parent=1 // pred_fallthru
      _
    // Predicated region
    $region22: #{tpu_custom_call.1} parent=1 // pred_check
      _
    $region23: #{tpu_custom_call.1} parent=1 // pred_check_branch
      %34 = sbr.rel (0) target = $region25
    $region24: #{tpu_custom_call.1} parent=1 // pred_region
      _
    $region25: #{tpu_custom_call.1} parent=1 // pred_fallthru
      _
    // Predicated region
    $region26: #{tpu_custom_call.1} parent=1 // pred_check
      _
    $region27: #{tpu_custom_call.1} parent=1 // pred_check_branch
      %36 = sbr.rel (0) target = $region29
    $region28: #{tpu_custom_call.1} parent=1 // pred_region
      _
    $region29: #{tpu_custom_call.1} parent=1 // pred_fallthru
      _
    // Predicated region
    $region30: #{tpu_custom_call.1} parent=1 // pred_check
      _
    $region31: #{tpu_custom_call.1} parent=1 // pred_check_branch
      %38 = sbr.rel (0) target = $region33
    $region32: #{tpu_custom_call.1} parent=1 // pred_region
      _
    $region33: #{tpu_custom_call.1} parent=1 // pred_fallthru
      _
    // Predicated region
    $region34: #{tpu_custom_call.1} parent=1 // pred_check
      _
    $region35: #{tpu_custom_call.1} parent=1 // pred_check_branch
      %40 = sbr.rel (0) target = $region37
    $region36: #{tpu_custom_call.1} parent=1 // pred_region
      %42 = vsyncadd [#allocation3], 0
      %s43 = sshll.u32 %s8, 4
      %s44 = int_to_ptr.hbm [resolvable:$true] %s43
      %s45 = sshll.u32 [#allocation2], 4
      %s46 = int_to_ptr.vmem [resolvable:$true] %s45
      %51 = dma.hbm_to_vmem [thread:$0]  %s44, 512, %s46, [#allocation3], 128, 128, 8
    $region37: #{tpu_custom_call.1} parent=1 // pred_fallthru
      _
    // Predicated region
    $region38: #{tpu_custom_call.1} parent=1 // pred_check
      _
    $region39: #{tpu_custom_call.1} parent=1 // pred_check_branch
      %53 = sbr.rel (0) target = $region41
    $region40: #{tpu_custom_call.1} parent=1 // pred_region
      _
    $region41: #{tpu_custom_call.1} parent=1 // pred_fallthru
      _
    // Predicated region
    $region42: #{tpu_custom_call.1} parent=1 // pred_check
      _
    $region43: #{tpu_custom_call.1} parent=1 // pred_check_branch
      %55 = sbr.rel (0) target = $region45
    $region44: #{tpu_custom_call.1} parent=1 // pred_region
      %57 = vsyncadd [#allocation6], 0
      %s58 = sshll.u32 %s10, 4
      %s59 = int_to_ptr.hbm [resolvable:$true] %s58
      %s60 = sshll.u32 [#allocation5], 4
      %s61 = int_to_ptr.vmem [resolvable:$true] %s60
      %66 = dma.hbm_to_vmem [thread:$0]  %s59, 512, %s61, [#allocation6], 128, 128, 8
    $region45: #{tpu_custom_call.1} parent=1 // pred_fallthru
      _
    // Predicated region
    $region46: #{tpu_custom_call.1} parent=1 // pred_check
      _
    $region47: #{tpu_custom_call.1} parent=1 // pred_check_branch
      %68 = sbr.rel (0) target = $region49
    $region48: #{tpu_custom_call.1} parent=1 // pred_region
      %70 = vsyncadd [#allocation6], 0
      %s71 = sshll.u32 %s11, 4
      %s72 = int_to_ptr.hbm [resolvable:$true] %s71
      %s73 = sshll.u32 [#allocation7], 4
      %s74 = int_to_ptr.vmem [resolvable:$true] %s73
      %79 = dma.hbm_to_vmem [thread:$0]  %s72, 512, %s74, [#allocation6], 128, 128, 8
    $region49: #{tpu_custom_call.1} parent=1 // pred_fallthru
      _
    // Predicated region
    $region50: #{tpu_custom_call.1} parent=1 // pred_check
      _
    $region51: #{tpu_custom_call.1} parent=1 // pred_check_branch
      %81 = sbr.rel (0) target = $region53
    $region52: #{tpu_custom_call.1} parent=1 // pred_region
      _
    $region53: #{tpu_custom_call.1} parent=1 // pred_fallthru
      _
    // Predicated region
    $region54: #{tpu_custom_call.1} parent=1 // pred_check
      _
    $region55: #{tpu_custom_call.1} parent=1 // pred_check_branch
      %83 = sbr.rel (0) target = $region57
    $region56: #{tpu_custom_call.1} parent=1 // pred_region
      %85 = vsyncadd [#allocation9], 0
      %s86 = sshll.u32 %s13, 4
      %s87 = int_to_ptr.hbm [resolvable:$true] %s86
      %s88 = sshll.u32 [#allocation8], 4
      %s89 = int_to_ptr.vmem [resolvable:$true] %s88
      %94 = dma.hbm_to_vmem [thread:$0]  %s87, 512, %s89, [#allocation9], 128, 128, 8
    $region57: #{tpu_custom_call.1} parent=1 // pred_fallthru
      _
    // Predicated region
    $region58: #{tpu_custom_call.1} parent=1 // pred_check
      _
    $region59: #{tpu_custom_call.1} parent=1 // pred_check_branch
      %96 = sbr.rel (0) target = $region61
    $region60: #{tpu_custom_call.1} parent=1 // pred_region
      %98 = dma.done [#allocation3], 512
    $region61: #{tpu_custom_call.1} parent=1 // pred_fallthru
      _
    // Predicated region
    $region62: #{tpu_custom_call.1} parent=1 // pred_check
      _
    $region63: #{tpu_custom_call.1} parent=1 // pred_check_branch
      %100 = sbr.rel (0) target = $region65
    $region64: #{tpu_custom_call.1} parent=1 // pred_region
      %102 = dma.done [#allocation6], 512
    $region65: #{tpu_custom_call.1} parent=1 // pred_fallthru
      _
    // Predicated region
    $region66: #{tpu_custom_call.1} parent=1 // pred_check
      _
    $region67: #{tpu_custom_call.1} parent=1 // pred_check_branch
      %104 = sbr.rel (0) target = $region69
    $region68: #{tpu_custom_call.1} parent=1 // pred_region
      %106 = dma.done [#allocation6], 512
    $region69: #{tpu_custom_call.1} parent=1 // pred_fallthru
      _
    // Predicated region
    $region70: #{tpu_custom_call.1} parent=1 // pred_check
      _
    $region71: #{tpu_custom_call.1} parent=1 // pred_check_branch
      %108 = sbr.rel (0) target = $region73
    $region72: #{tpu_custom_call.1} parent=1 // pred_region
      %110 = dma.done [#allocation9], 512
    $region73: #{tpu_custom_call.1} parent=1 // pred_fallthru
      _
    %v111 = vld [vmem:[%s0] sm:$0xff]
    %v112 = vld [vmem:[%s0 + $0x8] sm:$0xff]
    %v113 = vld [vmem:[%s3] sm:$0xf]
    %v114 = vld [vmem:[%s1] sm:$0xff]
    %v115 = vld [vmem:[%s1 + $0x8] sm:$0xff]
    %v116 = vld [vmem:[%s4] sm:$0xf]
    %vm117 = vcmask 31744
    %v119 = vsel %vm117, %v114, 0
    %v122 = vsel %vm117, %v115, 0
    %vm124 = vcmask 1043456
    %v126 = vsel %vm124, %v116, 0
    %128 = vmatpush.msra.mxu0 0.0
    %129 = vmatpush.msra.mxu0 0.0
    %130 = vmatpush.msra.mxu0 0.0
    %131 = vmatpush.msra.mxu0 0.0
    %132 = vmatpush.msra.mxu0 0.0
    %133 = vmatpush.msra.mxu0 0.0
    %134 = vmatpush.msra.mxu0 0.0
    %135 = vmatpush.msra.mxu0 0.0
    %136 = vmatpush.msra.mxu0 0.0
    %137 = vmatpush.msra.mxu0 0.0
    %138 = vmatpush.msra.mxu0 0.0
    %139 = vmatpush.msra.mxu0 0.0
    %140 = vmatpush.msra.mxu0 0.0
    %141 = vmatpush.msra.mxu0 0.0
    %142 = vmatpush.msra.mxu0 0.0
    %143 = vmatpush.msra.mxu0 %v126
    %144 = vmatmul.f32.gmra.mxu0 %v119
    %v145 = vpop.f32.mrf.mxu0
    %v146 = vadd.f32 0.0, %v145
    %147 = vmatmul.f32.gmra.mxu0 %v122
    %v148 = vpop.f32.mrf.mxu0
    %v149 = vadd.f32 0.0, %v148
    %150 = vdwg.mxu0
    %v152 = vsel %vm117, %v111, 0
    %v155 = vsel %vm117, %v112, 0
    %v158 = vsel %vm124, %v113, 0
    %160 = vmatpush.msra.mxu0 0.0
    %161 = vmatpush.msra.mxu0 0.0
    %162 = vmatpush.msra.mxu0 0.0
    %163 = vmatpush.msra.mxu0 0.0
    %164 = vmatpush.msra.mxu0 0.0
    %165 = vmatpush.msra.mxu0 0.0
    %166 = vmatpush.msra.mxu0 0.0
    %167 = vmatpush.msra.mxu0 0.0
    %168 = vmatpush.msra.mxu0 0.0
    %169 = vmatpush.msra.mxu0 0.0
    %170 = vmatpush.msra.mxu0 0.0
    %171 = vmatpush.msra.mxu0 0.0
    %172 = vmatpush.msra.mxu0 0.0
    %173 = vmatpush.msra.mxu0 0.0
    %174 = vmatpush.msra.mxu0 0.0
    %175 = vmatpush.msra.mxu0 %v158
    %176 = vmatmul.f32.gmra.mxu0 %v152
    %v177 = vpop.f32.mrf.mxu0
    %v178 = vadd.f32 %v146, %v177
    %179 = vmatmul.f32.gmra.mxu0 %v155
    %v180 = vpop.f32.mrf.mxu0
    %v181 = vadd.f32 %v149, %v180
    %182 = vdwg.mxu0
    %v183 = vld [vmem:[%s2] sm:$0xff]
    %v184 = vld [vmem:[%s2 + $0x8] sm:$0xff]
    %v185 = vld [vmem:[%s5] sm:$0xff]
    %vm186 = vcmask 64512
    %v188 = vsel %vm186, %v183, 0
    %v191 = vsel %vm186, %v184, 0
    %193 = vmatpush.msra.mxu0 0.0
    %194 = vmatpush.msra.mxu0 0.0
    %195 = vmatpush.msra.mxu0 0.0
    %196 = vmatpush.msra.mxu0 0.0
    %197 = vmatpush.msra.mxu0 0.0
    %198 = vmatpush.msra.mxu0 0.0
    %199 = vmatpush.msra.mxu0 0.0
    %200 = vmatpush.msra.mxu0 0.0
    %201 = vmatpush.msra.mxu0 0.0
    %202 = vmatpush.msra.mxu0 0.0
    %203 = vmatpush.msra.mxu0 0.0
    %204 = vmatpush.msra.mxu0 0.0
    %205 = vmatpush.msra.mxu0 0.0
    %206 = vmatpush.msra.mxu0 0.0
    %207 = vmatpush.msra.mxu0 0.0
    %208 = vmatpush.msra.mxu0 %v185
    %209 = vmatmul.f32.gmra.mxu0 %v188
    %v210 = vpop.f32.mrf.mxu0
    %v211 = vadd.f32 0.0, %v210
    %212 = vmatmul.f32.gmra.mxu0 %v191
    %v213 = vpop.f32.mrf.mxu0
    %v214 = vadd.f32 0.0, %v213
    %215 = vdwg.mxu0
    %v216 = vadd.f32 %v178, %v211
    %v217 = vadd.f32 %v181, %v214
    %v218 = vld [vmem:[%s6] sm:$0x1]
    %v220 = vperm.slane %v218, 0
    %v222 = vadd.f32 %v216, %v220
    %v223 = vadd.f32 %v217, %v220
    %v224 = vld [vmem:[#allocation8] sm:$0xff]
    %v225 = vld [vmem:[#allocation8 + $0x8] sm:$0xff]
    %v226 = vld [vmem:[#allocation8 + $0x10] sm:$0xff]
    %v227 = vld [vmem:[#allocation8 + $0x18] sm:$0xff]
    %vm228 = vcmask 261120
    %v230 = vsel %vm228, %v222, 0
    %v233 = vsel %vm228, %v223, 0
    %235 = vmatpush.msra.mxu0 0.0
    %236 = vmatpush.msra.mxu0 0.0
    %237 = vmatpush.msra.mxu0 0.0
    %238 = vmatpush.msra.mxu0 0.0
    %239 = vmatpush.msra.mxu0 0.0
    %240 = vmatpush.msra.mxu0 0.0
    %241 = vmatpush.msra.mxu0 0.0
    %242 = vmatpush.msra.mxu0 0.0
    %243 = vmatpush.msra.mxu0 0.0
    %244 = vmatpush.msra.mxu0 0.0
    %245 = vmatpush.msra.mxu0 0.0
    %246 = vmatpush.msra.mxu0 0.0
    %247 = vmatpush.msra.mxu0 %v227
    %248 = vmatpush.msra.mxu0 %v226
    %249 = vmatpush.msra.mxu0 %v225
    %250 = vmatpush.msra.mxu0 %v224
    %251 = vmatmul.f32.gmra.mxu0 %v230
    %v252 = vpop.f32.mrf.mxu0
    %v253 = vadd.f32 0.0, %v252
    %254 = vmatmul.f32.gmra.mxu0 %v233
    %v255 = vpop.f32.mrf.mxu0
    %v256 = vadd.f32 0.0, %v255
    %257 = vdwg.mxu0
    %v258 = vrot.slane %v222, 1
    %v259 = vrot.slane %v223, 1
    %vm262 = vcmask 1046528
    %v263 = vsel %vm262, 0.0, %v258
    %v264 = vsel %vm262, 0.0, %v259
    %v265 = vsel %vm262, %v258, 0.0
    %v266 = vsel %vm262, %v259, 0.0
    %v269 = vrot.slane %v253, 1
    %v270 = vrot.slane %v256, 1
    %v273 = vsel %vm262, 0.0, %v269
    %v274 = vsel %vm262, 0.0, %v270
    %v275 = vsel %vm262, %v269, 0.0
    %v276 = vsel %vm262, %v270, 0.0
    %v277 = vld [vmem:[%s7] sm:$0xff]
    %v278 = vld [vmem:[%s7 + $0x8] sm:$0xff]
    %v279 = vld [vmem:[%s7 + $0x10] sm:$0xff]
    %v280 = vld [vmem:[%s7 + $0x18] sm:$0x7f]
    %v281 = vld [vmem:[#allocation2] sm:$0xff]
    %v282 = vld [vmem:[#allocation2 + $0x8] sm:$0xff]
    %v283 = vld [vmem:[#allocation2 + $0x10] sm:$0xff]
    %v284 = vld [vmem:[#allocation2 + $0x18] sm:$0x7f]
    %v285 = vperm.slane %v277, 0
    %v286 = vmul.f32 %v285, 0.0
    %v287 = vperm.slane %v281, 0
    %v288 = vmul.f32 %v287, 0.0
    %v289 = vadd.f32 %v286, %v288
    %v290 = vld [vmem:[%s9] sm:$0x1]
    %v292 = vperm.slane %v290, 0
    %v294 = vadd.f32 %v289, %v292
    %v295 = vperm.slane %v277, 1
    %v296 = vmul.f32 %v295, 0.0
    %v297 = vmul.f32 %v263, %v295
    %v298 = vmul.f32 %v264, %v295
    %v302 = vrot.slane %v296, 1
    %v303 = vrot.slane %v297, 1
    %v304 = vsel %vm262, %v302, %v303
    %v305 = vrot.slane %v298, 1
    %v306 = vsel %vm262, %v302, %v305
    %v309 = vadd.f32 %v294, %v304
    %v310 = vadd.f32 %v294, %v306
    %v311 = vperm.slane %v281, 1
    %v312 = vmul.f32 %v311, 0.0
    %v313 = vmul.f32 %v273, %v311
    %v314 = vmul.f32 %v274, %v311
    %v318 = vrot.slane %v312, 1
    %v319 = vrot.slane %v313, 1
    %v320 = vsel %vm262, %v318, %v319
    %v321 = vrot.slane %v314, 1
    %v322 = vsel %vm262, %v318, %v321
    %v325 = vadd.f32 %v309, %v320
    %v326 = vadd.f32 %v310, %v322
    %v327 = vperm.slane %v277, 2
    %v328 = vmul.f32 %v327, 0.0
    %v329 = vmul.f32 %v263, %v327
    %v330 = vmul.f32 %v264, %v327
    %vm334 = vcmask 1045504
    %v335 = vrot.slane %v328, 2
    %v336 = vrot.slane %v329, 2
    %v337 = vsel %vm334, %v335, %v336
    %v338 = vrot.slane %v330, 2
    %v339 = vsel %vm334, %v335, %v338
    %v342 = vadd.f32 %v325, %v337
    %v343 = vadd.f32 %v326, %v339
    %v344 = vperm.slane %v281, 2
    %v345 = vmul.f32 %v344, 0.0
    %v346 = vmul.f32 %v273, %v344
    %v347 = vmul.f32 %v274, %v344
    %v351 = vrot.slane %v345, 2
    %v352 = vrot.slane %v346, 2
    %v353 = vsel %vm334, %v351, %v352
    %v354 = vrot.slane %v347, 2
    %v355 = vsel %vm334, %v351, %v354
    %v358 = vadd.f32 %v342, %v353
    %v359 = vadd.f32 %v343, %v355
    %v360 = vperm.slane %v277, 3
    %v361 = vmul.f32 %v360, 0.0
    %v362 = vmul.f32 %v263, %v360
    %v363 = vmul.f32 %v264, %v360
    %vm367 = vcmask 1044480
    %v368 = vrot.slane %v361, 3
    %v369 = vrot.slane %v362, 3
    %v370 = vsel %vm367, %v368, %v369
    %v371 = vrot.slane %v363, 3
    %v372 = vsel %vm367, %v368, %v371
    %v375 = vadd.f32 %v358, %v370
    %v376 = vadd.f32 %v359, %v372
    %v377 = vperm.slane %v281, 3
    %v378 = vmul.f32 %v377, 0.0
    %v379 = vmul.f32 %v273, %v377
    %v380 = vmul.f32 %v274, %v377
    %v384 = vrot.slane %v378, 3
    %v385 = vrot.slane %v379, 3
    %v386 = vsel %vm367, %v384, %v385
    %v387 = vrot.slane %v380, 3
    %v388 = vsel %vm367, %v384, %v387
    %v391 = vadd.f32 %v375, %v386
    %v392 = vadd.f32 %v376, %v388
    %v393 = vperm.slane %v277, 4
    %v394 = vmul.f32 %v393, 0.0
    %v395 = vmul.f32 %v263, %v393
    %v396 = vmul.f32 %v264, %v393
    %v400 = vrot.slane %v394, 4
    %v401 = vrot.slane %v395, 4
    %v402 = vsel %vm124, %v400, %v401
    %v403 = vrot.slane %v396, 4
    %v404 = vsel %vm124, %v400, %v403
    %v407 = vadd.f32 %v391, %v402
    %v408 = vadd.f32 %v392, %v404
    %v409 = vperm.slane %v281, 4
    %v410 = vmul.f32 %v409, 0.0
    %v411 = vmul.f32 %v273, %v409
    %v412 = vmul.f32 %v274, %v409
    %v416 = vrot.slane %v410, 4
    %v417 = vrot.slane %v411, 4
    %v418 = vsel %vm124, %v416, %v417
    %v419 = vrot.slane %v412, 4
    %v420 = vsel %vm124, %v416, %v419
    %v423 = vadd.f32 %v407, %v418
    %v424 = vadd.f32 %v408, %v420
    %v425 = vperm.slane %v277, 5
    %v426 = vmul.f32 %v425, 0.0
    %v427 = vmul.f32 %v263, %v425
    %v428 = vmul.f32 %v264, %v425
    %vm432 = vcmask 1042432
    %v433 = vrot.slane %v426, 5
    %v434 = vrot.slane %v427, 5
    %v435 = vsel %vm432, %v433, %v434
    %v436 = vrot.slane %v428, 5
    %v437 = vsel %vm432, %v433, %v436
    %v440 = vadd.f32 %v423, %v435
    %v441 = vadd.f32 %v424, %v437
    %v442 = vperm.slane %v281, 5
    %v443 = vmul.f32 %v442, 0.0
    %v444 = vmul.f32 %v273, %v442
    %v445 = vmul.f32 %v274, %v442
    %v449 = vrot.slane %v443, 5
    %v450 = vrot.slane %v444, 5
    %v451 = vsel %vm432, %v449, %v450
    %v452 = vrot.slane %v445, 5
    %v453 = vsel %vm432, %v449, %v452
    %v456 = vadd.f32 %v440, %v451
    %v457 = vadd.f32 %v441, %v453
    %v458 = vperm.slane %v277, 6
    %v459 = vmul.f32 %v458, 0.0
    %v460 = vmul.f32 %v263, %v458
    %v461 = vmul.f32 %v264, %v458
    %vm465 = vcmask 1041408
    %v466 = vrot.slane %v459, 6
    %v467 = vrot.slane %v460, 6
    %v468 = vsel %vm465, %v466, %v467
    %v469 = vrot.slane %v461, 6
    %v470 = vsel %vm465, %v466, %v469
    %v473 = vadd.f32 %v456, %v468
    %v474 = vadd.f32 %v457, %v470
    %v475 = vperm.slane %v281, 6
    %v476 = vmul.f32 %v475, 0.0
    %v477 = vmul.f32 %v273, %v475
    %v478 = vmul.f32 %v274, %v475
    %v482 = vrot.slane %v476, 6
    %v483 = vrot.slane %v477, 6
    %v484 = vsel %vm465, %v482, %v483
    %v485 = vrot.slane %v478, 6
    %v486 = vsel %vm465, %v482, %v485
    %v489 = vadd.f32 %v473, %v484
    %v490 = vadd.f32 %v474, %v486
    %v491 = vperm.slane %v277, 7
    %v492 = vmul.f32 %v491, 0.0
    %v493 = vmul.f32 %v263, %v491
    %v494 = vmul.f32 %v264, %v491
    %vm498 = vcmask 1040384
    %v499 = vrot.slane %v492, 7
    %v500 = vrot.slane %v493, 7
    %v501 = vsel %vm498, %v499, %v500
    %v502 = vrot.slane %v494, 7
    %v503 = vsel %vm498, %v499, %v502
    %v506 = vadd.f32 %v489, %v501
    %v507 = vadd.f32 %v490, %v503
    %v508 = vperm.slane %v281, 7
    %v509 = vmul.f32 %v508, 0.0
    %v510 = vmul.f32 %v273, %v508
    %v511 = vmul.f32 %v274, %v508
    %v515 = vrot.slane %v509, 7
    %v516 = vrot.slane %v510, 7
    %v517 = vsel %vm498, %v515, %v516
    %v518 = vrot.slane %v511, 7
    %v519 = vsel %vm498, %v515, %v518
    %v522 = vadd.f32 %v506, %v517
    %v523 = vadd.f32 %v507, %v519
    %v524 = vperm.slane %v278, 0
    %v525 = vmul.f32 %v263, %v524
    %v526 = vmul.f32 %v264, %v524
    %v527 = vadd.f32 %v522, %v525
    %v528 = vadd.f32 %v523, %v526
    %v529 = vperm.slane %v282, 0
    %v530 = vmul.f32 %v273, %v529
    %v531 = vmul.f32 %v274, %v529
    %v532 = vadd.f32 %v527, %v530
    %v533 = vadd.f32 %v528, %v531
    %v534 = vperm.slane %v278, 1
    %v535 = vmul.f32 %v263, %v534
    %v536 = vmul.f32 %v265, %v534
    %v537 = vmul.f32 %v264, %v534
    %v538 = vmul.f32 %v266, %v534
    %v543 = vrot.slane %v535, 1
    %v544 = vrot.slane %v536, 1
    %v545 = vsel %vm262, %v543, %v544
    %v546 = vrot.slane %v537, 1
    %v547 = vrot.slane %v538, 1
    %v548 = vsel %vm262, %v546, %v547
    %v551 = vadd.f32 %v532, %v545
    %v552 = vadd.f32 %v533, %v548
    %v553 = vperm.slane %v282, 1
    %v554 = vmul.f32 %v273, %v553
    %v555 = vmul.f32 %v275, %v553
    %v556 = vmul.f32 %v274, %v553
    %v557 = vmul.f32 %v276, %v553
    %v562 = vrot.slane %v554, 1
    %v563 = vrot.slane %v555, 1
    %v564 = vsel %vm262, %v562, %v563
    %v565 = vrot.slane %v556, 1
    %v566 = vrot.slane %v557, 1
    %v567 = vsel %vm262, %v565, %v566
    %v570 = vadd.f32 %v551, %v564
    %v571 = vadd.f32 %v552, %v567
    %v572 = vperm.slane %v278, 2
    %v573 = vmul.f32 %v263, %v572
    %v574 = vmul.f32 %v265, %v572
    %v575 = vmul.f32 %v264, %v572
    %v576 = vmul.f32 %v266, %v572
    %v581 = vrot.slane %v573, 2
    %v582 = vrot.slane %v574, 2
    %v583 = vsel %vm334, %v581, %v582
    %v584 = vrot.slane %v575, 2
    %v585 = vrot.slane %v576, 2
    %v586 = vsel %vm334, %v584, %v585
    %v589 = vadd.f32 %v570, %v583
    %v590 = vadd.f32 %v571, %v586
    %v591 = vperm.slane %v282, 2
    %v592 = vmul.f32 %v273, %v591
    %v593 = vmul.f32 %v275, %v591
    %v594 = vmul.f32 %v274, %v591
    %v595 = vmul.f32 %v276, %v591
    %v600 = vrot.slane %v592, 2
    %v601 = vrot.slane %v593, 2
    %v602 = vsel %vm334, %v600, %v601
    %v603 = vrot.slane %v594, 2
    %v604 = vrot.slane %v595, 2
    %v605 = vsel %vm334, %v603, %v604
    %v608 = vadd.f32 %v589, %v602
    %v609 = vadd.f32 %v590, %v605
    %v610 = vperm.slane %v278, 3
    %v611 = vmul.f32 %v263, %v610
    %v612 = vmul.f32 %v265, %v610
    %v613 = vmul.f32 %v264, %v610
    %v614 = vmul.f32 %v266, %v610
    %v619 = vrot.slane %v611, 3
    %v620 = vrot.slane %v612, 3
    %v621 = vsel %vm367, %v619, %v620
    %v622 = vrot.slane %v613, 3
    %v623 = vrot.slane %v614, 3
    %v624 = vsel %vm367, %v622, %v623
    %v627 = vadd.f32 %v608, %v621
    %v628 = vadd.f32 %v609, %v624
    %v629 = vperm.slane %v282, 3
    %v630 = vmul.f32 %v273, %v629
    %v631 = vmul.f32 %v275, %v629
    %v632 = vmul.f32 %v274, %v629
    %v633 = vmul.f32 %v276, %v629
    %v638 = vrot.slane %v630, 3
    %v639 = vrot.slane %v631, 3
    %v640 = vsel %vm367, %v638, %v639
    %v641 = vrot.slane %v632, 3
    %v642 = vrot.slane %v633, 3
    %v643 = vsel %vm367, %v641, %v642
    %v646 = vadd.f32 %v627, %v640
    %v647 = vadd.f32 %v628, %v643
    %v648 = vperm.slane %v278, 4
    %v649 = vmul.f32 %v263, %v648
    %v650 = vmul.f32 %v265, %v648
    %v651 = vmul.f32 %v264, %v648
    %v652 = vmul.f32 %v266, %v648
    %v657 = vrot.slane %v649, 4
    %v658 = vrot.slane %v650, 4
    %v659 = vsel %vm124, %v657, %v658
    %v660 = vrot.slane %v651, 4
    %v661 = vrot.slane %v652, 4
    %v662 = vsel %vm124, %v660, %v661
    %v665 = vadd.f32 %v646, %v659
    %v666 = vadd.f32 %v647, %v662
    %v667 = vperm.slane %v282, 4
    %v668 = vmul.f32 %v273, %v667
    %v669 = vmul.f32 %v275, %v667
    %v670 = vmul.f32 %v274, %v667
    %v671 = vmul.f32 %v276, %v667
    %v676 = vrot.slane %v668, 4
    %v677 = vrot.slane %v669, 4
    %v678 = vsel %vm124, %v676, %v677
    %v679 = vrot.slane %v670, 4
    %v680 = vrot.slane %v671, 4
    %v681 = vsel %vm124, %v679, %v680
    %v684 = vadd.f32 %v665, %v678
    %v685 = vadd.f32 %v666, %v681
    %v686 = vperm.slane %v278, 5
    %v687 = vmul.f32 %v263, %v686
    %v688 = vmul.f32 %v265, %v686
    %v689 = vmul.f32 %v264, %v686
    %v690 = vmul.f32 %v266, %v686
    %v695 = vrot.slane %v687, 5
    %v696 = vrot.slane %v688, 5
    %v697 = vsel %vm432, %v695, %v696
    %v698 = vrot.slane %v689, 5
    %v699 = vrot.slane %v690, 5
    %v700 = vsel %vm432, %v698, %v699
    %v703 = vadd.f32 %v684, %v697
    %v704 = vadd.f32 %v685, %v700
    %v705 = vperm.slane %v282, 5
    %v706 = vmul.f32 %v273, %v705
    %v707 = vmul.f32 %v275, %v705
    %v708 = vmul.f32 %v274, %v705
    %v709 = vmul.f32 %v276, %v705
    %v714 = vrot.slane %v706, 5
    %v715 = vrot.slane %v707, 5
    %v716 = vsel %vm432, %v714, %v715
    %v717 = vrot.slane %v708, 5
    %v718 = vrot.slane %v709, 5
    %v719 = vsel %vm432, %v717, %v718
    %v722 = vadd.f32 %v703, %v716
    %v723 = vadd.f32 %v704, %v719
    %v724 = vperm.slane %v278, 6
    %v725 = vmul.f32 %v263, %v724
    %v726 = vmul.f32 %v265, %v724
    %v727 = vmul.f32 %v264, %v724
    %v728 = vmul.f32 %v266, %v724
    %v733 = vrot.slane %v725, 6
    %v734 = vrot.slane %v726, 6
    %v735 = vsel %vm465, %v733, %v734
    %v736 = vrot.slane %v727, 6
    %v737 = vrot.slane %v728, 6
    %v738 = vsel %vm465, %v736, %v737
    %v741 = vadd.f32 %v722, %v735
    %v742 = vadd.f32 %v723, %v738
    %v743 = vperm.slane %v282, 6
    %v744 = vmul.f32 %v273, %v743
    %v745 = vmul.f32 %v275, %v743
    %v746 = vmul.f32 %v274, %v743
    %v747 = vmul.f32 %v276, %v743
    %v752 = vrot.slane %v744, 6
    %v753 = vrot.slane %v745, 6
    %v754 = vsel %vm465, %v752, %v753
    %v755 = vrot.slane %v746, 6
    %v756 = vrot.slane %v747, 6
    %v757 = vsel %vm465, %v755, %v756
    %v760 = vadd.f32 %v741, %v754
    %v761 = vadd.f32 %v742, %v757
    %v762 = vperm.slane %v278, 7
    %v763 = vmul.f32 %v263, %v762
    %v764 = vmul.f32 %v265, %v762
    %v765 = vmul.f32 %v264, %v762
    %v766 = vmul.f32 %v266, %v762
    %v771 = vrot.slane %v763, 7
    %v772 = vrot.slane %v764, 7
    %v773 = vsel %vm498, %v771, %v772
    %v774 = vrot.slane %v765, 7
    %v775 = vrot.slane %v766, 7
    %v776 = vsel %vm498, %v774, %v775
    %v779 = vadd.f32 %v760, %v773
    %v780 = vadd.f32 %v761, %v776
    %v781 = vperm.slane %v282, 7
    %v782 = vmul.f32 %v273, %v781
    %v783 = vmul.f32 %v275, %v781
    %v784 = vmul.f32 %v274, %v781
    %v785 = vmul.f32 %v276, %v781
    %v790 = vrot.slane %v782, 7
    %v791 = vrot.slane %v783, 7
    %v792 = vsel %vm498, %v790, %v791
    %v793 = vrot.slane %v784, 7
    %v794 = vrot.slane %v785, 7
    %v795 = vsel %vm498, %v793, %v794
    %v798 = vadd.f32 %v779, %v792
    %v799 = vadd.f32 %v780, %v795
    %v800 = vperm.slane %v279, 0
    %v801 = vmul.f32 %v265, %v800
    %v802 = vmul.f32 %v266, %v800
    %v803 = vadd.f32 %v798, %v801
    %v804 = vadd.f32 %v799, %v802
    %v805 = vperm.slane %v283, 0
    %v806 = vmul.f32 %v275, %v805
    %v807 = vmul.f32 %v276, %v805
    %v808 = vadd.f32 %v803, %v806
    %v809 = vadd.f32 %v804, %v807
    %v810 = vperm.slane %v279, 1
    %v811 = vmul.f32 %v265, %v810
    %v812 = vmul.f32 %v810, 0.0
    %v813 = vmul.f32 %v266, %v810
    %v817 = vrot.slane %v811, 1
    %v818 = vrot.slane %v812, 1
    %v819 = vsel %vm262, %v817, %v818
    %v820 = vrot.slane %v813, 1
    %v821 = vsel %vm262, %v820, %v818
    %v824 = vadd.f32 %v808, %v819
    %v825 = vadd.f32 %v809, %v821
    %v826 = vperm.slane %v283, 1
    %v827 = vmul.f32 %v275, %v826
    %v828 = vmul.f32 %v826, 0.0
    %v829 = vmul.f32 %v276, %v826
    %v833 = vrot.slane %v827, 1
    %v834 = vrot.slane %v828, 1
    %v835 = vsel %vm262, %v833, %v834
    %v836 = vrot.slane %v829, 1
    %v837 = vsel %vm262, %v836, %v834
    %v840 = vadd.f32 %v824, %v835
    %v841 = vadd.f32 %v825, %v837
    %v842 = vperm.slane %v279, 2
    %v843 = vmul.f32 %v265, %v842
    %v844 = vmul.f32 %v842, 0.0
    %v845 = vmul.f32 %v266, %v842
    %v849 = vrot.slane %v843, 2
    %v850 = vrot.slane %v844, 2
    %v851 = vsel %vm334, %v849, %v850
    %v852 = vrot.slane %v845, 2
    %v853 = vsel %vm334, %v852, %v850
    %v856 = vadd.f32 %v840, %v851
    %v857 = vadd.f32 %v841, %v853
    %v858 = vperm.slane %v283, 2
    %v859 = vmul.f32 %v275, %v858
    %v860 = vmul.f32 %v858, 0.0
    %v861 = vmul.f32 %v276, %v858
    %v865 = vrot.slane %v859, 2
    %v866 = vrot.slane %v860, 2
    %v867 = vsel %vm334, %v865, %v866
    %v868 = vrot.slane %v861, 2
    %v869 = vsel %vm334, %v868, %v866
    %v872 = vadd.f32 %v856, %v867
    %v873 = vadd.f32 %v857, %v869
    %v874 = vperm.slane %v279, 3
    %v875 = vmul.f32 %v265, %v874
    %v876 = vmul.f32 %v874, 0.0
    %v877 = vmul.f32 %v266, %v874
    %v881 = vrot.slane %v875, 3
    %v882 = vrot.slane %v876, 3
    %v883 = vsel %vm367, %v881, %v882
    %v884 = vrot.slane %v877, 3
    %v885 = vsel %vm367, %v884, %v882
    %v888 = vadd.f32 %v872, %v883
    %v889 = vadd.f32 %v873, %v885
    %v890 = vperm.slane %v283, 3
    %v891 = vmul.f32 %v275, %v890
    %v892 = vmul.f32 %v890, 0.0
    %v893 = vmul.f32 %v276, %v890
    %v897 = vrot.slane %v891, 3
    %v898 = vrot.slane %v892, 3
    %v899 = vsel %vm367, %v897, %v898
    %v900 = vrot.slane %v893, 3
    %v901 = vsel %vm367, %v900, %v898
    %v904 = vadd.f32 %v888, %v899
    %v905 = vadd.f32 %v889, %v901
    %v906 = vperm.slane %v279, 4
    %v907 = vmul.f32 %v265, %v906
    %v908 = vmul.f32 %v906, 0.0
    %v909 = vmul.f32 %v266, %v906
    %v913 = vrot.slane %v907, 4
    %v914 = vrot.slane %v908, 4
    %v915 = vsel %vm124, %v913, %v914
    %v916 = vrot.slane %v909, 4
    %v917 = vsel %vm124, %v916, %v914
    %v920 = vadd.f32 %v904, %v915
    %v921 = vadd.f32 %v905, %v917
    %v922 = vperm.slane %v283, 4
    %v923 = vmul.f32 %v275, %v922
    %v924 = vmul.f32 %v922, 0.0
    %v925 = vmul.f32 %v276, %v922
    %v929 = vrot.slane %v923, 4
    %v930 = vrot.slane %v924, 4
    %v931 = vsel %vm124, %v929, %v930
    %v932 = vrot.slane %v925, 4
    %v933 = vsel %vm124, %v932, %v930
    %v936 = vadd.f32 %v920, %v931
    %v937 = vadd.f32 %v921, %v933
    %v938 = vperm.slane %v279, 5
    %v939 = vmul.f32 %v265, %v938
    %v940 = vmul.f32 %v938, 0.0
    %v941 = vmul.f32 %v266, %v938
    %v945 = vrot.slane %v939, 5
    %v946 = vrot.slane %v940, 5
    %v947 = vsel %vm432, %v945, %v946
    %v948 = vrot.slane %v941, 5
    %v949 = vsel %vm432, %v948, %v946
    %v952 = vadd.f32 %v936, %v947
    %v953 = vadd.f32 %v937, %v949
    %v954 = vperm.slane %v283, 5
    %v955 = vmul.f32 %v275, %v954
    %v956 = vmul.f32 %v954, 0.0
    %v957 = vmul.f32 %v276, %v954
    %v961 = vrot.slane %v955, 5
    %v962 = vrot.slane %v956, 5
    %v963 = vsel %vm432, %v961, %v962
    %v964 = vrot.slane %v957, 5
    %v965 = vsel %vm432, %v964, %v962
    %v968 = vadd.f32 %v952, %v963
    %v969 = vadd.f32 %v953, %v965
    %v970 = vperm.slane %v279, 6
    %v971 = vmul.f32 %v265, %v970
    %v972 = vmul.f32 %v970, 0.0
    %v973 = vmul.f32 %v266, %v970
    %v977 = vrot.slane %v971, 6
    %v978 = vrot.slane %v972, 6
    %v979 = vsel %vm465, %v977, %v978
    %v980 = vrot.slane %v973, 6
    %v981 = vsel %vm465, %v980, %v978
    %v984 = vadd.f32 %v968, %v979
    %v985 = vadd.f32 %v969, %v981
    %v986 = vperm.slane %v283, 6
    %v987 = vmul.f32 %v275, %v986
    %v988 = vmul.f32 %v986, 0.0
    %v989 = vmul.f32 %v276, %v986
    %v993 = vrot.slane %v987, 6
    %v994 = vrot.slane %v988, 6
    %v995 = vsel %vm465, %v993, %v994
    %v996 = vrot.slane %v989, 6
    %v997 = vsel %vm465, %v996, %v994
    %v1000 = vadd.f32 %v984, %v995
    %v1001 = vadd.f32 %v985, %v997
    %v1002 = vperm.slane %v279, 7
    %v1003 = vmul.f32 %v265, %v1002
    %v1004 = vmul.f32 %v1002, 0.0
    %v1005 = vmul.f32 %v266, %v1002
    %v1009 = vrot.slane %v1003, 7
    %v1010 = vrot.slane %v1004, 7
    %v1011 = vsel %vm498, %v1009, %v1010
    %v1012 = vrot.slane %v1005, 7
    %v1013 = vsel %vm498, %v1012, %v1010
    %v1016 = vadd.f32 %v1000, %v1011
    %v1017 = vadd.f32 %v1001, %v1013
    %v1018 = vperm.slane %v283, 7
    %v1019 = vmul.f32 %v275, %v1018
    %v1020 = vmul.f32 %v1018, 0.0
    %v1021 = vmul.f32 %v276, %v1018
    %v1025 = vrot.slane %v1019, 7
    %v1026 = vrot.slane %v1020, 7
    %v1027 = vsel %vm498, %v1025, %v1026
    %v1028 = vrot.slane %v1021, 7
    %v1029 = vsel %vm498, %v1028, %v1026
    %v1032 = vadd.f32 %v1016, %v1027
    %v1033 = vadd.f32 %v1017, %v1029
    %v1034 = vperm.slane %v280, 0
    %v1035 = vmul.f32 %v1034, 0.0
    %v1036 = vadd.f32 %v1032, %v1035
    %v1037 = vadd.f32 %v1033, %v1035
    %v1038 = vperm.slane %v284, 0
    %v1039 = vmul.f32 %v1038, 0.0
    %v1040 = vadd.f32 %v1036, %v1039
    %v1041 = vadd.f32 %v1037, %v1039
    %v1042 = vperm.slane %v280, 1
    %v1043 = vmul.f32 %v1042, 0.0
    %v1045 = vrot.slane %v1043, 1
    %v1046 = vsel %vm262, %v1045, %v1045
    %v1048 = vadd.f32 %v1040, %v1046
    %v1049 = vadd.f32 %v1041, %v1046
    %v1050 = vperm.slane %v284, 1
    %v1051 = vmul.f32 %v1050, 0.0
    %v1053 = vrot.slane %v1051, 1
    %v1054 = vsel %vm262, %v1053, %v1053
    %v1056 = vadd.f32 %v1048, %v1054
    %v1057 = vadd.f32 %v1049, %v1054
    %v1058 = vperm.slane %v280, 2
    %v1059 = vmul.f32 %v1058, 0.0
    %v1061 = vrot.slane %v1059, 2
    %v1062 = vsel %vm334, %v1061, %v1061
    %v1064 = vadd.f32 %v1056, %v1062
    %v1065 = vadd.f32 %v1057, %v1062
    %v1066 = vperm.slane %v284, 2
    %v1067 = vmul.f32 %v1066, 0.0
    %v1069 = vrot.slane %v1067, 2
    %v1070 = vsel %vm334, %v1069, %v1069
    %v1072 = vadd.f32 %v1064, %v1070
    %v1073 = vadd.f32 %v1065, %v1070
    %v1074 = vperm.slane %v280, 3
    %v1075 = vmul.f32 %v1074, 0.0
    %v1077 = vrot.slane %v1075, 3
    %v1078 = vsel %vm367, %v1077, %v1077
    %v1080 = vadd.f32 %v1072, %v1078
    %v1081 = vadd.f32 %v1073, %v1078
    %v1082 = vperm.slane %v284, 3
    %v1083 = vmul.f32 %v1082, 0.0
    %v1085 = vrot.slane %v1083, 3
    %v1086 = vsel %vm367, %v1085, %v1085
    %v1088 = vadd.f32 %v1080, %v1086
    %v1089 = vadd.f32 %v1081, %v1086
    %v1090 = vperm.slane %v280, 4
    %v1091 = vmul.f32 %v1090, 0.0
    %v1093 = vrot.slane %v1091, 4
    %v1094 = vsel %vm124, %v1093, %v1093
    %v1096 = vadd.f32 %v1088, %v1094
    %v1097 = vadd.f32 %v1089, %v1094
    %v1098 = vperm.slane %v284, 4
    %v1099 = vmul.f32 %v1098, 0.0
    %v1101 = vrot.slane %v1099, 4
    %v1102 = vsel %vm124, %v1101, %v1101
    %v1104 = vadd.f32 %v1096, %v1102
    %v1105 = vadd.f32 %v1097, %v1102
    %v1106 = vperm.slane %v280, 5
    %v1107 = vmul.f32 %v1106, 0.0
    %v1109 = vrot.slane %v1107, 5
    %v1110 = vsel %vm432, %v1109, %v1109
    %v1112 = vadd.f32 %v1104, %v1110
    %v1113 = vadd.f32 %v1105, %v1110
    %v1114 = vperm.slane %v284, 5
    %v1115 = vmul.f32 %v1114, 0.0
    %v1117 = vrot.slane %v1115, 5
    %v1118 = vsel %vm432, %v1117, %v1117
    %v1120 = vadd.f32 %v1112, %v1118
    %v1121 = vadd.f32 %v1113, %v1118
    %v1122 = vperm.slane %v280, 6
    %v1123 = vmul.f32 %v1122, 0.0
    %v1125 = vrot.slane %v1123, 6
    %v1126 = vsel %vm465, %v1125, %v1125
    %v1128 = vadd.f32 %v1120, %v1126
    %v1129 = vadd.f32 %v1121, %v1126
    %v1130 = vperm.slane %v284, 6
    %v1131 = vmul.f32 %v1130, 0.0
    %v1133 = vrot.slane %v1131, 6
    %v1134 = vsel %vm465, %v1133, %v1133
    %v1136 = vadd.f32 %v1128, %v1134
    %v1137 = vadd.f32 %v1129, %v1134
    %v1138 = vmin.f32 %v1136, 20.0
    %v1139 = vmin.f32 %v1137, 20.0
    %v1140 = vmul.f32 %v1138, 1.442695
    %v1141 = vpow.pop %v1140
    %v1142 = vmul.f32 %v1139, 1.442695
    %v1143 = vpow.pop %v1142
    %v1144 = vadd.f32 %v1141, 2.0
    %v1145 = vadd.f32 %v1143, 2.0
    %v1146 = vmul.f32 %v1141, %v1144
    %v1147 = vmul.f32 %v1143, %v1145
    %v1148 = vadd.f32 %v1146, 2.0
    %v1149 = vadd.f32 %v1147, 2.0
    %v1150 = vrcp.pop %v1148
    %v1151 = vmul.f32 %v1148, %v1150
    %v1152 = vsub.f32 1.0, %v1151
    %v1153 = vmul.f32 %v1150, %v1152
    %v1154 = vadd.f32 %v1150, %v1153
    %vm1155 = vweird.f32 %v1148
    %vm1156 = vweird.f32 %v1150
    %vm1157 = vmor %vm1155, %vm1156
    %v1158 = vsel %vm1157, %v1150, %v1154
    %v1159 = vand.u32 2147483647, %v1148
    %vm1160 = vcmp.eq.f32.partialorder %v1159, 8.507059e+37
    %v1161 = vand.u32 %v1148, 2147483648
    %v1162 = vor.u32 1.1754944e-38, %v1161
    %v1163 = vsel %vm1160, %v1162, %v1158
    %v1164 = vrcp.pop %v1149
    %v1165 = vmul.f32 %v1149, %v1164
    %v1166 = vsub.f32 1.0, %v1165
    %v1167 = vmul.f32 %v1164, %v1166
    %v1168 = vadd.f32 %v1164, %v1167
    %vm1169 = vweird.f32 %v1149
    %vm1170 = vweird.f32 %v1164
    %vm1171 = vmor %vm1169, %vm1170
    %v1172 = vsel %vm1171, %v1164, %v1168
    %v1173 = vand.u32 2147483647, %v1149
    %vm1174 = vcmp.eq.f32.partialorder %v1173, 8.507059e+37
    %v1175 = vand.u32 %v1149, 2147483648
    %v1176 = vor.u32 1.1754944e-38, %v1175
    %v1177 = vsel %vm1174, %v1176, %v1172
    %v1178 = vmul.f32 %v1163, 2.0
    %v1179 = vmul.f32 %v1177, 2.0
    %v1180 = vsub.f32 1.0, %v1178
    %v1181 = vsub.f32 1.0, %v1179
    %v1182 = vmul.f32 %v1136, %v1180
    %v1183 = vmul.f32 %v1137, %v1181
    %vm1184 = vcmp.gt.f32.partialorder %v1136, 20.0
    %vm1185 = vcmp.gt.f32.partialorder %v1137, 20.0
    %v1186 = vsel %vm1184, %v1136, %v1182
    %v1187 = vsel %vm1185, %v1137, %v1183
    %v1189 = vsel %vm228, %v1186, 0
    %v1192 = vsel %vm228, %v1187, 0
    %1194 = vmatpush.msra.mxu0 0.0
    %1195 = vmatpush.msra.mxu0 0.0
    %1196 = vmatpush.msra.mxu0 0.0
    %1197 = vmatpush.msra.mxu0 0.0
    %1198 = vmatpush.msra.mxu0 0.0
    %1199 = vmatpush.msra.mxu0 0.0
    %1200 = vmatpush.msra.mxu0 0.0
    %1201 = vmatpush.msra.mxu0 0.0
    %1202 = vmatpush.msra.mxu0 0.0
    %1203 = vmatpush.msra.mxu0 0.0
    %1204 = vmatpush.msra.mxu0 0.0
    %1205 = vmatpush.msra.mxu0 0.0
    %1206 = vmatpush.msra.mxu0 %v227
    %1207 = vmatpush.msra.mxu0 %v226
    %1208 = vmatpush.msra.mxu0 %v225
    %1209 = vmatpush.msra.mxu0 %v224
    %1210 = vmatmul.f32.gmra.mxu0 %v1189
    %v1211 = vpop.f32.mrf.mxu0
    %v1212 = vadd.f32 0.0, %v1211
    %1213 = vmatmul.f32.gmra.mxu0 %v1192
    %v1214 = vpop.f32.mrf.mxu0
    %v1215 = vadd.f32 0.0, %v1214
    %1216 = vdwg.mxu0
    %v1217 = vrot.slane %v1186, 1
    %v1218 = vrot.slane %v1187, 1
    %v1221 = vsel %vm262, 0.0, %v1217
    %v1222 = vsel %vm262, 0.0, %v1218
    %v1223 = vsel %vm262, %v1217, 0.0
    %v1224 = vsel %vm262, %v1218, 0.0
    %v1227 = vrot.slane %v1212, 1
    %v1228 = vrot.slane %v1215, 1
    %v1231 = vsel %vm262, 0.0, %v1227
    %v1232 = vsel %vm262, 0.0, %v1228
    %v1233 = vsel %vm262, %v1227, 0.0
    %v1234 = vsel %vm262, %v1228, 0.0
    %v1235 = vld [vmem:[#allocation5] sm:$0xff]
    %v1236 = vld [vmem:[#allocation5 + $0x8] sm:$0xff]
    %v1237 = vld [vmem:[#allocation5 + $0x10] sm:$0xff]
    %v1238 = vld [vmem:[#allocation5 + $0x18] sm:$0x7f]
    %v1239 = vld [vmem:[#allocation7] sm:$0xff]
    %v1240 = vld [vmem:[#allocation7 + $0x8] sm:$0xff]
    %v1241 = vld [vmem:[#allocation7 + $0x10] sm:$0xff]
    %v1242 = vld [vmem:[#allocation7 + $0x18] sm:$0x7f]
    %v1243 = vperm.slane %v1235, 0
    %v1244 = vmul.f32 %v1243, 0.0
    %v1245 = vperm.slane %v1239, 0
    %v1246 = vmul.f32 %v1245, 0.0
    %v1247 = vadd.f32 %v1244, %v1246
    %v1248 = vld [vmem:[%s12] sm:$0x1]
    %v1250 = vperm.slane %v1248, 0
    %v1252 = vadd.f32 %v1247, %v1250
    %v1253 = vperm.slane %v1235, 1
    %v1254 = vmul.f32 %v1253, 0.0
    %v1255 = vmul.f32 %v1221, %v1253
    %v1256 = vmul.f32 %v1222, %v1253
    %v1260 = vrot.slane %v1254, 1
    %v1261 = vrot.slane %v1255, 1
    %v1262 = vsel %vm262, %v1260, %v1261
    %v1263 = vrot.slane %v1256, 1
    %v1264 = vsel %vm262, %v1260, %v1263
    %v1267 = vadd.f32 %v1252, %v1262
    %v1268 = vadd.f32 %v1252, %v1264
    %v1269 = vperm.slane %v1239, 1
    %v1270 = vmul.f32 %v1269, 0.0
    %v1271 = vmul.f32 %v1231, %v1269
    %v1272 = vmul.f32 %v1232, %v1269
    %v1276 = vrot.slane %v1270, 1
    %v1277 = vrot.slane %v1271, 1
    %v1278 = vsel %vm262, %v1276, %v1277
    %v1279 = vrot.slane %v1272, 1
    %v1280 = vsel %vm262, %v1276, %v1279
    %v1283 = vadd.f32 %v1267, %v1278
    %v1284 = vadd.f32 %v1268, %v1280
    %v1285 = vperm.slane %v1235, 2
    %v1286 = vmul.f32 %v1285, 0.0
    %v1287 = vmul.f32 %v1221, %v1285
    %v1288 = vmul.f32 %v1222, %v1285
    %v1292 = vrot.slane %v1286, 2
    %v1293 = vrot.slane %v1287, 2
    %v1294 = vsel %vm334, %v1292, %v1293
    %v1295 = vrot.slane %v1288, 2
    %v1296 = vsel %vm334, %v1292, %v1295
    %v1299 = vadd.f32 %v1283, %v1294
    %v1300 = vadd.f32 %v1284, %v1296
    %v1301 = vperm.slane %v1239, 2
    %v1302 = vmul.f32 %v1301, 0.0
    %v1303 = vmul.f32 %v1231, %v1301
    %v1304 = vmul.f32 %v1232, %v1301
    %v1308 = vrot.slane %v1302, 2
    %v1309 = vrot.slane %v1303, 2
    %v1310 = vsel %vm334, %v1308, %v1309
    %v1311 = vrot.slane %v1304, 2
    %v1312 = vsel %vm334, %v1308, %v1311
    %v1315 = vadd.f32 %v1299, %v1310
    %v1316 = vadd.f32 %v1300, %v1312
    %v1317 = vperm.slane %v1235, 3
    %v1318 = vmul.f32 %v1317, 0.0
    %v1319 = vmul.f32 %v1221, %v1317
    %v1320 = vmul.f32 %v1222, %v1317
    %v1324 = vrot.slane %v1318, 3
    %v1325 = vrot.slane %v1319, 3
    %v1326 = vsel %vm367, %v1324, %v1325
    %v1327 = vrot.slane %v1320, 3
    %v1328 = vsel %vm367, %v1324, %v1327
    %v1331 = vadd.f32 %v1315, %v1326
    %v1332 = vadd.f32 %v1316, %v1328
    %v1333 = vperm.slane %v1239, 3
    %v1334 = vmul.f32 %v1333, 0.0
    %v1335 = vmul.f32 %v1231, %v1333
    %v1336 = vmul.f32 %v1232, %v1333
    %v1340 = vrot.slane %v1334, 3
    %v1341 = vrot.slane %v1335, 3
    %v1342 = vsel %vm367, %v1340, %v1341
    %v1343 = vrot.slane %v1336, 3
    %v1344 = vsel %vm367, %v1340, %v1343
    %v1347 = vadd.f32 %v1331, %v1342
    %v1348 = vadd.f32 %v1332, %v1344
    %v1349 = vperm.slane %v1235, 4
    %v1350 = vmul.f32 %v1349, 0.0
    %v1351 = vmul.f32 %v1221, %v1349
    %v1352 = vmul.f32 %v1222, %v1349
    %v1356 = vrot.slane %v1350, 4
    %v1357 = vrot.slane %v1351, 4
    %v1358 = vsel %vm124, %v1356, %v1357
    %v1359 = vrot.slane %v1352, 4
    %v1360 = vsel %vm124, %v1356, %v1359
    %v1363 = vadd.f32 %v1347, %v1358
    %v1364 = vadd.f32 %v1348, %v1360
    %v1365 = vperm.slane %v1239, 4
    %v1366 = vmul.f32 %v1365, 0.0
    %v1367 = vmul.f32 %v1231, %v1365
    %v1368 = vmul.f32 %v1232, %v1365
    %v1372 = vrot.slane %v1366, 4
    %v1373 = vrot.slane %v1367, 4
    %v1374 = vsel %vm124, %v1372, %v1373
    %v1375 = vrot.slane %v1368, 4
    %v1376 = vsel %vm124, %v1372, %v1375
    %v1379 = vadd.f32 %v1363, %v1374
    %v1380 = vadd.f32 %v1364, %v1376
    %v1381 = vperm.slane %v1235, 5
    %v1382 = vmul.f32 %v1381, 0.0
    %v1383 = vmul.f32 %v1221, %v1381
    %v1384 = vmul.f32 %v1222, %v1381
    %v1388 = vrot.slane %v1382, 5
    %v1389 = vrot.slane %v1383, 5
    %v1390 = vsel %vm432, %v1388, %v1389
    %v1391 = vrot.slane %v1384, 5
    %v1392 = vsel %vm432, %v1388, %v1391
    %v1395 = vadd.f32 %v1379, %v1390
    %v1396 = vadd.f32 %v1380, %v1392
    %v1397 = vperm.slane %v1239, 5
    %v1398 = vmul.f32 %v1397, 0.0
    %v1399 = vmul.f32 %v1231, %v1397
    %v1400 = vmul.f32 %v1232, %v1397
    %v1404 = vrot.slane %v1398, 5
    %v1405 = vrot.slane %v1399, 5
    %v1406 = vsel %vm432, %v1404, %v1405
    %v1407 = vrot.slane %v1400, 5
    %v1408 = vsel %vm432, %v1404, %v1407
    %v1411 = vadd.f32 %v1395, %v1406
    %v1412 = vadd.f32 %v1396, %v1408
    %v1413 = vperm.slane %v1235, 6
    %v1414 = vmul.f32 %v1413, 0.0
    %v1415 = vmul.f32 %v1221, %v1413
    %v1416 = vmul.f32 %v1222, %v1413
    %v1420 = vrot.slane %v1414, 6
    %v1421 = vrot.slane %v1415, 6
    %v1422 = vsel %vm465, %v1420, %v1421
    %v1423 = vrot.slane %v1416, 6
    %v1424 = vsel %vm465, %v1420, %v1423
    %v1427 = vadd.f32 %v1411, %v1422
    %v1428 = vadd.f32 %v1412, %v1424
    %v1429 = vperm.slane %v1239, 6
    %v1430 = vmul.f32 %v1429, 0.0
    %v1431 = vmul.f32 %v1231, %v1429
    %v1432 = vmul.f32 %v1232, %v1429
    %v1436 = vrot.slane %v1430, 6
    %v1437 = vrot.slane %v1431, 6
    %v1438 = vsel %vm465, %v1436, %v1437
    %v1439 = vrot.slane %v1432, 6
    %v1440 = vsel %vm465, %v1436, %v1439
    %v1443 = vadd.f32 %v1427, %v1438
    %v1444 = vadd.f32 %v1428, %v1440
    %v1445 = vperm.slane %v1235, 7
    %v1446 = vmul.f32 %v1445, 0.0
    %v1447 = vmul.f32 %v1221, %v1445
    %v1448 = vmul.f32 %v1222, %v1445
    %v1452 = vrot.slane %v1446, 7
    %v1453 = vrot.slane %v1447, 7
    %v1454 = vsel %vm498, %v1452, %v1453
    %v1455 = vrot.slane %v1448, 7
    %v1456 = vsel %vm498, %v1452, %v1455
    %v1459 = vadd.f32 %v1443, %v1454
    %v1460 = vadd.f32 %v1444, %v1456
    %v1461 = vperm.slane %v1239, 7
    %v1462 = vmul.f32 %v1461, 0.0
    %v1463 = vmul.f32 %v1231, %v1461
    %v1464 = vmul.f32 %v1232, %v1461
    %v1468 = vrot.slane %v1462, 7
    %v1469 = vrot.slane %v1463, 7
    %v1470 = vsel %vm498, %v1468, %v1469
    %v1471 = vrot.slane %v1464, 7
    %v1472 = vsel %vm498, %v1468, %v1471
    %v1475 = vadd.f32 %v1459, %v1470
    %v1476 = vadd.f32 %v1460, %v1472
    %v1477 = vperm.slane %v1236, 0
    %v1478 = vmul.f32 %v1221, %v1477
    %v1479 = vmul.f32 %v1222, %v1477
    %v1480 = vadd.f32 %v1475, %v1478
    %v1481 = vadd.f32 %v1476, %v1479
    %v1482 = vperm.slane %v1240, 0
    %v1483 = vmul.f32 %v1231, %v1482
    %v1484 = vmul.f32 %v1232, %v1482
    %v1485 = vadd.f32 %v1480, %v1483
    %v1486 = vadd.f32 %v1481, %v1484
    %v1487 = vperm.slane %v1236, 1
    %v1488 = vmul.f32 %v1221, %v1487
    %v1489 = vmul.f32 %v1223, %v1487
    %v1490 = vmul.f32 %v1222, %v1487
    %v1491 = vmul.f32 %v1224, %v1487
    %v1496 = vrot.slane %v1488, 1
    %v1497 = vrot.slane %v1489, 1
    %v1498 = vsel %vm262, %v1496, %v1497
    %v1499 = vrot.slane %v1490, 1
    %v1500 = vrot.slane %v1491, 1
    %v1501 = vsel %vm262, %v1499, %v1500
    %v1504 = vadd.f32 %v1485, %v1498
    %v1505 = vadd.f32 %v1486, %v1501
    %v1506 = vperm.slane %v1240, 1
    %v1507 = vmul.f32 %v1231, %v1506
    %v1508 = vmul.f32 %v1233, %v1506
    %v1509 = vmul.f32 %v1232, %v1506
    %v1510 = vmul.f32 %v1234, %v1506
    %v1515 = vrot.slane %v1507, 1
    %v1516 = vrot.slane %v1508, 1
    %v1517 = vsel %vm262, %v1515, %v1516
    %v1518 = vrot.slane %v1509, 1
    %v1519 = vrot.slane %v1510, 1
    %v1520 = vsel %vm262, %v1518, %v1519
    %v1523 = vadd.f32 %v1504, %v1517
    %v1524 = vadd.f32 %v1505, %v1520
    %v1525 = vperm.slane %v1236, 2
    %v1526 = vmul.f32 %v1221, %v1525
    %v1527 = vmul.f32 %v1223, %v1525
    %v1528 = vmul.f32 %v1222, %v1525
    %v1529 = vmul.f32 %v1224, %v1525
    %v1534 = vrot.slane %v1526, 2
    %v1535 = vrot.slane %v1527, 2
    %v1536 = vsel %vm334, %v1534, %v1535
    %v1537 = vrot.slane %v1528, 2
    %v1538 = vrot.slane %v1529, 2
    %v1539 = vsel %vm334, %v1537, %v1538
    %v1542 = vadd.f32 %v1523, %v1536
    %v1543 = vadd.f32 %v1524, %v1539
    %v1544 = vperm.slane %v1240, 2
    %v1545 = vmul.f32 %v1231, %v1544
    %v1546 = vmul.f32 %v1233, %v1544
    %v1547 = vmul.f32 %v1232, %v1544
    %v1548 = vmul.f32 %v1234, %v1544
    %v1553 = vrot.slane %v1545, 2
    %v1554 = vrot.slane %v1546, 2
    %v1555 = vsel %vm334, %v1553, %v1554
    %v1556 = vrot.slane %v1547, 2
    %v1557 = vrot.slane %v1548, 2
    %v1558 = vsel %vm334, %v1556, %v1557
    %v1561 = vadd.f32 %v1542, %v1555
    %v1562 = vadd.f32 %v1543, %v1558
    %v1563 = vperm.slane %v1236, 3
    %v1564 = vmul.f32 %v1221, %v1563
    %v1565 = vmul.f32 %v1223, %v1563
    %v1566 = vmul.f32 %v1222, %v1563
    %v1567 = vmul.f32 %v1224, %v1563
    %v1572 = vrot.slane %v1564, 3
    %v1573 = vrot.slane %v1565, 3
    %v1574 = vsel %vm367, %v1572, %v1573
    %v1575 = vrot.slane %v1566, 3
    %v1576 = vrot.slane %v1567, 3
    %v1577 = vsel %vm367, %v1575, %v1576
    %v1580 = vadd.f32 %v1561, %v1574
    %v1581 = vadd.f32 %v1562, %v1577
    %v1582 = vperm.slane %v1240, 3
    %v1583 = vmul.f32 %v1231, %v1582
    %v1584 = vmul.f32 %v1233, %v1582
    %v1585 = vmul.f32 %v1232, %v1582
    %v1586 = vmul.f32 %v1234, %v1582
    %v1591 = vrot.slane %v1583, 3
    %v1592 = vrot.slane %v1584, 3
    %v1593 = vsel %vm367, %v1591, %v1592
    %v1594 = vrot.slane %v1585, 3
    %v1595 = vrot.slane %v1586, 3
    %v1596 = vsel %vm367, %v1594, %v1595
    %v1599 = vadd.f32 %v1580, %v1593
    %v1600 = vadd.f32 %v1581, %v1596
    %v1601 = vperm.slane %v1236, 4
    %v1602 = vmul.f32 %v1221, %v1601
    %v1603 = vmul.f32 %v1223, %v1601
    %v1604 = vmul.f32 %v1222, %v1601
    %v1605 = vmul.f32 %v1224, %v1601
    %v1610 = vrot.slane %v1602, 4
    %v1611 = vrot.slane %v1603, 4
    %v1612 = vsel %vm124, %v1610, %v1611
    %v1613 = vrot.slane %v1604, 4
    %v1614 = vrot.slane %v1605, 4
    %v1615 = vsel %vm124, %v1613, %v1614
    %v1618 = vadd.f32 %v1599, %v1612
    %v1619 = vadd.f32 %v1600, %v1615
    %v1620 = vperm.slane %v1240, 4
    %v1621 = vmul.f32 %v1231, %v1620
    %v1622 = vmul.f32 %v1233, %v1620
    %v1623 = vmul.f32 %v1232, %v1620
    %v1624 = vmul.f32 %v1234, %v1620
    %v1629 = vrot.slane %v1621, 4
    %v1630 = vrot.slane %v1622, 4
    %v1631 = vsel %vm124, %v1629, %v1630
    %v1632 = vrot.slane %v1623, 4
    %v1633 = vrot.slane %v1624, 4
    %v1634 = vsel %vm124, %v1632, %v1633
    %v1637 = vadd.f32 %v1618, %v1631
    %v1638 = vadd.f32 %v1619, %v1634
    %v1639 = vperm.slane %v1236, 5
    %v1640 = vmul.f32 %v1221, %v1639
    %v1641 = vmul.f32 %v1223, %v1639
    %v1642 = vmul.f32 %v1222, %v1639
    %v1643 = vmul.f32 %v1224, %v1639
    %v1648 = vrot.slane %v1640, 5
    %v1649 = vrot.slane %v1641, 5
    %v1650 = vsel %vm432, %v1648, %v1649
    %v1651 = vrot.slane %v1642, 5
    %v1652 = vrot.slane %v1643, 5
    %v1653 = vsel %vm432, %v1651, %v1652
    %v1656 = vadd.f32 %v1637, %v1650
    %v1657 = vadd.f32 %v1638, %v1653
    %v1658 = vperm.slane %v1240, 5
    %v1659 = vmul.f32 %v1231, %v1658
    %v1660 = vmul.f32 %v1233, %v1658
    %v1661 = vmul.f32 %v1232, %v1658
    %v1662 = vmul.f32 %v1234, %v1658
    %v1667 = vrot.slane %v1659, 5
    %v1668 = vrot.slane %v1660, 5
    %v1669 = vsel %vm432, %v1667, %v1668
    %v1670 = vrot.slane %v1661, 5
    %v1671 = vrot.slane %v1662, 5
    %v1672 = vsel %vm432, %v1670, %v1671
    %v1675 = vadd.f32 %v1656, %v1669
    %v1676 = vadd.f32 %v1657, %v1672
    %v1677 = vperm.slane %v1236, 6
    %v1678 = vmul.f32 %v1221, %v1677
    %v1679 = vmul.f32 %v1223, %v1677
    %v1680 = vmul.f32 %v1222, %v1677
    %v1681 = vmul.f32 %v1224, %v1677
    %v1686 = vrot.slane %v1678, 6
    %v1687 = vrot.slane %v1679, 6
    %v1688 = vsel %vm465, %v1686, %v1687
    %v1689 = vrot.slane %v1680, 6
    %v1690 = vrot.slane %v1681, 6
    %v1691 = vsel %vm465, %v1689, %v1690
    %v1694 = vadd.f32 %v1675, %v1688
    %v1695 = vadd.f32 %v1676, %v1691
    %v1696 = vperm.slane %v1240, 6
    %v1697 = vmul.f32 %v1231, %v1696
    %v1698 = vmul.f32 %v1233, %v1696
    %v1699 = vmul.f32 %v1232, %v1696
    %v1700 = vmul.f32 %v1234, %v1696
    %v1705 = vrot.slane %v1697, 6
    %v1706 = vrot.slane %v1698, 6
    %v1707 = vsel %vm465, %v1705, %v1706
    %v1708 = vrot.slane %v1699, 6
    %v1709 = vrot.slane %v1700, 6
    %v1710 = vsel %vm465, %v1708, %v1709
    %v1713 = vadd.f32 %v1694, %v1707
    %v1714 = vadd.f32 %v1695, %v1710
    %v1715 = vperm.slane %v1236, 7
    %v1716 = vmul.f32 %v1221, %v1715
    %v1717 = vmul.f32 %v1223, %v1715
    %v1718 = vmul.f32 %v1222, %v1715
    %v1719 = vmul.f32 %v1224, %v1715
    %v1724 = vrot.slane %v1716, 7
    %v1725 = vrot.slane %v1717, 7
    %v1726 = vsel %vm498, %v1724, %v1725
    %v1727 = vrot.slane %v1718, 7
    %v1728 = vrot.slane %v1719, 7
    %v1729 = vsel %vm498, %v1727, %v1728
    %v1732 = vadd.f32 %v1713, %v1726
    %v1733 = vadd.f32 %v1714, %v1729
    %v1734 = vperm.slane %v1240, 7
    %v1735 = vmul.f32 %v1231, %v1734
    %v1736 = vmul.f32 %v1233, %v1734
    %v1737 = vmul.f32 %v1232, %v1734
    %v1738 = vmul.f32 %v1234, %v1734
    %v1743 = vrot.slane %v1735, 7
    %v1744 = vrot.slane %v1736, 7
    %v1745 = vsel %vm498, %v1743, %v1744
    %v1746 = vrot.slane %v1737, 7
    %v1747 = vrot.slane %v1738, 7
    %v1748 = vsel %vm498, %v1746, %v1747
    %v1751 = vadd.f32 %v1732, %v1745
    %v1752 = vadd.f32 %v1733, %v1748
    %v1753 = vperm.slane %v1237, 0
    %v1754 = vmul.f32 %v1223, %v1753
    %v1755 = vmul.f32 %v1224, %v1753
    %v1756 = vadd.f32 %v1751, %v1754
    %v1757 = vadd.f32 %v1752, %v1755
    %v1758 = vperm.slane %v1241, 0
    %v1759 = vmul.f32 %v1233, %v1758
    %v1760 = vmul.f32 %v1234, %v1758
    %v1761 = vadd.f32 %v1756, %v1759
    %v1762 = vadd.f32 %v1757, %v1760
    %v1763 = vperm.slane %v1237, 1
    %v1764 = vmul.f32 %v1223, %v1763
    %v1765 = vmul.f32 %v1763, 0.0
    %v1766 = vmul.f32 %v1224, %v1763
    %v1770 = vrot.slane %v1764, 1
    %v1771 = vrot.slane %v1765, 1
    %v1772 = vsel %vm262, %v1770, %v1771
    %v1773 = vrot.slane %v1766, 1
    %v1774 = vsel %vm262, %v1773, %v1771
    %v1777 = vadd.f32 %v1761, %v1772
    %v1778 = vadd.f32 %v1762, %v1774
    %v1779 = vperm.slane %v1241, 1
    %v1780 = vmul.f32 %v1233, %v1779
    %v1781 = vmul.f32 %v1779, 0.0
    %v1782 = vmul.f32 %v1234, %v1779
    %v1786 = vrot.slane %v1780, 1
    %v1787 = vrot.slane %v1781, 1
    %v1788 = vsel %vm262, %v1786, %v1787
    %v1789 = vrot.slane %v1782, 1
    %v1790 = vsel %vm262, %v1789, %v1787
    %v1793 = vadd.f32 %v1777, %v1788
    %v1794 = vadd.f32 %v1778, %v1790
    %v1795 = vperm.slane %v1237, 2
    %v1796 = vmul.f32 %v1223, %v1795
    %v1797 = vmul.f32 %v1795, 0.0
    %v1798 = vmul.f32 %v1224, %v1795
    %v1802 = vrot.slane %v1796, 2
    %v1803 = vrot.slane %v1797, 2
    %v1804 = vsel %vm334, %v1802, %v1803
    %v1805 = vrot.slane %v1798, 2
    %v1806 = vsel %vm334, %v1805, %v1803
    %v1809 = vadd.f32 %v1793, %v1804
    %v1810 = vadd.f32 %v1794, %v1806
    %v1811 = vperm.slane %v1241, 2
    %v1812 = vmul.f32 %v1233, %v1811
    %v1813 = vmul.f32 %v1811, 0.0
    %v1814 = vmul.f32 %v1234, %v1811
    %v1818 = vrot.slane %v1812, 2
    %v1819 = vrot.slane %v1813, 2
    %v1820 = vsel %vm334, %v1818, %v1819
    %v1821 = vrot.slane %v1814, 2
    %v1822 = vsel %vm334, %v1821, %v1819
    %v1825 = vadd.f32 %v1809, %v1820
    %v1826 = vadd.f32 %v1810, %v1822
    %v1827 = vperm.slane %v1237, 3
    %v1828 = vmul.f32 %v1223, %v1827
    %v1829 = vmul.f32 %v1827, 0.0
    %v1830 = vmul.f32 %v1224, %v1827
    %v1834 = vrot.slane %v1828, 3
    %v1835 = vrot.slane %v1829, 3
    %v1836 = vsel %vm367, %v1834, %v1835
    %v1837 = vrot.slane %v1830, 3
    %v1838 = vsel %vm367, %v1837, %v1835
    %v1841 = vadd.f32 %v1825, %v1836
    %v1842 = vadd.f32 %v1826, %v1838
    %v1843 = vperm.slane %v1241, 3
    %v1844 = vmul.f32 %v1233, %v1843
    %v1845 = vmul.f32 %v1843, 0.0
    %v1846 = vmul.f32 %v1234, %v1843
    %v1850 = vrot.slane %v1844, 3
    %v1851 = vrot.slane %v1845, 3
    %v1852 = vsel %vm367, %v1850, %v1851
    %v1853 = vrot.slane %v1846, 3
    %v1854 = vsel %vm367, %v1853, %v1851
    %v1857 = vadd.f32 %v1841, %v1852
    %v1858 = vadd.f32 %v1842, %v1854
    %v1859 = vperm.slane %v1237, 4
    %v1860 = vmul.f32 %v1223, %v1859
    %v1861 = vmul.f32 %v1859, 0.0
    %v1862 = vmul.f32 %v1224, %v1859
    %v1866 = vrot.slane %v1860, 4
    %v1867 = vrot.slane %v1861, 4
    %v1868 = vsel %vm124, %v1866, %v1867
    %v1869 = vrot.slane %v1862, 4
    %v1870 = vsel %vm124, %v1869, %v1867
    %v1873 = vadd.f32 %v1857, %v1868
    %v1874 = vadd.f32 %v1858, %v1870
    %v1875 = vperm.slane %v1241, 4
    %v1876 = vmul.f32 %v1233, %v1875
    %v1877 = vmul.f32 %v1875, 0.0
    %v1878 = vmul.f32 %v1234, %v1875
    %v1882 = vrot.slane %v1876, 4
    %v1883 = vrot.slane %v1877, 4
    %v1884 = vsel %vm124, %v1882, %v1883
    %v1885 = vrot.slane %v1878, 4
    %v1886 = vsel %vm124, %v1885, %v1883
    %v1889 = vadd.f32 %v1873, %v1884
    %v1890 = vadd.f32 %v1874, %v1886
    %v1891 = vperm.slane %v1237, 5
    %v1892 = vmul.f32 %v1223, %v1891
    %v1893 = vmul.f32 %v1891, 0.0
    %v1894 = vmul.f32 %v1224, %v1891
    %v1898 = vrot.slane %v1892, 5
    %v1899 = vrot.slane %v1893, 5
    %v1900 = vsel %vm432, %v1898, %v1899
    %v1901 = vrot.slane %v1894, 5
    %v1902 = vsel %vm432, %v1901, %v1899
    %v1905 = vadd.f32 %v1889, %v1900
    %v1906 = vadd.f32 %v1890, %v1902
    %v1907 = vperm.slane %v1241, 5
    %v1908 = vmul.f32 %v1233, %v1907
    %v1909 = vmul.f32 %v1907, 0.0
    %v1910 = vmul.f32 %v1234, %v1907
    %v1914 = vrot.slane %v1908, 5
    %v1915 = vrot.slane %v1909, 5
    %v1916 = vsel %vm432, %v1914, %v1915
    %v1917 = vrot.slane %v1910, 5
    %v1918 = vsel %vm432, %v1917, %v1915
    %v1921 = vadd.f32 %v1905, %v1916
    %v1922 = vadd.f32 %v1906, %v1918
    %v1923 = vperm.slane %v1237, 6
    %v1924 = vmul.f32 %v1223, %v1923
    %v1925 = vmul.f32 %v1923, 0.0
    %v1926 = vmul.f32 %v1224, %v1923
    %v1930 = vrot.slane %v1924, 6
    %v1931 = vrot.slane %v1925, 6
    %v1932 = vsel %vm465, %v1930, %v1931
    %v1933 = vrot.slane %v1926, 6
    %v1934 = vsel %vm465, %v1933, %v1931
    %v1937 = vadd.f32 %v1921, %v1932
    %v1938 = vadd.f32 %v1922, %v1934
    %v1939 = vperm.slane %v1241, 6
    %v1940 = vmul.f32 %v1233, %v1939
    %v1941 = vmul.f32 %v1939, 0.0
    %v1942 = vmul.f32 %v1234, %v1939
    %v1946 = vrot.slane %v1940, 6
    %v1947 = vrot.slane %v1941, 6
    %v1948 = vsel %vm465, %v1946, %v1947
    %v1949 = vrot.slane %v1942, 6
    %v1950 = vsel %vm465, %v1949, %v1947
    %v1953 = vadd.f32 %v1937, %v1948
    %v1954 = vadd.f32 %v1938, %v1950
    %v1955 = vperm.slane %v1237, 7
    %v1956 = vmul.f32 %v1223, %v1955
    %v1957 = vmul.f32 %v1955, 0.0
    %v1958 = vmul.f32 %v1224, %v1955
    %v1962 = vrot.slane %v1956, 7
    %v1963 = vrot.slane %v1957, 7
    %v1964 = vsel %vm498, %v1962, %v1963
    %v1965 = vrot.slane %v1958, 7
    %v1966 = vsel %vm498, %v1965, %v1963
    %v1969 = vadd.f32 %v1953, %v1964
    %v1970 = vadd.f32 %v1954, %v1966
    %v1971 = vperm.slane %v1241, 7
    %v1972 = vmul.f32 %v1233, %v1971
    %v1973 = vmul.f32 %v1971, 0.0
    %v1974 = vmul.f32 %v1234, %v1971
    %v1978 = vrot.slane %v1972, 7
    %v1979 = vrot.slane %v1973, 7
    %v1980 = vsel %vm498, %v1978, %v1979
    %v1981 = vrot.slane %v1974, 7
    %v1982 = vsel %vm498, %v1981, %v1979
    %v1985 = vadd.f32 %v1969, %v1980
    %v1986 = vadd.f32 %v1970, %v1982
    %v1987 = vperm.slane %v1238, 0
    %v1988 = vmul.f32 %v1987, 0.0
    %v1989 = vadd.f32 %v1985, %v1988
    %v1990 = vadd.f32 %v1986, %v1988
    %v1991 = vperm.slane %v1242, 0
    %v1992 = vmul.f32 %v1991, 0.0
    %v1993 = vadd.f32 %v1989, %v1992
    %v1994 = vadd.f32 %v1990, %v1992
    %v1995 = vperm.slane %v1238, 1
    %v1996 = vmul.f32 %v1995, 0.0
    %v1998 = vrot.slane %v1996, 1
    %v1999 = vsel %vm262, %v1998, %v1998
    %v2001 = vadd.f32 %v1993, %v1999
    %v2002 = vadd.f32 %v1994, %v1999
    %v2003 = vperm.slane %v1242, 1
    %v2004 = vmul.f32 %v2003, 0.0
    %v2006 = vrot.slane %v2004, 1
    %v2007 = vsel %vm262, %v2006, %v2006
    %v2009 = vadd.f32 %v2001, %v2007
    %v2010 = vadd.f32 %v2002, %v2007
    %v2011 = vperm.slane %v1238, 2
    %v2012 = vmul.f32 %v2011, 0.0
    %v2014 = vrot.slane %v2012, 2
    %v2015 = vsel %vm334, %v2014, %v2014
    %v2017 = vadd.f32 %v2009, %v2015
    %v2018 = vadd.f32 %v2010, %v2015
    %v2019 = vperm.slane %v1242, 2
    %v2020 = vmul.f32 %v2019, 0.0
    %v2022 = vrot.slane %v2020, 2
    %v2023 = vsel %vm334, %v2022, %v2022
    %v2025 = vadd.f32 %v2017, %v2023
    %v2026 = vadd.f32 %v2018, %v2023
    %v2027 = vperm.slane %v1238, 3
    %v2028 = vmul.f32 %v2027, 0.0
    %v2030 = vrot.slane %v2028, 3
    %v2031 = vsel %vm367, %v2030, %v2030
    %v2033 = vadd.f32 %v2025, %v2031
    %v2034 = vadd.f32 %v2026, %v2031
    %v2035 = vperm.slane %v1242, 3
    %v2036 = vmul.f32 %v2035, 0.0
    %v2038 = vrot.slane %v2036, 3
    %v2039 = vsel %vm367, %v2038, %v2038
    %v2041 = vadd.f32 %v2033, %v2039
    %v2042 = vadd.f32 %v2034, %v2039
    %v2043 = vperm.slane %v1238, 4
    %v2044 = vmul.f32 %v2043, 0.0
    %v2046 = vrot.slane %v2044, 4
    %v2047 = vsel %vm124, %v2046, %v2046
    %v2049 = vadd.f32 %v2041, %v2047
    %v2050 = vadd.f32 %v2042, %v2047
    %v2051 = vperm.slane %v1242, 4
    %v2052 = vmul.f32 %v2051, 0.0
    %v2054 = vrot.slane %v2052, 4
    %v2055 = vsel %vm124, %v2054, %v2054
    %v2057 = vadd.f32 %v2049, %v2055
    %v2058 = vadd.f32 %v2050, %v2055
    %v2059 = vperm.slane %v1238, 5
    %v2060 = vmul.f32 %v2059, 0.0
    %v2062 = vrot.slane %v2060, 5
    %v2063 = vsel %vm432, %v2062, %v2062
    %v2065 = vadd.f32 %v2057, %v2063
    %v2066 = vadd.f32 %v2058, %v2063
    %v2067 = vperm.slane %v1242, 5
    %v2068 = vmul.f32 %v2067, 0.0
    %v2070 = vrot.slane %v2068, 5
    %v2071 = vsel %vm432, %v2070, %v2070
    %v2073 = vadd.f32 %v2065, %v2071
    %v2074 = vadd.f32 %v2066, %v2071
    %v2075 = vperm.slane %v1238, 6
    %v2076 = vmul.f32 %v2075, 0.0
    %v2078 = vrot.slane %v2076, 6
    %v2079 = vsel %vm465, %v2078, %v2078
    %v2081 = vadd.f32 %v2073, %v2079
    %v2082 = vadd.f32 %v2074, %v2079
    %v2083 = vperm.slane %v1242, 6
    %v2084 = vmul.f32 %v2083, 0.0
    %v2086 = vrot.slane %v2084, 6
    %v2087 = vsel %vm465, %v2086, %v2086
    %v2089 = vadd.f32 %v2081, %v2087
    %v2090 = vadd.f32 %v2082, %v2087
    %v2091 = vmin.f32 %v2089, 20.0
    %v2092 = vmin.f32 %v2090, 20.0
    %v2093 = vmul.f32 %v2091, 1.442695
    %v2094 = vpow.pop %v2093
    %v2095 = vmul.f32 %v2092, 1.442695
    %v2096 = vpow.pop %v2095
    %v2097 = vadd.f32 %v2094, 2.0
    %v2098 = vadd.f32 %v2096, 2.0
    %v2099 = vmul.f32 %v2094, %v2097
    %v2100 = vmul.f32 %v2096, %v2098
    %v2101 = vadd.f32 %v2099, 2.0
    %v2102 = vadd.f32 %v2100, 2.0
    %v2103 = vrcp.pop %v2101
    %v2104 = vmul.f32 %v2101, %v2103
    %v2105 = vsub.f32 1.0, %v2104
    %v2106 = vmul.f32 %v2103, %v2105
    %v2107 = vadd.f32 %v2103, %v2106
    %vm2108 = vweird.f32 %v2101
    %vm2109 = vweird.f32 %v2103
    %vm2110 = vmor %vm2108, %vm2109
    %v2111 = vsel %vm2110, %v2103, %v2107
    %v2112 = vand.u32 2147483647, %v2101
    %vm2113 = vcmp.eq.f32.partialorder %v2112, 8.507059e+37
    %v2114 = vand.u32 %v2101, 2147483648
    %v2115 = vor.u32 1.1754944e-38, %v2114
    %v2116 = vsel %vm2113, %v2115, %v2111
    %v2117 = vrcp.pop %v2102
    %v2118 = vmul.f32 %v2102, %v2117
    %v2119 = vsub.f32 1.0, %v2118
    %v2120 = vmul.f32 %v2117, %v2119
    %v2121 = vadd.f32 %v2117, %v2120
    %vm2122 = vweird.f32 %v2102
    %vm2123 = vweird.f32 %v2117
    %vm2124 = vmor %vm2122, %vm2123
    %v2125 = vsel %vm2124, %v2117, %v2121
    %v2126 = vand.u32 2147483647, %v2102
    %vm2127 = vcmp.eq.f32.partialorder %v2126, 8.507059e+37
    %v2128 = vand.u32 %v2102, 2147483648
    %v2129 = vor.u32 1.1754944e-38, %v2128
    %v2130 = vsel %vm2127, %v2129, %v2125
    %v2131 = vmul.f32 %v2116, 2.0
    %v2132 = vmul.f32 %v2130, 2.0
    %v2133 = vsub.f32 1.0, %v2131
    %v2134 = vsub.f32 1.0, %v2132
    %v2135 = vmul.f32 %v2089, %v2133
    %v2136 = vmul.f32 %v2090, %v2134
    %vm2137 = vcmp.gt.f32.partialorder %v2089, 20.0
    %vm2138 = vcmp.gt.f32.partialorder %v2090, 20.0
    %v2139 = vsel %vm2137, %v2089, %v2135
    %v2140 = vsel %vm2138, %v2090, %v2136
    %v2141 = vadd.f32 %v2139, %v222
    %v2142 = vadd.f32 %v2140, %v223
    %2143 = vst.msk [vmem:[#allocation10] sm:$0xff] %vm228, %v2141
    %2144 = vst.msk [vmem:[#allocation10 + $0x8] sm:$0xff] %vm228, %v2142
    // Predicated region
    $region74: #{tpu_custom_call.1} parent=1 // pred_check
      _
    $region75: #{tpu_custom_call.1} parent=1 // pred_check_branch
      %2146 = sbr.rel (0) target = $region77
    $region76: #{tpu_custom_call.1} parent=1 // pred_region
      %2148 = vsyncadd [#allocation4], 0
      %s2149 = sshll.u32 [#allocation10], 4
      %s2150 = int_to_ptr.vmem [resolvable:$true] %s2149
      %s2151 = sshll.u32 %s14, 4
      %s2152 = int_to_ptr.hbm [resolvable:$true] %s2151
      %2157 = dma.vmem_to_hbm [thread:$0]  %s2150, 256, %s2152, [#allocation4], 128, 128, 8
    $region77: #{tpu_custom_call.1} parent=1 // pred_fallthru
      _
    // Predicated region
    $region78: #{tpu_custom_call.1} parent=1 // pred_check
      _
    $region79: #{tpu_custom_call.1} parent=1 // pred_check_branch
      %2159 = sbr.rel (0) target = $region81
    $region80: #{tpu_custom_call.1} parent=1 // pred_region
      %2161 = dma.done [#allocation4], 256
    $region81: #{tpu_custom_call.1} parent=1 // pred_fallthru
      _
    %2162 = vsyncpa [#allocation3], 1
    %2163 = vsyncpa [#allocation6], 1
    %2164 = vsyncpa [#allocation9], 1
    %2165 = vsyncpa [#allocation4], 1

</llo_original>
